<compile_context>
chip_gen: v6e
topology: v6e:2x2x1
jax: 0.10.0
libtpu: 0.0.40
codegen_flags: <defaults>
</compile_context>

<pallas_src>
import math
import jax
import jax.numpy as jnp
from jax.experimental import pallas as pl
from jax.experimental.pallas import tpu as pltpu

# ---- model dimensions (small, synthetic) -------------------------------------
B = 2            # batch
S = 8            # sequence length
H = 32           # hidden size
NUM_HEADS = 4
HEAD_DIM = H // NUM_HEADS
INTER = 4 * H    # intermediate (FFN) size
NUM_LABELS = 2
NUM_LAYERS = 3   # arc_config=9 with a 12-layer base BERT -> 12 - 9 = 3 server layers
LN_EPS = 1e-12   # HF BertLayerNorm eps

assert INTER == 4 * H and 3 * H <= INTER  # packing layout below relies on this


def _layer_norm(x, gamma, beta):
    mu = jnp.mean(x, axis=-1, keepdims=True)
    var = jnp.mean((x - mu) ** 2, axis=-1, keepdims=True)
    return (x - mu) * jax.lax.rsqrt(var + LN_EPS) * gamma + beta


def _gelu_exact(x):
    # torch.nn.functional.gelu default = exact erf-GELU
    return 0.5 * x * (1.0 + jax.lax.erf(x * (1.0 / math.sqrt(2.0))))


# ---- fused Pallas kernel: 3 encoder layers + pooler + classifier --------------
def bert_server_kernel(x_ref, mask_ref, wmat_ref, wf_ref, vec_ref, head_ref,
                       out_ref):
    x = x_ref[...]                    # [B*S, H]   rows = batch*seq
    mask = mask_ref[...]              # [B*S, B*S] additive (block-diag + padding)

    for l in range(NUM_LAYERS):       # static unroll; weights stay VMEM-resident
        wl = wmat_ref[l]              # [2H, 4H] : rows 0..H-1 = wq|wk|wv|wo, rows H.. = wi
        wqkv = wl[:H, :3 * H]         # [H, 3H]  (wq pre-scaled by 1/sqrt(hd))
        wo   = wl[:H, 3 * H:]         # [H, H]
        wi   = wl[H:, :]              # [H, INTER]

        vl = vec_ref[l]               # [8, INTER] bias / LayerNorm slab
        bqkv = vl[0:1, :3 * H]        # [1, 3H]
        bo   = vl[1:2, :H]
        g1   = vl[2:3, :H]
        b1   = vl[3:4, :H]
        bi   = vl[4:5, :]             # [1, INTER]
        bf   = vl[5:6, :H]
        g2   = vl[6:7, :H]
        b2   = vl[7:8, :H]

        # ---- fused QKV projection (single lane-dense matmul) ------------------
        qkv = jnp.dot(x, wqkv, preferred_element_type=jnp.float32) + bqkv  # [BS, 3H]

        # ---- per-head attention (static lane slices of the qkv slab) ----------
        ctx_parts = []
        for n in range(NUM_HEADS):
            lo = n * HEAD_DIM
            hi = lo + HEAD_DIM
            qh = qkv[:, lo:hi]                    # 1/sqrt(hd) already folded in
            kh = qkv[:, H + lo:H + hi]
            vh = qkv[:, 2 * H + lo:2 * H + hi]
            s = jnp.einsum('qd,kd->qk', qh, kh,
                           preferred_element_type=jnp.float32) + mask     # [BS, BS]
            s = s - jnp.max(s, axis=-1, keepdims=True)
            p = jnp.exp(s)
            p = p * pl.reciprocal(jnp.sum(p, axis=-1, keepdims=True), approx=True)
            ctx_parts.append(jnp.dot(p, vh, preferred_element_type=jnp.float32))
        ctx = jnp.concatenate(ctx_parts, axis=1)  # [BS, H]

        # ---- output projection: head-sum inside the MXU accumulator ----------
        attn = jnp.dot(ctx, wo, preferred_element_type=jnp.float32) + bo
        h1 = _layer_norm(x + attn, g1, b1)        # attention LayerNorm

        # ---- feed-forward ------------------------------------------------------
        inter = _gelu_exact(jnp.dot(h1, wi, preferred_element_type=jnp.float32) + bi)
        ffn = jnp.dot(inter, wf_ref[l], preferred_element_type=jnp.float32) + bf
        x = _layer_norm(h1 + ffn, g2, b2)         # FFN LayerNorm

    # ---- pooler (tanh on CLS rows) + classifier, all in-kernel ----------------
    cls = x.reshape(B, S, H)[:, 0, :]             # [B, H] CLS rows (aligned reshape)
    hw = head_ref[...]                            # [H+1, H+NUM_LABELS]
    wp, wc = hw[:H, :H], hw[:H, H:]
    bp, bc = hw[H:, :H], hw[H:, H:]
    pooled = jnp.tanh(jnp.dot(cls, wp, preferred_element_type=jnp.float32) + bp)
    out_ref[...] = jnp.dot(pooled, wc, preferred_element_type=jnp.float32) + bc


# ---- wrapper: pack all per-layer params into a few lane-dense slabs -----------
def _pack_params(layer_params, wp, bp, wc, bc):
    scale = 1.0 / math.sqrt(HEAD_DIM)

    def pad_row(v):   # [1, n] -> [1, INTER]
        return jnp.pad(v, ((0, 0), (0, INTER - v.shape[1])))

    wmat_l, wf_l, vec_l = [], [], []
    for (wq, bq, wk, bk, wv, bv, wo, bo, g1, b1,
         wi, bi, wf, bf, g2, b2) in layer_params:
        # fold 1/sqrt(head_dim) into the query projection (free)
        wqkvo = jnp.concatenate([wq * scale, wk, wv, wo], axis=1)    # [H, 4H]
        wmat_l.append(jnp.concatenate([wqkvo, wi], axis=0))          # [2H, 4H]
        wf_l.append(wf)                                              # [INTER, H]
        bqkv = jnp.concatenate([bq * scale, bk, bv], axis=1)         # [1, 3H]
        vec_l.append(jnp.concatenate(
            [pad_row(bqkv), pad_row(bo), pad_row(g1), pad_row(b1),
             bi, pad_row(bf), pad_row(g2), pad_row(b2)], axis=0))    # [8, INTER]

    head = jnp.concatenate(
        [jnp.concatenate([wp, wc], axis=1),
         jnp.concatenate([bp, bc], axis=1)], axis=0)                 # [H+1, H+NL]
    return jnp.stack(wmat_l), jnp.stack(wf_l), jnp.stack(vec_l), head


@jax.jit
def bert_server_forward(hidden, attention_mask, layer_params, wp, bp, wc, bc):
    wmat, wf_all, vec_all, head = _pack_params(layer_params, wp, bp, wc, bc)
    x2 = hidden.reshape(B * S, H)

    # Block-diagonal additive mask: 0 for same-batch valid keys, -10000 for
    # padded keys and cross-batch keys (equivalent to (1-mask)*-10000 per batch).
    same_batch = jnp.kron(jnp.eye(B, dtype=jnp.float32),
                          jnp.ones((S, S), jnp.float32))             # [B*S, B*S]
    key_valid = attention_mask.reshape(1, B * S)                     # [1, B*S]
    mask_add = jnp.where(same_batch * key_valid > 0.5, 0.0, -10000.0)

    vmem = pl.BlockSpec(memory_space=pltpu.MemorySpace.VMEM)
    return pl.pallas_call(
        bert_server_kernel,
        out_shape=jax.ShapeDtypeStruct((B, NUM_LABELS), jnp.float32),
        in_specs=[vmem] * 6,
        out_specs=vmem,
    )(x2, mask_add, wmat, wf_all, vec_all, head)


# ---- deterministic parameter init ---------------------------------------------
def dense_params(key, n_in, n_out):
    k1, k2 = jax.random.split(key)
    w = jax.random.normal(k1, (n_in, n_out), jnp.float32) * 0.02
    b = jax.random.normal(k2, (1, n_out), jnp.float32) * 0.02
    return w, b


def init_all_params(key):
    layer_params = []
    for _ in range(NUM_LAYERS):
        key, kq, kk, kv, ko, ki, kf = jax.random.split(key, 7)
        wq, bq = dense_params(kq, H, H)
        wk, bk = dense_params(kk, H, H)
        wv, bv = dense_params(kv, H, H)
        wo, bo = dense_params(ko, H, H)
        g1, b1 = jnp.ones((1, H), jnp.float32), jnp.zeros((1, H), jnp.float32)
        wi, bi = dense_params(ki, H, INTER)
        wf, bf = dense_params(kf, INTER, H)
        g2, b2 = jnp.ones((1, H), jnp.float32), jnp.zeros((1, H), jnp.float32)
        layer_params.append((wq, bq, wk, bk, wv, bv, wo, bo, g1, b1,
                             wi, bi, wf, bf, g2, b2))
    key, kp, kc = jax.random.split(key, 3)
    wp, bp = dense_params(kp, H, H)
    wc, bc = dense_params(kc, H, NUM_LABELS)
    return tuple(layer_params), wp, bp, wc, bc


if __name__ == "__main__":
    key = jax.random.PRNGKey(0)
    key, k_h, k_p = jax.random.split(key, 3)

    hidden_states = jax.random.normal(k_h, (B, S, H), jnp.float32)
    # attention mask: batch 0 fully valid, batch 1 has last 3 positions padded
    attention_mask = jnp.ones((B, S), jnp.float32)
    attention_mask = attention_mask.at[1, S - 3:].set(0.0)

    layer_params, wp, bp, wc, bc = init_all_params(k_p)

    logits = bert_server_forward(hidden_states, attention_mask,
                                 layer_params, wp, bp, wc, bc)
    jax.block_until_ready(logits)
    assert logits.shape == (B, NUM_LABELS)
    print("KERNEL_OK")
</pallas_src>

<mosaic_0001>
module attributes {stable_mosaic.version = 11 : i64} {
  func.func @bert_server_kernel(%arg0: memref<16x32xf32, #tpu.memory_space<vmem>>, %arg1: memref<16x16xf32, #tpu.memory_space<vmem>>, %arg2: memref<3x64x128xf32, #tpu.memory_space<vmem>>, %arg3: memref<3x128x32xf32, #tpu.memory_space<vmem>>, %arg4: memref<3x8x128xf32, #tpu.memory_space<vmem>>, %arg5: memref<33x34xf32, #tpu.memory_space<vmem>>, %arg6: memref<2x2xf32, #tpu.memory_space<vmem>>) attributes {dimension_semantics = [], scalar_prefetch = 0 : i64, scratch_operands = 0 : i64, tpu.core_type = #tpu.core_type<tc>} {
    %c0 = arith.constant 0 : index
    %c0_0 = arith.constant 0 : index
    %0 = vector.load %arg0[%c0, %c0_0] : memref<16x32xf32, #tpu.memory_space<vmem>>, vector<16x32xf32>
    %c0_1 = arith.constant 0 : index
    %c0_2 = arith.constant 0 : index
    %1 = vector.load %arg1[%c0_1, %c0_2] : memref<16x16xf32, #tpu.memory_space<vmem>>, vector<16x16xf32>
    %2 = vector.shape_cast %1 : vector<16x16xf32> to vector<16x16xf32>
    %c0_3 = arith.constant 0 : index
    %c0_4 = arith.constant 0 : index
    %c0_5 = arith.constant 0 : index
    %3 = vector.load %arg2[%c0_3, %c0_4, %c0_5] : memref<3x64x128xf32, #tpu.memory_space<vmem>>, vector<1x64x128xf32>
    %4 = vector.shape_cast %3 : vector<1x64x128xf32> to vector<64x128xf32>
    %5 = vector.extract_strided_slice %4 {offsets = [0, 0], sizes = [32, 96], strides = [1, 1]} : vector<64x128xf32> to vector<32x96xf32>
    %6 = vector.extract_strided_slice %4 {offsets = [0, 96], sizes = [32, 32], strides = [1, 1]} : vector<64x128xf32> to vector<32x32xf32>
    %7 = vector.extract_strided_slice %4 {offsets = [32, 0], sizes = [32, 128], strides = [1, 1]} : vector<64x128xf32> to vector<32x128xf32>
    %c0_6 = arith.constant 0 : index
    %c0_7 = arith.constant 0 : index
    %c0_8 = arith.constant 0 : index
    %8 = vector.load %arg4[%c0_6, %c0_7, %c0_8] : memref<3x8x128xf32, #tpu.memory_space<vmem>>, vector<1x8x128xf32>
    %9 = vector.shape_cast %8 : vector<1x8x128xf32> to vector<8x128xf32>
    %10 = vector.extract_strided_slice %9 {offsets = [0, 0], sizes = [1, 96], strides = [1, 1]} : vector<8x128xf32> to vector<1x96xf32>
    %11 = vector.extract_strided_slice %9 {offsets = [1, 0], sizes = [1, 32], strides = [1, 1]} : vector<8x128xf32> to vector<1x32xf32>
    %12 = vector.extract_strided_slice %9 {offsets = [2, 0], sizes = [1, 32], strides = [1, 1]} : vector<8x128xf32> to vector<1x32xf32>
    %13 = vector.extract_strided_slice %9 {offsets = [3, 0], sizes = [1, 32], strides = [1, 1]} : vector<8x128xf32> to vector<1x32xf32>
    %14 = vector.extract_strided_slice %9 {offsets = [4, 0], sizes = [1, 128], strides = [1, 1]} : vector<8x128xf32> to vector<1x128xf32>
    %15 = vector.extract_strided_slice %9 {offsets = [5, 0], sizes = [1, 32], strides = [1, 1]} : vector<8x128xf32> to vector<1x32xf32>
    %16 = vector.extract_strided_slice %9 {offsets = [6, 0], sizes = [1, 32], strides = [1, 1]} : vector<8x128xf32> to vector<1x32xf32>
    %17 = vector.extract_strided_slice %9 {offsets = [7, 0], sizes = [1, 32], strides = [1, 1]} : vector<8x128xf32> to vector<1x32xf32>
    %cst = arith.constant dense<0.000000e+00> : vector<16x96xf32>
    %18 = tpu.matmul %0, %5, %cst {dimension_numbers = #tpu.dot_dimension_numbers<[1], [0], [0], [1], [0, 0, 1, 1], [], []>} : vector<16x32xf32>, vector<32x96xf32>, vector<16x96xf32> -> vector<16x96xf32>
    %19 = vector.broadcast %10 : vector<1x96xf32> to vector<16x96xf32>
    %20 = arith.addf %18, %19 : vector<16x96xf32>
    %21 = vector.extract_strided_slice %20 {offsets = [0, 0], sizes = [16, 8], strides = [1, 1]} : vector<16x96xf32> to vector<16x8xf32>
    %22 = vector.extract_strided_slice %20 {offsets = [0, 32], sizes = [16, 8], strides = [1, 1]} : vector<16x96xf32> to vector<16x8xf32>
    %23 = vector.extract_strided_slice %20 {offsets = [0, 64], sizes = [16, 8], strides = [1, 1]} : vector<16x96xf32> to vector<16x8xf32>
    "tpu.trace_start"() <{level = 10 : i32, message = "qd,kd->qk"}> : () -> ()
    %cst_9 = arith.constant dense<0.000000e+00> : vector<16x16xf32>
    %24 = tpu.matmul %21, %22, %cst_9 {dimension_numbers = #tpu.dot_dimension_numbers<[1], [1], [0], [0], [0, 0, 1, 0], [], []>} : vector<16x8xf32>, vector<16x8xf32>, vector<16x16xf32> -> vector<16x16xf32>
    "tpu.trace_stop"() : () -> ()
    %25 = arith.addf %24, %2 : vector<16x16xf32>
    %cst_10 = arith.constant dense<0xFF800000> : vector<16xf32>
    %26 = vector.multi_reduction <maximumf>, %25, %cst_10 [1] : vector<16x16xf32> to vector<16xf32>
    %27 = vector.shape_cast %26 : vector<16xf32> to vector<16x1xf32>
    %28 = vector.broadcast %27 : vector<16x1xf32> to vector<16x16xf32>
    %29 = arith.subf %25, %28 : vector<16x16xf32>
    %30 = math.exp %29 : vector<16x16xf32>
    %cst_11 = arith.constant dense<0.000000e+00> : vector<16xf32>
    %31 = vector.multi_reduction <add>, %30, %cst_11 [1] : vector<16x16xf32> to vector<16xf32>
    %32 = vector.shape_cast %31 : vector<16xf32> to vector<16x1xf32>
    %33 = tpu.reciprocal %32 {approx = true} : vector<16x1xf32> -> vector<16x1xf32>
    %34 = vector.broadcast %33 : vector<16x1xf32> to vector<16x16xf32>
    %35 = arith.mulf %30, %34 : vector<16x16xf32>
    %cst_12 = arith.constant dense<0.000000e+00> : vector<16x8xf32>
    %36 = tpu.matmul %35, %23, %cst_12 {dimension_numbers = #tpu.dot_dimension_numbers<[1], [0], [0], [1], [0, 0, 1, 1], [], []>} : vector<16x16xf32>, vector<16x8xf32>, vector<16x8xf32> -> vector<16x8xf32>
    %37 = vector.extract_strided_slice %20 {offsets = [0, 8], sizes = [16, 8], strides = [1, 1]} : vector<16x96xf32> to vector<16x8xf32>
    %38 = vector.extract_strided_slice %20 {offsets = [0, 40], sizes = [16, 8], strides = [1, 1]} : vector<16x96xf32> to vector<16x8xf32>
    %39 = vector.extract_strided_slice %20 {offsets = [0, 72], sizes = [16, 8], strides = [1, 1]} : vector<16x96xf32> to vector<16x8xf32>
    "tpu.trace_start"() <{level = 10 : i32, message = "qd,kd->qk"}> : () -> ()
    %cst_13 = arith.constant dense<0.000000e+00> : vector<16x16xf32>
    %40 = tpu.matmul %37, %38, %cst_13 {dimension_numbers = #tpu.dot_dimension_numbers<[1], [1], [0], [0], [0, 0, 1, 0], [], []>} : vector<16x8xf32>, vector<16x8xf32>, vector<16x16xf32> -> vector<16x16xf32>
    "tpu.trace_stop"() : () -> ()
    %41 = arith.addf %40, %2 : vector<16x16xf32>
    %cst_14 = arith.constant dense<0xFF800000> : vector<16xf32>
    %42 = vector.multi_reduction <maximumf>, %41, %cst_14 [1] : vector<16x16xf32> to vector<16xf32>
    %43 = vector.shape_cast %42 : vector<16xf32> to vector<16x1xf32>
    %44 = vector.broadcast %43 : vector<16x1xf32> to vector<16x16xf32>
    %45 = arith.subf %41, %44 : vector<16x16xf32>
    %46 = math.exp %45 : vector<16x16xf32>
    %cst_15 = arith.constant dense<0.000000e+00> : vector<16xf32>
    %47 = vector.multi_reduction <add>, %46, %cst_15 [1] : vector<16x16xf32> to vector<16xf32>
    %48 = vector.shape_cast %47 : vector<16xf32> to vector<16x1xf32>
    %49 = tpu.reciprocal %48 {approx = true} : vector<16x1xf32> -> vector<16x1xf32>
    %50 = vector.broadcast %49 : vector<16x1xf32> to vector<16x16xf32>
    %51 = arith.mulf %46, %50 : vector<16x16xf32>
    %cst_16 = arith.constant dense<0.000000e+00> : vector<16x8xf32>
    %52 = tpu.matmul %51, %39, %cst_16 {dimension_numbers = #tpu.dot_dimension_numbers<[1], [0], [0], [1], [0, 0, 1, 1], [], []>} : vector<16x16xf32>, vector<16x8xf32>, vector<16x8xf32> -> vector<16x8xf32>
    %53 = vector.extract_strided_slice %20 {offsets = [0, 16], sizes = [16, 8], strides = [1, 1]} : vector<16x96xf32> to vector<16x8xf32>
    %54 = vector.extract_strided_slice %20 {offsets = [0, 48], sizes = [16, 8], strides = [1, 1]} : vector<16x96xf32> to vector<16x8xf32>
    %55 = vector.extract_strided_slice %20 {offsets = [0, 80], sizes = [16, 8], strides = [1, 1]} : vector<16x96xf32> to vector<16x8xf32>
    "tpu.trace_start"() <{level = 10 : i32, message = "qd,kd->qk"}> : () -> ()
    %cst_17 = arith.constant dense<0.000000e+00> : vector<16x16xf32>
    %56 = tpu.matmul %53, %54, %cst_17 {dimension_numbers = #tpu.dot_dimension_numbers<[1], [1], [0], [0], [0, 0, 1, 0], [], []>} : vector<16x8xf32>, vector<16x8xf32>, vector<16x16xf32> -> vector<16x16xf32>
    "tpu.trace_stop"() : () -> ()
    %57 = arith.addf %56, %2 : vector<16x16xf32>
    %cst_18 = arith.constant dense<0xFF800000> : vector<16xf32>
    %58 = vector.multi_reduction <maximumf>, %57, %cst_18 [1] : vector<16x16xf32> to vector<16xf32>
    %59 = vector.shape_cast %58 : vector<16xf32> to vector<16x1xf32>
    %60 = vector.broadcast %59 : vector<16x1xf32> to vector<16x16xf32>
    %61 = arith.subf %57, %60 : vector<16x16xf32>
    %62 = math.exp %61 : vector<16x16xf32>
    %cst_19 = arith.constant dense<0.000000e+00> : vector<16xf32>
    %63 = vector.multi_reduction <add>, %62, %cst_19 [1] : vector<16x16xf32> to vector<16xf32>
    %64 = vector.shape_cast %63 : vector<16xf32> to vector<16x1xf32>
    %65 = tpu.reciprocal %64 {approx = true} : vector<16x1xf32> -> vector<16x1xf32>
    %66 = vector.broadcast %65 : vector<16x1xf32> to vector<16x16xf32>
    %67 = arith.mulf %62, %66 : vector<16x16xf32>
    %cst_20 = arith.constant dense<0.000000e+00> : vector<16x8xf32>
    %68 = tpu.matmul %67, %55, %cst_20 {dimension_numbers = #tpu.dot_dimension_numbers<[1], [0], [0], [1], [0, 0, 1, 1], [], []>} : vector<16x16xf32>, vector<16x8xf32>, vector<16x8xf32> -> vector<16x8xf32>
    %69 = vector.extract_strided_slice %20 {offsets = [0, 24], sizes = [16, 8], strides = [1, 1]} : vector<16x96xf32> to vector<16x8xf32>
    %70 = vector.extract_strided_slice %20 {offsets = [0, 56], sizes = [16, 8], strides = [1, 1]} : vector<16x96xf32> to vector<16x8xf32>
    %71 = vector.extract_strided_slice %20 {offsets = [0, 88], sizes = [16, 8], strides = [1, 1]} : vector<16x96xf32> to vector<16x8xf32>
    "tpu.trace_start"() <{level = 10 : i32, message = "qd,kd->qk"}> : () -> ()
    %cst_21 = arith.constant dense<0.000000e+00> : vector<16x16xf32>
    %72 = tpu.matmul %69, %70, %cst_21 {dimension_numbers = #tpu.dot_dimension_numbers<[1], [1], [0], [0], [0, 0, 1, 0], [], []>} : vector<16x8xf32>, vector<16x8xf32>, vector<16x16xf32> -> vector<16x16xf32>
    "tpu.trace_stop"() : () -> ()
    %73 = arith.addf %72, %2 : vector<16x16xf32>
    %cst_22 = arith.constant dense<0xFF800000> : vector<16xf32>
    %74 = vector.multi_reduction <maximumf>, %73, %cst_22 [1] : vector<16x16xf32> to vector<16xf32>
    %75 = vector.shape_cast %74 : vector<16xf32> to vector<16x1xf32>
    %76 = vector.broadcast %75 : vector<16x1xf32> to vector<16x16xf32>
    %77 = arith.subf %73, %76 : vector<16x16xf32>
    %78 = math.exp %77 : vector<16x16xf32>
    %cst_23 = arith.constant dense<0.000000e+00> : vector<16xf32>
    %79 = vector.multi_reduction <add>, %78, %cst_23 [1] : vector<16x16xf32> to vector<16xf32>
    %80 = vector.shape_cast %79 : vector<16xf32> to vector<16x1xf32>
    %81 = tpu.reciprocal %80 {approx = true} : vector<16x1xf32> -> vector<16x1xf32>
    %82 = vector.broadcast %81 : vector<16x1xf32> to vector<16x16xf32>
    %83 = arith.mulf %78, %82 : vector<16x16xf32>
    %cst_24 = arith.constant dense<0.000000e+00> : vector<16x8xf32>
    %84 = tpu.matmul %83, %71, %cst_24 {dimension_numbers = #tpu.dot_dimension_numbers<[1], [0], [0], [1], [0, 0, 1, 1], [], []>} : vector<16x16xf32>, vector<16x8xf32>, vector<16x8xf32> -> vector<16x8xf32>
    %85 = tpu.concatenate %36, %52, %68, %84 in 1 : vector<16x8xf32>, vector<16x8xf32>, vector<16x8xf32>, vector<16x8xf32> -> vector<16x32xf32>
    %cst_25 = arith.constant dense<0.000000e+00> : vector<16x32xf32>
    %86 = tpu.matmul %85, %6, %cst_25 {dimension_numbers = #tpu.dot_dimension_numbers<[1], [0], [0], [1], [0, 0, 1, 1], [], []>} : vector<16x32xf32>, vector<32x32xf32>, vector<16x32xf32> -> vector<16x32xf32>
    %87 = vector.broadcast %11 : vector<1x32xf32> to vector<16x32xf32>
    %88 = arith.addf %86, %87 : vector<16x32xf32>
    %89 = arith.addf %0, %88 : vector<16x32xf32>
    %cst_26 = arith.constant dense<0.000000e+00> : vector<16xf32>
    %90 = vector.multi_reduction <add>, %89, %cst_26 [1] : vector<16x32xf32> to vector<16xf32>
    %91 = vector.shape_cast %90 : vector<16xf32> to vector<16x1xf32>
    %cst_27 = arith.constant 3.200000e+01 : f32
    %92 = vector.broadcast %cst_27 : f32 to vector<16x1xf32>
    %93 = arith.divf %91, %92 : vector<16x1xf32>
    %94 = vector.broadcast %93 : vector<16x1xf32> to vector<16x32xf32>
    %95 = arith.subf %89, %94 : vector<16x32xf32>
    %96 = arith.mulf %95, %95 : vector<16x32xf32>
    %cst_28 = arith.constant dense<0.000000e+00> : vector<16xf32>
    %97 = vector.multi_reduction <add>, %96, %cst_28 [1] : vector<16x32xf32> to vector<16xf32>
    %98 = vector.shape_cast %97 : vector<16xf32> to vector<16x1xf32>
    %cst_29 = arith.constant 3.200000e+01 : f32
    %99 = vector.broadcast %cst_29 : f32 to vector<16x1xf32>
    %100 = arith.divf %98, %99 : vector<16x1xf32>
    %101 = vector.broadcast %93 : vector<16x1xf32> to vector<16x32xf32>
    %102 = arith.subf %89, %101 : vector<16x32xf32>
    %cst_30 = arith.constant 9.99999996E-13 : f32
    %103 = vector.broadcast %cst_30 : f32 to vector<16x1xf32>
    %104 = arith.addf %100, %103 : vector<16x1xf32>
    %105 = math.rsqrt %104 : vector<16x1xf32>
    %106 = vector.broadcast %105 : vector<16x1xf32> to vector<16x32xf32>
    %107 = arith.mulf %102, %106 : vector<16x32xf32>
    %108 = vector.broadcast %12 : vector<1x32xf32> to vector<16x32xf32>
    %109 = arith.mulf %107, %108 : vector<16x32xf32>
    %110 = vector.broadcast %13 : vector<1x32xf32> to vector<16x32xf32>
    %111 = arith.addf %109, %110 : vector<16x32xf32>
    %cst_31 = arith.constant dense<0.000000e+00> : vector<16x128xf32>
    %112 = tpu.matmul %111, %7, %cst_31 {dimension_numbers = #tpu.dot_dimension_numbers<[1], [0], [0], [1], [0, 0, 1, 1], [], []>} : vector<16x32xf32>, vector<32x128xf32>, vector<16x128xf32> -> vector<16x128xf32>
    %113 = vector.broadcast %14 : vector<1x128xf32> to vector<16x128xf32>
    %114 = arith.addf %112, %113 : vector<16x128xf32>
    %cst_32 = arith.constant 5.000000e-01 : f32
    %115 = vector.broadcast %cst_32 : f32 to vector<16x128xf32>
    %116 = arith.mulf %115, %114 : vector<16x128xf32>
    %cst_33 = arith.constant 0.707106769 : f32
    %117 = vector.broadcast %cst_33 : f32 to vector<16x128xf32>
    %118 = arith.mulf %114, %117 : vector<16x128xf32>
    %119 = math.erf %118 : vector<16x128xf32>
    %cst_34 = arith.constant 1.000000e+00 : f32
    %120 = vector.broadcast %cst_34 : f32 to vector<16x128xf32>
    %121 = arith.addf %120, %119 : vector<16x128xf32>
    %122 = arith.mulf %116, %121 : vector<16x128xf32>
    %c0_35 = arith.constant 0 : index
    %c0_36 = arith.constant 0 : index
    %c0_37 = arith.constant 0 : index
    %123 = vector.load %arg3[%c0_35, %c0_36, %c0_37] : memref<3x128x32xf32, #tpu.memory_space<vmem>>, vector<1x128x32xf32>
    %124 = vector.shape_cast %123 : vector<1x128x32xf32> to vector<128x32xf32>
    %cst_38 = arith.constant dense<0.000000e+00> : vector<16x32xf32>
    %125 = tpu.matmul %122, %124, %cst_38 {dimension_numbers = #tpu.dot_dimension_numbers<[1], [0], [0], [1], [0, 0, 1, 1], [], []>} : vector<16x128xf32>, vector<128x32xf32>, vector<16x32xf32> -> vector<16x32xf32>
    %126 = vector.broadcast %15 : vector<1x32xf32> to vector<16x32xf32>
    %127 = arith.addf %125, %126 : vector<16x32xf32>
    %128 = arith.addf %111, %127 : vector<16x32xf32>
    %cst_39 = arith.constant dense<0.000000e+00> : vector<16xf32>
    %129 = vector.multi_reduction <add>, %128, %cst_39 [1] : vector<16x32xf32> to vector<16xf32>
    %130 = vector.shape_cast %129 : vector<16xf32> to vector<16x1xf32>
    %cst_40 = arith.constant 3.200000e+01 : f32
    %131 = vector.broadcast %cst_40 : f32 to vector<16x1xf32>
    %132 = arith.divf %130, %131 : vector<16x1xf32>
    %133 = vector.broadcast %132 : vector<16x1xf32> to vector<16x32xf32>
    %134 = arith.subf %128, %133 : vector<16x32xf32>
    %135 = arith.mulf %134, %134 : vector<16x32xf32>
    %cst_41 = arith.constant dense<0.000000e+00> : vector<16xf32>
    %136 = vector.multi_reduction <add>, %135, %cst_41 [1] : vector<16x32xf32> to vector<16xf32>
    %137 = vector.shape_cast %136 : vector<16xf32> to vector<16x1xf32>
    %cst_42 = arith.constant 3.200000e+01 : f32
    %138 = vector.broadcast %cst_42 : f32 to vector<16x1xf32>
    %139 = arith.divf %137, %138 : vector<16x1xf32>
    %140 = vector.broadcast %132 : vector<16x1xf32> to vector<16x32xf32>
    %141 = arith.subf %128, %140 : vector<16x32xf32>
    %cst_43 = arith.constant 9.99999996E-13 : f32
    %142 = vector.broadcast %cst_43 : f32 to vector<16x1xf32>
    %143 = arith.addf %139, %142 : vector<16x1xf32>
    %144 = math.rsqrt %143 : vector<16x1xf32>
    %145 = vector.broadcast %144 : vector<16x1xf32> to vector<16x32xf32>
    %146 = arith.mulf %141, %145 : vector<16x32xf32>
    %147 = vector.broadcast %16 : vector<1x32xf32> to vector<16x32xf32>
    %148 = arith.mulf %146, %147 : vector<16x32xf32>
    %149 = vector.broadcast %17 : vector<1x32xf32> to vector<16x32xf32>
    %150 = arith.addf %148, %149 : vector<16x32xf32>
    %c1 = arith.constant 1 : index
    %c0_44 = arith.constant 0 : index
    %c0_45 = arith.constant 0 : index
    %151 = vector.load %arg2[%c1, %c0_44, %c0_45] : memref<3x64x128xf32, #tpu.memory_space<vmem>>, vector<1x64x128xf32>
    %152 = vector.shape_cast %151 : vector<1x64x128xf32> to vector<64x128xf32>
    %153 = vector.extract_strided_slice %152 {offsets = [0, 0], sizes = [32, 96], strides = [1, 1]} : vector<64x128xf32> to vector<32x96xf32>
    %154 = vector.extract_strided_slice %152 {offsets = [0, 96], sizes = [32, 32], strides = [1, 1]} : vector<64x128xf32> to vector<32x32xf32>
    %155 = vector.extract_strided_slice %152 {offsets = [32, 0], sizes = [32, 128], strides = [1, 1]} : vector<64x128xf32> to vector<32x128xf32>
    %c1_46 = arith.constant 1 : index
    %c0_47 = arith.constant 0 : index
    %c0_48 = arith.constant 0 : index
    %156 = vector.load %arg4[%c1_46, %c0_47, %c0_48] : memref<3x8x128xf32, #tpu.memory_space<vmem>>, vector<1x8x128xf32>
    %157 = vector.shape_cast %156 : vector<1x8x128xf32> to vector<8x128xf32>
    %158 = vector.extract_strided_slice %157 {offsets = [0, 0], sizes = [1, 96], strides = [1, 1]} : vector<8x128xf32> to vector<1x96xf32>
    %159 = vector.extract_strided_slice %157 {offsets = [1, 0], sizes = [1, 32], strides = [1, 1]} : vector<8x128xf32> to vector<1x32xf32>
    %160 = vector.extract_strided_slice %157 {offsets = [2, 0], sizes = [1, 32], strides = [1, 1]} : vector<8x128xf32> to vector<1x32xf32>
    %161 = vector.extract_strided_slice %157 {offsets = [3, 0], sizes = [1, 32], strides = [1, 1]} : vector<8x128xf32> to vector<1x32xf32>
    %162 = vector.extract_strided_slice %157 {offsets = [4, 0], sizes = [1, 128], strides = [1, 1]} : vector<8x128xf32> to vector<1x128xf32>
    %163 = vector.extract_strided_slice %157 {offsets = [5, 0], sizes = [1, 32], strides = [1, 1]} : vector<8x128xf32> to vector<1x32xf32>
    %164 = vector.extract_strided_slice %157 {offsets = [6, 0], sizes = [1, 32], strides = [1, 1]} : vector<8x128xf32> to vector<1x32xf32>
    %165 = vector.extract_strided_slice %157 {offsets = [7, 0], sizes = [1, 32], strides = [1, 1]} : vector<8x128xf32> to vector<1x32xf32>
    %cst_49 = arith.constant dense<0.000000e+00> : vector<16x96xf32>
    %166 = tpu.matmul %150, %153, %cst_49 {dimension_numbers = #tpu.dot_dimension_numbers<[1], [0], [0], [1], [0, 0, 1, 1], [], []>} : vector<16x32xf32>, vector<32x96xf32>, vector<16x96xf32> -> vector<16x96xf32>
    %167 = vector.broadcast %158 : vector<1x96xf32> to vector<16x96xf32>
    %168 = arith.addf %166, %167 : vector<16x96xf32>
    %169 = vector.extract_strided_slice %168 {offsets = [0, 0], sizes = [16, 8], strides = [1, 1]} : vector<16x96xf32> to vector<16x8xf32>
    %170 = vector.extract_strided_slice %168 {offsets = [0, 32], sizes = [16, 8], strides = [1, 1]} : vector<16x96xf32> to vector<16x8xf32>
    %171 = vector.extract_strided_slice %168 {offsets = [0, 64], sizes = [16, 8], strides = [1, 1]} : vector<16x96xf32> to vector<16x8xf32>
    "tpu.trace_start"() <{level = 10 : i32, message = "qd,kd->qk"}> : () -> ()
    %cst_50 = arith.constant dense<0.000000e+00> : vector<16x16xf32>
    %172 = tpu.matmul %169, %170, %cst_50 {dimension_numbers = #tpu.dot_dimension_numbers<[1], [1], [0], [0], [0, 0, 1, 0], [], []>} : vector<16x8xf32>, vector<16x8xf32>, vector<16x16xf32> -> vector<16x16xf32>
    "tpu.trace_stop"() : () -> ()
    %173 = arith.addf %172, %2 : vector<16x16xf32>
    %cst_51 = arith.constant dense<0xFF800000> : vector<16xf32>
    %174 = vector.multi_reduction <maximumf>, %173, %cst_51 [1] : vector<16x16xf32> to vector<16xf32>
    %175 = vector.shape_cast %174 : vector<16xf32> to vector<16x1xf32>
    %176 = vector.broadcast %175 : vector<16x1xf32> to vector<16x16xf32>
    %177 = arith.subf %173, %176 : vector<16x16xf32>
    %178 = math.exp %177 : vector<16x16xf32>
    %cst_52 = arith.constant dense<0.000000e+00> : vector<16xf32>
    %179 = vector.multi_reduction <add>, %178, %cst_52 [1] : vector<16x16xf32> to vector<16xf32>
    %180 = vector.shape_cast %179 : vector<16xf32> to vector<16x1xf32>
    %181 = tpu.reciprocal %180 {approx = true} : vector<16x1xf32> -> vector<16x1xf32>
    %182 = vector.broadcast %181 : vector<16x1xf32> to vector<16x16xf32>
    %183 = arith.mulf %178, %182 : vector<16x16xf32>
    %cst_53 = arith.constant dense<0.000000e+00> : vector<16x8xf32>
    %184 = tpu.matmul %183, %171, %cst_53 {dimension_numbers = #tpu.dot_dimension_numbers<[1], [0], [0], [1], [0, 0, 1, 1], [], []>} : vector<16x16xf32>, vector<16x8xf32>, vector<16x8xf32> -> vector<16x8xf32>
    %185 = vector.extract_strided_slice %168 {offsets = [0, 8], sizes = [16, 8], strides = [1, 1]} : vector<16x96xf32> to vector<16x8xf32>
    %186 = vector.extract_strided_slice %168 {offsets = [0, 40], sizes = [16, 8], strides = [1, 1]} : vector<16x96xf32> to vector<16x8xf32>
    %187 = vector.extract_strided_slice %168 {offsets = [0, 72], sizes = [16, 8], strides = [1, 1]} : vector<16x96xf32> to vector<16x8xf32>
    "tpu.trace_start"() <{level = 10 : i32, message = "qd,kd->qk"}> : () -> ()
    %cst_54 = arith.constant dense<0.000000e+00> : vector<16x16xf32>
    %188 = tpu.matmul %185, %186, %cst_54 {dimension_numbers = #tpu.dot_dimension_numbers<[1], [1], [0], [0], [0, 0, 1, 0], [], []>} : vector<16x8xf32>, vector<16x8xf32>, vector<16x16xf32> -> vector<16x16xf32>
    "tpu.trace_stop"() : () -> ()
    %189 = arith.addf %188, %2 : vector<16x16xf32>
    %cst_55 = arith.constant dense<0xFF800000> : vector<16xf32>
    %190 = vector.multi_reduction <maximumf>, %189, %cst_55 [1] : vector<16x16xf32> to vector<16xf32>
    %191 = vector.shape_cast %190 : vector<16xf32> to vector<16x1xf32>
    %192 = vector.broadcast %191 : vector<16x1xf32> to vector<16x16xf32>
    %193 = arith.subf %189, %192 : vector<16x16xf32>
    %194 = math.exp %193 : vector<16x16xf32>
    %cst_56 = arith.constant dense<0.000000e+00> : vector<16xf32>
    %195 = vector.multi_reduction <add>, %194, %cst_56 [1] : vector<16x16xf32> to vector<16xf32>
    %196 = vector.shape_cast %195 : vector<16xf32> to vector<16x1xf32>
    %197 = tpu.reciprocal %196 {approx = true} : vector<16x1xf32> -> vector<16x1xf32>
    %198 = vector.broadcast %197 : vector<16x1xf32> to vector<16x16xf32>
    %199 = arith.mulf %194, %198 : vector<16x16xf32>
    %cst_57 = arith.constant dense<0.000000e+00> : vector<16x8xf32>
    %200 = tpu.matmul %199, %187, %cst_57 {dimension_numbers = #tpu.dot_dimension_numbers<[1], [0], [0], [1], [0, 0, 1, 1], [], []>} : vector<16x16xf32>, vector<16x8xf32>, vector<16x8xf32> -> vector<16x8xf32>
    %201 = vector.extract_strided_slice %168 {offsets = [0, 16], sizes = [16, 8], strides = [1, 1]} : vector<16x96xf32> to vector<16x8xf32>
    %202 = vector.extract_strided_slice %168 {offsets = [0, 48], sizes = [16, 8], strides = [1, 1]} : vector<16x96xf32> to vector<16x8xf32>
    %203 = vector.extract_strided_slice %168 {offsets = [0, 80], sizes = [16, 8], strides = [1, 1]} : vector<16x96xf32> to vector<16x8xf32>
    "tpu.trace_start"() <{level = 10 : i32, message = "qd,kd->qk"}> : () -> ()
    %cst_58 = arith.constant dense<0.000000e+00> : vector<16x16xf32>
    %204 = tpu.matmul %201, %202, %cst_58 {dimension_numbers = #tpu.dot_dimension_numbers<[1], [1], [0], [0], [0, 0, 1, 0], [], []>} : vector<16x8xf32>, vector<16x8xf32>, vector<16x16xf32> -> vector<16x16xf32>
    "tpu.trace_stop"() : () -> ()
    %205 = arith.addf %204, %2 : vector<16x16xf32>
    %cst_59 = arith.constant dense<0xFF800000> : vector<16xf32>
    %206 = vector.multi_reduction <maximumf>, %205, %cst_59 [1] : vector<16x16xf32> to vector<16xf32>
    %207 = vector.shape_cast %206 : vector<16xf32> to vector<16x1xf32>
    %208 = vector.broadcast %207 : vector<16x1xf32> to vector<16x16xf32>
    %209 = arith.subf %205, %208 : vector<16x16xf32>
    %210 = math.exp %209 : vector<16x16xf32>
    %cst_60 = arith.constant dense<0.000000e+00> : vector<16xf32>
    %211 = vector.multi_reduction <add>, %210, %cst_60 [1] : vector<16x16xf32> to vector<16xf32>
    %212 = vector.shape_cast %211 : vector<16xf32> to vector<16x1xf32>
    %213 = tpu.reciprocal %212 {approx = true} : vector<16x1xf32> -> vector<16x1xf32>
    %214 = vector.broadcast %213 : vector<16x1xf32> to vector<16x16xf32>
    %215 = arith.mulf %210, %214 : vector<16x16xf32>
    %cst_61 = arith.constant dense<0.000000e+00> : vector<16x8xf32>
    %216 = tpu.matmul %215, %203, %cst_61 {dimension_numbers = #tpu.dot_dimension_numbers<[1], [0], [0], [1], [0, 0, 1, 1], [], []>} : vector<16x16xf32>, vector<16x8xf32>, vector<16x8xf32> -> vector<16x8xf32>
    %217 = vector.extract_strided_slice %168 {offsets = [0, 24], sizes = [16, 8], strides = [1, 1]} : vector<16x96xf32> to vector<16x8xf32>
    %218 = vector.extract_strided_slice %168 {offsets = [0, 56], sizes = [16, 8], strides = [1, 1]} : vector<16x96xf32> to vector<16x8xf32>
    %219 = vector.extract_strided_slice %168 {offsets = [0, 88], sizes = [16, 8], strides = [1, 1]} : vector<16x96xf32> to vector<16x8xf32>
    "tpu.trace_start"() <{level = 10 : i32, message = "qd,kd->qk"}> : () -> ()
    %cst_62 = arith.constant dense<0.000000e+00> : vector<16x16xf32>
    %220 = tpu.matmul %217, %218, %cst_62 {dimension_numbers = #tpu.dot_dimension_numbers<[1], [1], [0], [0], [0, 0, 1, 0], [], []>} : vector<16x8xf32>, vector<16x8xf32>, vector<16x16xf32> -> vector<16x16xf32>
    "tpu.trace_stop"() : () -> ()
    %221 = arith.addf %220, %2 : vector<16x16xf32>
    %cst_63 = arith.constant dense<0xFF800000> : vector<16xf32>
    %222 = vector.multi_reduction <maximumf>, %221, %cst_63 [1] : vector<16x16xf32> to vector<16xf32>
    %223 = vector.shape_cast %222 : vector<16xf32> to vector<16x1xf32>
    %224 = vector.broadcast %223 : vector<16x1xf32> to vector<16x16xf32>
    %225 = arith.subf %221, %224 : vector<16x16xf32>
    %226 = math.exp %225 : vector<16x16xf32>
    %cst_64 = arith.constant dense<0.000000e+00> : vector<16xf32>
    %227 = vector.multi_reduction <add>, %226, %cst_64 [1] : vector<16x16xf32> to vector<16xf32>
    %228 = vector.shape_cast %227 : vector<16xf32> to vector<16x1xf32>
    %229 = tpu.reciprocal %228 {approx = true} : vector<16x1xf32> -> vector<16x1xf32>
    %230 = vector.broadcast %229 : vector<16x1xf32> to vector<16x16xf32>
    %231 = arith.mulf %226, %230 : vector<16x16xf32>
    %cst_65 = arith.constant dense<0.000000e+00> : vector<16x8xf32>
    %232 = tpu.matmul %231, %219, %cst_65 {dimension_numbers = #tpu.dot_dimension_numbers<[1], [0], [0], [1], [0, 0, 1, 1], [], []>} : vector<16x16xf32>, vector<16x8xf32>, vector<16x8xf32> -> vector<16x8xf32>
    %233 = tpu.concatenate %184, %200, %216, %232 in 1 : vector<16x8xf32>, vector<16x8xf32>, vector<16x8xf32>, vector<16x8xf32> -> vector<16x32xf32>
    %cst_66 = arith.constant dense<0.000000e+00> : vector<16x32xf32>
    %234 = tpu.matmul %233, %154, %cst_66 {dimension_numbers = #tpu.dot_dimension_numbers<[1], [0], [0], [1], [0, 0, 1, 1], [], []>} : vector<16x32xf32>, vector<32x32xf32>, vector<16x32xf32> -> vector<16x32xf32>
    %235 = vector.broadcast %159 : vector<1x32xf32> to vector<16x32xf32>
    %236 = arith.addf %234, %235 : vector<16x32xf32>
    %237 = arith.addf %150, %236 : vector<16x32xf32>
    %cst_67 = arith.constant dense<0.000000e+00> : vector<16xf32>
    %238 = vector.multi_reduction <add>, %237, %cst_67 [1] : vector<16x32xf32> to vector<16xf32>
    %239 = vector.shape_cast %238 : vector<16xf32> to vector<16x1xf32>
    %cst_68 = arith.constant 3.200000e+01 : f32
    %240 = vector.broadcast %cst_68 : f32 to vector<16x1xf32>
    %241 = arith.divf %239, %240 : vector<16x1xf32>
    %242 = vector.broadcast %241 : vector<16x1xf32> to vector<16x32xf32>
    %243 = arith.subf %237, %242 : vector<16x32xf32>
    %244 = arith.mulf %243, %243 : vector<16x32xf32>
    %cst_69 = arith.constant dense<0.000000e+00> : vector<16xf32>
    %245 = vector.multi_reduction <add>, %244, %cst_69 [1] : vector<16x32xf32> to vector<16xf32>
    %246 = vector.shape_cast %245 : vector<16xf32> to vector<16x1xf32>
    %cst_70 = arith.constant 3.200000e+01 : f32
    %247 = vector.broadcast %cst_70 : f32 to vector<16x1xf32>
    %248 = arith.divf %246, %247 : vector<16x1xf32>
    %249 = vector.broadcast %241 : vector<16x1xf32> to vector<16x32xf32>
    %250 = arith.subf %237, %249 : vector<16x32xf32>
    %cst_71 = arith.constant 9.99999996E-13 : f32
    %251 = vector.broadcast %cst_71 : f32 to vector<16x1xf32>
    %252 = arith.addf %248, %251 : vector<16x1xf32>
    %253 = math.rsqrt %252 : vector<16x1xf32>
    %254 = vector.broadcast %253 : vector<16x1xf32> to vector<16x32xf32>
    %255 = arith.mulf %250, %254 : vector<16x32xf32>
    %256 = vector.broadcast %160 : vector<1x32xf32> to vector<16x32xf32>
    %257 = arith.mulf %255, %256 : vector<16x32xf32>
    %258 = vector.broadcast %161 : vector<1x32xf32> to vector<16x32xf32>
    %259 = arith.addf %257, %258 : vector<16x32xf32>
    %cst_72 = arith.constant dense<0.000000e+00> : vector<16x128xf32>
    %260 = tpu.matmul %259, %155, %cst_72 {dimension_numbers = #tpu.dot_dimension_numbers<[1], [0], [0], [1], [0, 0, 1, 1], [], []>} : vector<16x32xf32>, vector<32x128xf32>, vector<16x128xf32> -> vector<16x128xf32>
    %261 = vector.broadcast %162 : vector<1x128xf32> to vector<16x128xf32>
    %262 = arith.addf %260, %261 : vector<16x128xf32>
    %cst_73 = arith.constant 5.000000e-01 : f32
    %263 = vector.broadcast %cst_73 : f32 to vector<16x128xf32>
    %264 = arith.mulf %263, %262 : vector<16x128xf32>
    %cst_74 = arith.constant 0.707106769 : f32
    %265 = vector.broadcast %cst_74 : f32 to vector<16x128xf32>
    %266 = arith.mulf %262, %265 : vector<16x128xf32>
    %267 = math.erf %266 : vector<16x128xf32>
    %cst_75 = arith.constant 1.000000e+00 : f32
    %268 = vector.broadcast %cst_75 : f32 to vector<16x128xf32>
    %269 = arith.addf %268, %267 : vector<16x128xf32>
    %270 = arith.mulf %264, %269 : vector<16x128xf32>
    %c1_76 = arith.constant 1 : index
    %c0_77 = arith.constant 0 : index
    %c0_78 = arith.constant 0 : index
    %271 = vector.load %arg3[%c1_76, %c0_77, %c0_78] : memref<3x128x32xf32, #tpu.memory_space<vmem>>, vector<1x128x32xf32>
    %272 = vector.shape_cast %271 : vector<1x128x32xf32> to vector<128x32xf32>
    %cst_79 = arith.constant dense<0.000000e+00> : vector<16x32xf32>
    %273 = tpu.matmul %270, %272, %cst_79 {dimension_numbers = #tpu.dot_dimension_numbers<[1], [0], [0], [1], [0, 0, 1, 1], [], []>} : vector<16x128xf32>, vector<128x32xf32>, vector<16x32xf32> -> vector<16x32xf32>
    %274 = vector.broadcast %163 : vector<1x32xf32> to vector<16x32xf32>
    %275 = arith.addf %273, %274 : vector<16x32xf32>
    %276 = arith.addf %259, %275 : vector<16x32xf32>
    %cst_80 = arith.constant dense<0.000000e+00> : vector<16xf32>
    %277 = vector.multi_reduction <add>, %276, %cst_80 [1] : vector<16x32xf32> to vector<16xf32>
    %278 = vector.shape_cast %277 : vector<16xf32> to vector<16x1xf32>
    %cst_81 = arith.constant 3.200000e+01 : f32
    %279 = vector.broadcast %cst_81 : f32 to vector<16x1xf32>
    %280 = arith.divf %278, %279 : vector<16x1xf32>
    %281 = vector.broadcast %280 : vector<16x1xf32> to vector<16x32xf32>
    %282 = arith.subf %276, %281 : vector<16x32xf32>
    %283 = arith.mulf %282, %282 : vector<16x32xf32>
    %cst_82 = arith.constant dense<0.000000e+00> : vector<16xf32>
    %284 = vector.multi_reduction <add>, %283, %cst_82 [1] : vector<16x32xf32> to vector<16xf32>
    %285 = vector.shape_cast %284 : vector<16xf32> to vector<16x1xf32>
    %cst_83 = arith.constant 3.200000e+01 : f32
    %286 = vector.broadcast %cst_83 : f32 to vector<16x1xf32>
    %287 = arith.divf %285, %286 : vector<16x1xf32>
    %288 = vector.broadcast %280 : vector<16x1xf32> to vector<16x32xf32>
    %289 = arith.subf %276, %288 : vector<16x32xf32>
    %cst_84 = arith.constant 9.99999996E-13 : f32
    %290 = vector.broadcast %cst_84 : f32 to vector<16x1xf32>
    %291 = arith.addf %287, %290 : vector<16x1xf32>
    %292 = math.rsqrt %291 : vector<16x1xf32>
    %293 = vector.broadcast %292 : vector<16x1xf32> to vector<16x32xf32>
    %294 = arith.mulf %289, %293 : vector<16x32xf32>
    %295 = vector.broadcast %164 : vector<1x32xf32> to vector<16x32xf32>
    %296 = arith.mulf %294, %295 : vector<16x32xf32>
    %297 = vector.broadcast %165 : vector<1x32xf32> to vector<16x32xf32>
    %298 = arith.addf %296, %297 : vector<16x32xf32>
    %c2 = arith.constant 2 : index
    %c0_85 = arith.constant 0 : index
    %c0_86 = arith.constant 0 : index
    %299 = vector.load %arg2[%c2, %c0_85, %c0_86] : memref<3x64x128xf32, #tpu.memory_space<vmem>>, vector<1x64x128xf32>
    %300 = vector.shape_cast %299 : vector<1x64x128xf32> to vector<64x128xf32>
    %301 = vector.extract_strided_slice %300 {offsets = [0, 0], sizes = [32, 96], strides = [1, 1]} : vector<64x128xf32> to vector<32x96xf32>
    %302 = vector.extract_strided_slice %300 {offsets = [0, 96], sizes = [32, 32], strides = [1, 1]} : vector<64x128xf32> to vector<32x32xf32>
    %303 = vector.extract_strided_slice %300 {offsets = [32, 0], sizes = [32, 128], strides = [1, 1]} : vector<64x128xf32> to vector<32x128xf32>
    %c2_87 = arith.constant 2 : index
    %c0_88 = arith.constant 0 : index
    %c0_89 = arith.constant 0 : index
    %304 = vector.load %arg4[%c2_87, %c0_88, %c0_89] : memref<3x8x128xf32, #tpu.memory_space<vmem>>, vector<1x8x128xf32>
    %305 = vector.shape_cast %304 : vector<1x8x128xf32> to vector<8x128xf32>
    %306 = vector.extract_strided_slice %305 {offsets = [0, 0], sizes = [1, 96], strides = [1, 1]} : vector<8x128xf32> to vector<1x96xf32>
    %307 = vector.extract_strided_slice %305 {offsets = [1, 0], sizes = [1, 32], strides = [1, 1]} : vector<8x128xf32> to vector<1x32xf32>
    %308 = vector.extract_strided_slice %305 {offsets = [2, 0], sizes = [1, 32], strides = [1, 1]} : vector<8x128xf32> to vector<1x32xf32>
    %309 = vector.extract_strided_slice %305 {offsets = [3, 0], sizes = [1, 32], strides = [1, 1]} : vector<8x128xf32> to vector<1x32xf32>
    %310 = vector.extract_strided_slice %305 {offsets = [4, 0], sizes = [1, 128], strides = [1, 1]} : vector<8x128xf32> to vector<1x128xf32>
    %311 = vector.extract_strided_slice %305 {offsets = [5, 0], sizes = [1, 32], strides = [1, 1]} : vector<8x128xf32> to vector<1x32xf32>
    %312 = vector.extract_strided_slice %305 {offsets = [6, 0], sizes = [1, 32], strides = [1, 1]} : vector<8x128xf32> to vector<1x32xf32>
    %313 = vector.extract_strided_slice %305 {offsets = [7, 0], sizes = [1, 32], strides = [1, 1]} : vector<8x128xf32> to vector<1x32xf32>
    %cst_90 = arith.constant dense<0.000000e+00> : vector<16x96xf32>
    %314 = tpu.matmul %298, %301, %cst_90 {dimension_numbers = #tpu.dot_dimension_numbers<[1], [0], [0], [1], [0, 0, 1, 1], [], []>} : vector<16x32xf32>, vector<32x96xf32>, vector<16x96xf32> -> vector<16x96xf32>
    %315 = vector.broadcast %306 : vector<1x96xf32> to vector<16x96xf32>
    %316 = arith.addf %314, %315 : vector<16x96xf32>
    %317 = vector.extract_strided_slice %316 {offsets = [0, 0], sizes = [16, 8], strides = [1, 1]} : vector<16x96xf32> to vector<16x8xf32>
    %318 = vector.extract_strided_slice %316 {offsets = [0, 32], sizes = [16, 8], strides = [1, 1]} : vector<16x96xf32> to vector<16x8xf32>
    %319 = vector.extract_strided_slice %316 {offsets = [0, 64], sizes = [16, 8], strides = [1, 1]} : vector<16x96xf32> to vector<16x8xf32>
    "tpu.trace_start"() <{level = 10 : i32, message = "qd,kd->qk"}> : () -> ()
    %cst_91 = arith.constant dense<0.000000e+00> : vector<16x16xf32>
    %320 = tpu.matmul %317, %318, %cst_91 {dimension_numbers = #tpu.dot_dimension_numbers<[1], [1], [0], [0], [0, 0, 1, 0], [], []>} : vector<16x8xf32>, vector<16x8xf32>, vector<16x16xf32> -> vector<16x16xf32>
    "tpu.trace_stop"() : () -> ()
    %321 = arith.addf %320, %2 : vector<16x16xf32>
    %cst_92 = arith.constant dense<0xFF800000> : vector<16xf32>
    %322 = vector.multi_reduction <maximumf>, %321, %cst_92 [1] : vector<16x16xf32> to vector<16xf32>
    %323 = vector.shape_cast %322 : vector<16xf32> to vector<16x1xf32>
    %324 = vector.broadcast %323 : vector<16x1xf32> to vector<16x16xf32>
    %325 = arith.subf %321, %324 : vector<16x16xf32>
    %326 = math.exp %325 : vector<16x16xf32>
    %cst_93 = arith.constant dense<0.000000e+00> : vector<16xf32>
    %327 = vector.multi_reduction <add>, %326, %cst_93 [1] : vector<16x16xf32> to vector<16xf32>
    %328 = vector.shape_cast %327 : vector<16xf32> to vector<16x1xf32>
    %329 = tpu.reciprocal %328 {approx = true} : vector<16x1xf32> -> vector<16x1xf32>
    %330 = vector.broadcast %329 : vector<16x1xf32> to vector<16x16xf32>
    %331 = arith.mulf %326, %330 : vector<16x16xf32>
    %cst_94 = arith.constant dense<0.000000e+00> : vector<16x8xf32>
    %332 = tpu.matmul %331, %319, %cst_94 {dimension_numbers = #tpu.dot_dimension_numbers<[1], [0], [0], [1], [0, 0, 1, 1], [], []>} : vector<16x16xf32>, vector<16x8xf32>, vector<16x8xf32> -> vector<16x8xf32>
    %333 = vector.extract_strided_slice %316 {offsets = [0, 8], sizes = [16, 8], strides = [1, 1]} : vector<16x96xf32> to vector<16x8xf32>
    %334 = vector.extract_strided_slice %316 {offsets = [0, 40], sizes = [16, 8], strides = [1, 1]} : vector<16x96xf32> to vector<16x8xf32>
    %335 = vector.extract_strided_slice %316 {offsets = [0, 72], sizes = [16, 8], strides = [1, 1]} : vector<16x96xf32> to vector<16x8xf32>
    "tpu.trace_start"() <{level = 10 : i32, message = "qd,kd->qk"}> : () -> ()
    %cst_95 = arith.constant dense<0.000000e+00> : vector<16x16xf32>
    %336 = tpu.matmul %333, %334, %cst_95 {dimension_numbers = #tpu.dot_dimension_numbers<[1], [1], [0], [0], [0, 0, 1, 0], [], []>} : vector<16x8xf32>, vector<16x8xf32>, vector<16x16xf32> -> vector<16x16xf32>
    "tpu.trace_stop"() : () -> ()
    %337 = arith.addf %336, %2 : vector<16x16xf32>
    %cst_96 = arith.constant dense<0xFF800000> : vector<16xf32>
    %338 = vector.multi_reduction <maximumf>, %337, %cst_96 [1] : vector<16x16xf32> to vector<16xf32>
    %339 = vector.shape_cast %338 : vector<16xf32> to vector<16x1xf32>
    %340 = vector.broadcast %339 : vector<16x1xf32> to vector<16x16xf32>
    %341 = arith.subf %337, %340 : vector<16x16xf32>
    %342 = math.exp %341 : vector<16x16xf32>
    %cst_97 = arith.constant dense<0.000000e+00> : vector<16xf32>
    %343 = vector.multi_reduction <add>, %342, %cst_97 [1] : vector<16x16xf32> to vector<16xf32>
    %344 = vector.shape_cast %343 : vector<16xf32> to vector<16x1xf32>
    %345 = tpu.reciprocal %344 {approx = true} : vector<16x1xf32> -> vector<16x1xf32>
    %346 = vector.broadcast %345 : vector<16x1xf32> to vector<16x16xf32>
    %347 = arith.mulf %342, %346 : vector<16x16xf32>
    %cst_98 = arith.constant dense<0.000000e+00> : vector<16x8xf32>
    %348 = tpu.matmul %347, %335, %cst_98 {dimension_numbers = #tpu.dot_dimension_numbers<[1], [0], [0], [1], [0, 0, 1, 1], [], []>} : vector<16x16xf32>, vector<16x8xf32>, vector<16x8xf32> -> vector<16x8xf32>
    %349 = vector.extract_strided_slice %316 {offsets = [0, 16], sizes = [16, 8], strides = [1, 1]} : vector<16x96xf32> to vector<16x8xf32>
    %350 = vector.extract_strided_slice %316 {offsets = [0, 48], sizes = [16, 8], strides = [1, 1]} : vector<16x96xf32> to vector<16x8xf32>
    %351 = vector.extract_strided_slice %316 {offsets = [0, 80], sizes = [16, 8], strides = [1, 1]} : vector<16x96xf32> to vector<16x8xf32>
    "tpu.trace_start"() <{level = 10 : i32, message = "qd,kd->qk"}> : () -> ()
    %cst_99 = arith.constant dense<0.000000e+00> : vector<16x16xf32>
    %352 = tpu.matmul %349, %350, %cst_99 {dimension_numbers = #tpu.dot_dimension_numbers<[1], [1], [0], [0], [0, 0, 1, 0], [], []>} : vector<16x8xf32>, vector<16x8xf32>, vector<16x16xf32> -> vector<16x16xf32>
    "tpu.trace_stop"() : () -> ()
    %353 = arith.addf %352, %2 : vector<16x16xf32>
    %cst_100 = arith.constant dense<0xFF800000> : vector<16xf32>
    %354 = vector.multi_reduction <maximumf>, %353, %cst_100 [1] : vector<16x16xf32> to vector<16xf32>
    %355 = vector.shape_cast %354 : vector<16xf32> to vector<16x1xf32>
    %356 = vector.broadcast %355 : vector<16x1xf32> to vector<16x16xf32>
    %357 = arith.subf %353, %356 : vector<16x16xf32>
    %358 = math.exp %357 : vector<16x16xf32>
    %cst_101 = arith.constant dense<0.000000e+00> : vector<16xf32>
    %359 = vector.multi_reduction <add>, %358, %cst_101 [1] : vector<16x16xf32> to vector<16xf32>
    %360 = vector.shape_cast %359 : vector<16xf32> to vector<16x1xf32>
    %361 = tpu.reciprocal %360 {approx = true} : vector<16x1xf32> -> vector<16x1xf32>
    %362 = vector.broadcast %361 : vector<16x1xf32> to vector<16x16xf32>
    %363 = arith.mulf %358, %362 : vector<16x16xf32>
    %cst_102 = arith.constant dense<0.000000e+00> : vector<16x8xf32>
    %364 = tpu.matmul %363, %351, %cst_102 {dimension_numbers = #tpu.dot_dimension_numbers<[1], [0], [0], [1], [0, 0, 1, 1], [], []>} : vector<16x16xf32>, vector<16x8xf32>, vector<16x8xf32> -> vector<16x8xf32>
    %365 = vector.extract_strided_slice %316 {offsets = [0, 24], sizes = [16, 8], strides = [1, 1]} : vector<16x96xf32> to vector<16x8xf32>
    %366 = vector.extract_strided_slice %316 {offsets = [0, 56], sizes = [16, 8], strides = [1, 1]} : vector<16x96xf32> to vector<16x8xf32>
    %367 = vector.extract_strided_slice %316 {offsets = [0, 88], sizes = [16, 8], strides = [1, 1]} : vector<16x96xf32> to vector<16x8xf32>
    "tpu.trace_start"() <{level = 10 : i32, message = "qd,kd->qk"}> : () -> ()
    %cst_103 = arith.constant dense<0.000000e+00> : vector<16x16xf32>
    %368 = tpu.matmul %365, %366, %cst_103 {dimension_numbers = #tpu.dot_dimension_numbers<[1], [1], [0], [0], [0, 0, 1, 0], [], []>} : vector<16x8xf32>, vector<16x8xf32>, vector<16x16xf32> -> vector<16x16xf32>
    "tpu.trace_stop"() : () -> ()
    %369 = arith.addf %368, %2 : vector<16x16xf32>
    %cst_104 = arith.constant dense<0xFF800000> : vector<16xf32>
    %370 = vector.multi_reduction <maximumf>, %369, %cst_104 [1] : vector<16x16xf32> to vector<16xf32>
    %371 = vector.shape_cast %370 : vector<16xf32> to vector<16x1xf32>
    %372 = vector.broadcast %371 : vector<16x1xf32> to vector<16x16xf32>
    %373 = arith.subf %369, %372 : vector<16x16xf32>
    %374 = math.exp %373 : vector<16x16xf32>
    %cst_105 = arith.constant dense<0.000000e+00> : vector<16xf32>
    %375 = vector.multi_reduction <add>, %374, %cst_105 [1] : vector<16x16xf32> to vector<16xf32>
    %376 = vector.shape_cast %375 : vector<16xf32> to vector<16x1xf32>
    %377 = tpu.reciprocal %376 {approx = true} : vector<16x1xf32> -> vector<16x1xf32>
    %378 = vector.broadcast %377 : vector<16x1xf32> to vector<16x16xf32>
    %379 = arith.mulf %374, %378 : vector<16x16xf32>
    %cst_106 = arith.constant dense<0.000000e+00> : vector<16x8xf32>
    %380 = tpu.matmul %379, %367, %cst_106 {dimension_numbers = #tpu.dot_dimension_numbers<[1], [0], [0], [1], [0, 0, 1, 1], [], []>} : vector<16x16xf32>, vector<16x8xf32>, vector<16x8xf32> -> vector<16x8xf32>
    %381 = tpu.concatenate %332, %348, %364, %380 in 1 : vector<16x8xf32>, vector<16x8xf32>, vector<16x8xf32>, vector<16x8xf32> -> vector<16x32xf32>
    %cst_107 = arith.constant dense<0.000000e+00> : vector<16x32xf32>
    %382 = tpu.matmul %381, %302, %cst_107 {dimension_numbers = #tpu.dot_dimension_numbers<[1], [0], [0], [1], [0, 0, 1, 1], [], []>} : vector<16x32xf32>, vector<32x32xf32>, vector<16x32xf32> -> vector<16x32xf32>
    %383 = vector.broadcast %307 : vector<1x32xf32> to vector<16x32xf32>
    %384 = arith.addf %382, %383 : vector<16x32xf32>
    %385 = arith.addf %298, %384 : vector<16x32xf32>
    %cst_108 = arith.constant dense<0.000000e+00> : vector<16xf32>
    %386 = vector.multi_reduction <add>, %385, %cst_108 [1] : vector<16x32xf32> to vector<16xf32>
    %387 = vector.shape_cast %386 : vector<16xf32> to vector<16x1xf32>
    %cst_109 = arith.constant 3.200000e+01 : f32
    %388 = vector.broadcast %cst_109 : f32 to vector<16x1xf32>
    %389 = arith.divf %387, %388 : vector<16x1xf32>
    %390 = vector.broadcast %389 : vector<16x1xf32> to vector<16x32xf32>
    %391 = arith.subf %385, %390 : vector<16x32xf32>
    %392 = arith.mulf %391, %391 : vector<16x32xf32>
    %cst_110 = arith.constant dense<0.000000e+00> : vector<16xf32>
    %393 = vector.multi_reduction <add>, %392, %cst_110 [1] : vector<16x32xf32> to vector<16xf32>
    %394 = vector.shape_cast %393 : vector<16xf32> to vector<16x1xf32>
    %cst_111 = arith.constant 3.200000e+01 : f32
    %395 = vector.broadcast %cst_111 : f32 to vector<16x1xf32>
    %396 = arith.divf %394, %395 : vector<16x1xf32>
    %397 = vector.broadcast %389 : vector<16x1xf32> to vector<16x32xf32>
    %398 = arith.subf %385, %397 : vector<16x32xf32>
    %cst_112 = arith.constant 9.99999996E-13 : f32
    %399 = vector.broadcast %cst_112 : f32 to vector<16x1xf32>
    %400 = arith.addf %396, %399 : vector<16x1xf32>
    %401 = math.rsqrt %400 : vector<16x1xf32>
    %402 = vector.broadcast %401 : vector<16x1xf32> to vector<16x32xf32>
    %403 = arith.mulf %398, %402 : vector<16x32xf32>
    %404 = vector.broadcast %308 : vector<1x32xf32> to vector<16x32xf32>
    %405 = arith.mulf %403, %404 : vector<16x32xf32>
    %406 = vector.broadcast %309 : vector<1x32xf32> to vector<16x32xf32>
    %407 = arith.addf %405, %406 : vector<16x32xf32>
    %cst_113 = arith.constant dense<0.000000e+00> : vector<16x128xf32>
    %408 = tpu.matmul %407, %303, %cst_113 {dimension_numbers = #tpu.dot_dimension_numbers<[1], [0], [0], [1], [0, 0, 1, 1], [], []>} : vector<16x32xf32>, vector<32x128xf32>, vector<16x128xf32> -> vector<16x128xf32>
    %409 = vector.broadcast %310 : vector<1x128xf32> to vector<16x128xf32>
    %410 = arith.addf %408, %409 : vector<16x128xf32>
    %cst_114 = arith.constant 5.000000e-01 : f32
    %411 = vector.broadcast %cst_114 : f32 to vector<16x128xf32>
    %412 = arith.mulf %411, %410 : vector<16x128xf32>
    %cst_115 = arith.constant 0.707106769 : f32
    %413 = vector.broadcast %cst_115 : f32 to vector<16x128xf32>
    %414 = arith.mulf %410, %413 : vector<16x128xf32>
    %415 = math.erf %414 : vector<16x128xf32>
    %cst_116 = arith.constant 1.000000e+00 : f32
    %416 = vector.broadcast %cst_116 : f32 to vector<16x128xf32>
    %417 = arith.addf %416, %415 : vector<16x128xf32>
    %418 = arith.mulf %412, %417 : vector<16x128xf32>
    %c2_117 = arith.constant 2 : index
    %c0_118 = arith.constant 0 : index
    %c0_119 = arith.constant 0 : index
    %419 = vector.load %arg3[%c2_117, %c0_118, %c0_119] : memref<3x128x32xf32, #tpu.memory_space<vmem>>, vector<1x128x32xf32>
    %420 = vector.shape_cast %419 : vector<1x128x32xf32> to vector<128x32xf32>
    %cst_120 = arith.constant dense<0.000000e+00> : vector<16x32xf32>
    %421 = tpu.matmul %418, %420, %cst_120 {dimension_numbers = #tpu.dot_dimension_numbers<[1], [0], [0], [1], [0, 0, 1, 1], [], []>} : vector<16x128xf32>, vector<128x32xf32>, vector<16x32xf32> -> vector<16x32xf32>
    %422 = vector.broadcast %311 : vector<1x32xf32> to vector<16x32xf32>
    %423 = arith.addf %421, %422 : vector<16x32xf32>
    %424 = arith.addf %407, %423 : vector<16x32xf32>
    %cst_121 = arith.constant dense<0.000000e+00> : vector<16xf32>
    %425 = vector.multi_reduction <add>, %424, %cst_121 [1] : vector<16x32xf32> to vector<16xf32>
    %426 = vector.shape_cast %425 : vector<16xf32> to vector<16x1xf32>
    %cst_122 = arith.constant 3.200000e+01 : f32
    %427 = vector.broadcast %cst_122 : f32 to vector<16x1xf32>
    %428 = arith.divf %426, %427 : vector<16x1xf32>
    %429 = vector.broadcast %428 : vector<16x1xf32> to vector<16x32xf32>
    %430 = arith.subf %424, %429 : vector<16x32xf32>
    %431 = arith.mulf %430, %430 : vector<16x32xf32>
    %cst_123 = arith.constant dense<0.000000e+00> : vector<16xf32>
    %432 = vector.multi_reduction <add>, %431, %cst_123 [1] : vector<16x32xf32> to vector<16xf32>
    %433 = vector.shape_cast %432 : vector<16xf32> to vector<16x1xf32>
    %cst_124 = arith.constant 3.200000e+01 : f32
    %434 = vector.broadcast %cst_124 : f32 to vector<16x1xf32>
    %435 = arith.divf %433, %434 : vector<16x1xf32>
    %436 = vector.broadcast %428 : vector<16x1xf32> to vector<16x32xf32>
    %437 = arith.subf %424, %436 : vector<16x32xf32>
    %cst_125 = arith.constant 9.99999996E-13 : f32
    %438 = vector.broadcast %cst_125 : f32 to vector<16x1xf32>
    %439 = arith.addf %435, %438 : vector<16x1xf32>
    %440 = math.rsqrt %439 : vector<16x1xf32>
    %441 = vector.broadcast %440 : vector<16x1xf32> to vector<16x32xf32>
    %442 = arith.mulf %437, %441 : vector<16x32xf32>
    %443 = vector.broadcast %312 : vector<1x32xf32> to vector<16x32xf32>
    %444 = arith.mulf %442, %443 : vector<16x32xf32>
    %445 = vector.broadcast %313 : vector<1x32xf32> to vector<16x32xf32>
    %446 = arith.addf %444, %445 : vector<16x32xf32>
    %447 = vector.shape_cast %446 : vector<16x32xf32> to vector<2x8x32xf32>
    %448 = vector.extract_strided_slice %447 {offsets = [0, 0, 0], sizes = [2, 1, 32], strides = [1, 1, 1]} : vector<2x8x32xf32> to vector<2x1x32xf32>
    %449 = vector.shape_cast %448 : vector<2x1x32xf32> to vector<2x32xf32>
    %c0_126 = arith.constant 0 : index
    %c0_127 = arith.constant 0 : index
    %450 = vector.load %arg5[%c0_126, %c0_127] : memref<33x34xf32, #tpu.memory_space<vmem>>, vector<33x34xf32>
    %451 = vector.extract_strided_slice %450 {offsets = [0, 0], sizes = [32, 32], strides = [1, 1]} : vector<33x34xf32> to vector<32x32xf32>
    %452 = vector.extract_strided_slice %450 {offsets = [0, 32], sizes = [32, 2], strides = [1, 1]} : vector<33x34xf32> to vector<32x2xf32>
    %453 = vector.extract_strided_slice %450 {offsets = [32, 0], sizes = [1, 32], strides = [1, 1]} : vector<33x34xf32> to vector<1x32xf32>
    %454 = vector.extract_strided_slice %450 {offsets = [32, 32], sizes = [1, 2], strides = [1, 1]} : vector<33x34xf32> to vector<1x2xf32>
    %cst_128 = arith.constant dense<0.000000e+00> : vector<2x32xf32>
    %455 = tpu.matmul %449, %451, %cst_128 {dimension_numbers = #tpu.dot_dimension_numbers<[1], [0], [0], [1], [0, 0, 1, 1], [], []>} : vector<2x32xf32>, vector<32x32xf32>, vector<2x32xf32> -> vector<2x32xf32>
    %456 = vector.broadcast %453 : vector<1x32xf32> to vector<2x32xf32>
    %457 = arith.addf %455, %456 : vector<2x32xf32>
    %458 = math.tanh %457 : vector<2x32xf32>
    %cst_129 = arith.constant dense<0.000000e+00> : vector<2x2xf32>
    %459 = tpu.matmul %458, %452, %cst_129 {dimension_numbers = #tpu.dot_dimension_numbers<[1], [0], [0], [1], [0, 0, 1, 1], [], []>} : vector<2x32xf32>, vector<32x2xf32>, vector<2x2xf32> -> vector<2x2xf32>
    %460 = vector.broadcast %454 : vector<1x2xf32> to vector<2x2xf32>
    %461 = arith.addf %459, %460 : vector<2x2xf32>
    %c0_130 = arith.constant 0 : index
    %c0_131 = arith.constant 0 : index
    %462 = vector.load %arg6[%c0_130, %c0_131] : memref<2x2xf32, #tpu.memory_space<vmem>>, vector<2x2xf32>
    tpu.vector_store %arg6[%c0_130, %c0_131], %461 {strides = array<i32>} : memref<2x2xf32, #tpu.memory_space<vmem>>, vector<2x2xf32>,
    return
  }
}

</mosaic_0001>

<llo_original>
// kernel: mul.31
$region0: #{mul.31}
  %s0 = inlined_call_operand.vmem [shape: f32[2,8], index: 0, kind: input, shape index: {}]
  %s1 = inlined_call_operand.vmem [shape: f32[16], index: 1, kind: output, shape index: {}]
  $region1: #{mul.31} parent=0
    #allocation0 [shape = 'u8[4096]{0}', space=vmem, size = 0x1000, scoped, tag = 'scoped mem for output reshape']
    #allocation1 [shape = 'u8[4096]{0}', space=vmem, size = 0x1000, scoped, tag = 'scoped mem for input reshape']
    %s3 = sshll.u32 1, 2
    %s4 = ssub.s32 %s3, 1
    %v5 = vld [vmem:[%s0] sm:%s4]
    %6 = vst [vmem:[#allocation1] sm:%s4] %v5
    %v7 = vld [vmem:[#allocation1] sm:$0x1]
    %vm8 = vcmask 64512
    %9 = vst.msk [vmem:[#allocation0] sm:$0x1] %vm8, %v7
    %s10 = scalar_lea.vmem [#allocation1], 1
    %v11 = vld [vmem:[%s10] sm:$0x1]
    %12 = vrot.lane.b32.xlu0 %v11, 8
    %v13 = vpop.permute.xlu0 %12
    %vm14 = vcmask 130112
    %15 = vst.msk [vmem:[#allocation0] sm:$0x1] %vm14, %v13
    %s17 = sshll.u32 1, 1
    %s18 = ssub.s32 %s17, 1
    %v20 = vld [vmem:[#allocation0] sm:%s18]
    %s21 = sshll.u32 1, 1
    %s22 = ssub.s32 %s21, 1
    %23 = vst [vmem:[%s1] sm:%s22] %v20

// kernel: bert_server_forward.1
$region0: #{bert_server_forward.1}
  #allocation0 [shape = 'u32[]', space=smem, size = 0x4, offset = 0x4, fixed_abs, tag = 'smem constant byte address 0x4 - core index']
  #allocation1 [shape = 'u32[144,128]{1,0:T(1,128)}', space=vmem, size = 0x12000, scoped, tag = 'internal scratch']
  %s0 = inlined_call_operand.vmem [shape: f32[16,32], index: 0, kind: input, shape index: {}]
  %s1 = inlined_call_operand.vmem [shape: f32[16,16], index: 1, kind: input, shape index: {}]
  %s2 = inlined_call_operand.vmem [shape: f32[3,64,128], index: 2, kind: input, shape index: {}]
  %s3 = inlined_call_operand.vmem [shape: f32[3,128,32], index: 3, kind: input, shape index: {}]
  %s4 = inlined_call_operand.vmem [shape: f32[3,8,128], index: 4, kind: input, shape index: {}]
  %s5 = inlined_call_operand.vmem [shape: f32[33,34], index: 5, kind: input, shape index: {}]
  %s6 = inlined_call_operand.hbm [shape: f32[2,2], index: 6, kind: output, shape index: {}]
  %s7 = sld [smem:[#allocation0]]
  $region34: #{bert_server_forward.1} parent=0
    _
  %s9 = ssub.s32 1, %s7
  %s10 = scalar_select 0, %s9, %s7
  $region1: #{bert_server_forward.1} parent=0
    #allocation2 [shape = 'u8[1024]{0}', space=vmem, size = 0x400, scoped, tag = 'output window, operand 0, single buffered']
    #allocation3 [shape = 's32[1]{0}', space=sflag, size = 0x4, scoped, tag = 'scoped memory for bert_server_forward.1']
    %11 = vsyncpa [#allocation3], 0
    // Predicated region
    $region2: #{bert_server_forward.1} parent=1 // pred_check
      _
    $region3: #{bert_server_forward.1} parent=1 // pred_check_branch
      %13 = sbr.rel (0) target = $region5
    $region4: #{bert_server_forward.1} parent=1 // pred_region
      _
    $region5: #{bert_server_forward.1} parent=1 // pred_fallthru
      _
    // Predicated region
    $region6: #{bert_server_forward.1} parent=1 // pred_check
      _
    $region7: #{bert_server_forward.1} parent=1 // pred_check_branch
      %15 = sbr.rel (0) target = $region9
    $region8: #{bert_server_forward.1} parent=1 // pred_region
      _
    $region9: #{bert_server_forward.1} parent=1 // pred_fallthru
      _
    // Predicated region
    $region10: #{bert_server_forward.1} parent=1 // pred_check
      _
    $region11: #{bert_server_forward.1} parent=1 // pred_check_branch
      %17 = sbr.rel (0) target = $region13
    $region12: #{bert_server_forward.1} parent=1 // pred_region
      _
    $region13: #{bert_server_forward.1} parent=1 // pred_fallthru
      _
    // Predicated region
    $region14: #{bert_server_forward.1} parent=1 // pred_check
      _
    $region15: #{bert_server_forward.1} parent=1 // pred_check_branch
      %19 = sbr.rel (0) target = $region17
    $region16: #{bert_server_forward.1} parent=1 // pred_region
      _
    $region17: #{bert_server_forward.1} parent=1 // pred_fallthru
      _
    // Predicated region
    $region18: #{bert_server_forward.1} parent=1 // pred_check
      _
    $region19: #{bert_server_forward.1} parent=1 // pred_check_branch
      %21 = sbr.rel (0) target = $region21
    $region20: #{bert_server_forward.1} parent=1 // pred_region
      _
    $region21: #{bert_server_forward.1} parent=1 // pred_fallthru
      _
    // Predicated region
    $region22: #{bert_server_forward.1} parent=1 // pred_check
      _
    $region23: #{bert_server_forward.1} parent=1 // pred_check_branch
      %23 = sbr.rel (0) target = $region25
    $region24: #{bert_server_forward.1} parent=1 // pred_region
      _
    $region25: #{bert_server_forward.1} parent=1 // pred_fallthru
      _
    %v24 = vld [vmem:[%s0] sm:$0xff]
    %v25 = vld [vmem:[%s0 + $0x8] sm:$0xff]
    %v26 = vld [vmem:[%s1] sm:$0xff]
    %v27 = vld [vmem:[%s1 + $0x8] sm:$0xff]
    %v28 = vld [vmem:[%s2] sm:$0xff]
    %v29 = vld [vmem:[%s2 + $0x8] sm:$0xff]
    %v30 = vld [vmem:[%s2 + $0x10] sm:$0xff]
    %v31 = vld [vmem:[%s2 + $0x18] sm:$0xff]
    %v32 = vld [vmem:[%s2 + $0x20] sm:$0xff]
    %v33 = vld [vmem:[%s2 + $0x28] sm:$0xff]
    %v34 = vld [vmem:[%s2 + $0x30] sm:$0xff]
    %v35 = vld [vmem:[%s2 + $0x38] sm:$0xff]
    %v36 = vld [vmem:[%s4] sm:$0xff]
    %v37 = vlaneseq
    %v38 = vshrl.u32 %v37, 7
    %v39 = vsub.s32 0, %v38
    %v40 = vrot.slane %v36, %v39
    %vm41 = vcmask 261120
    %v43 = vsel %vm41, %v24, 0
    %v46 = vsel %vm41, %v25, 0
    %48 = vmatprep.subr.mxu0 0.0
    %49 = vmatpush1.msra.mxu0 0.0
    %50 = vmatprep.subr.mxu0 0.0
    %51 = vmatpush1.msra.mxu0 0.0
    %52 = vmatprep.subr.mxu0 0.0
    %53 = vmatpush1.msra.mxu0 0.0
    %54 = vmatprep.subr.mxu0 0.0
    %55 = vmatpush1.msra.mxu0 0.0
    %56 = vmatprep.subr.mxu0 0.0
    %57 = vmatpush1.msra.mxu0 0.0
    %58 = vmatprep.subr.mxu0 0.0
    %59 = vmatpush1.msra.mxu0 0.0
    %60 = vmatprep.subr.mxu0 0.0
    %61 = vmatpush1.msra.mxu0 0.0
    %62 = vmatprep.subr.mxu0 0.0
    %63 = vmatpush1.msra.mxu0 0.0
    %64 = vmatprep.subr.mxu0 0.0
    %65 = vmatpush1.msra.mxu0 0.0
    %66 = vmatprep.subr.mxu0 0.0
    %67 = vmatpush1.msra.mxu0 0.0
    %68 = vmatprep.subr.mxu0 0.0
    %69 = vmatpush1.msra.mxu0 0.0
    %70 = vmatprep.subr.mxu0 0.0
    %71 = vmatpush1.msra.mxu0 0.0
    %72 = vmatprep.subr.mxu0 0.0
    %73 = vmatpush1.msra.mxu0 %v31
    %74 = vmatprep.subr.mxu0 0.0
    %75 = vmatpush1.msra.mxu0 %v30
    %76 = vmatprep.subr.mxu0 0.0
    %77 = vmatpush1.msra.mxu0 %v29
    %78 = vmatprep.subr.mxu0 0.0
    %79 = vmatpush1.msra.mxu0 %v28
    %80 = vmatprep.subr.mxu0 0.0
    %81 = vmatpush2.msra.mxu0 0.0
    %82 = vmatprep.subr.mxu0 0.0
    %83 = vmatpush2.msra.mxu0 0.0
    %84 = vmatprep.subr.mxu0 0.0
    %85 = vmatpush2.msra.mxu0 0.0
    %86 = vmatprep.subr.mxu0 0.0
    %87 = vmatpush2.msra.mxu0 0.0
    %88 = vmatprep.subr.mxu0 0.0
    %89 = vmatpush2.msra.mxu0 0.0
    %90 = vmatprep.subr.mxu0 0.0
    %91 = vmatpush2.msra.mxu0 0.0
    %92 = vmatprep.subr.mxu0 0.0
    %93 = vmatpush2.msra.mxu0 0.0
    %94 = vmatprep.subr.mxu0 0.0
    %95 = vmatpush2.msra.mxu0 0.0
    %96 = vmatprep.subr.mxu0 0.0
    %97 = vmatpush2.msra.mxu0 0.0
    %98 = vmatprep.subr.mxu0 0.0
    %99 = vmatpush2.msra.mxu0 0.0
    %100 = vmatprep.subr.mxu0 0.0
    %101 = vmatpush2.msra.mxu0 0.0
    %102 = vmatprep.subr.mxu0 0.0
    %103 = vmatpush2.msra.mxu0 0.0
    %104 = vmatprep.subr.mxu0 0.0
    %105 = vmatpush2.msra.mxu0 0.0
    %106 = vmatprep.subr.mxu0 0.0
    %107 = vmatpush2.msra.mxu0 0.0
    %108 = vmatprep.subr.mxu0 0.0
    %109 = vmatpush2.msra.mxu0 0.0
    %110 = vmatprep.subr.mxu0 0.0
    %111 = vmatpush2.msra.mxu0 0.0
    %112 = vmatprep.mubr.f32.mxu0 0.0
    %113 = vmatmul.mubr.f32.gmra.mxu0 %v43
    %v114 = vpop.f32.mrf.mxu0
    %v115 = vadd.f32 %v40, %v114
    %v116 = vpop.f32.mrf.mxu0
    %117 = vmatprep.mubr.f32.mxu0 0.0
    %118 = vmatmul.mubr.f32.gmra.mxu0 %v46
    %v119 = vpop.f32.mrf.mxu0
    %v120 = vadd.f32 %v40, %v119
    %v121 = vpop.f32.mrf.mxu0
    %122 = vdwg.mxu0
    %125 = vrot.lane.b32.xlu0 %v115, 96
    %v126 = vpop.permute.xlu0 %125
    %127 = vrot.lane.b32.xlu0 %v120, 96
    %v128 = vpop.permute.xlu0 %127
    %vm129 = vcmask 64512
    %v130 = vsel %vm129, %v115, 0
    %v132 = vsel %vm129, %v120, 0
    %v134 = vsel %vm129, %v126, 0
    %v136 = vsel %vm129, %v128, 0
    %138 = vmatprep.subr.mxu0 0.0
    %139 = vmatpush1.xpose.msra.mxu0 0.0
    %140 = vmatprep.subr.mxu0 0.0
    %141 = vmatpush1.xpose.msra.mxu0 0.0
    %142 = vmatprep.subr.mxu0 0.0
    %143 = vmatpush1.xpose.msra.mxu0 0.0
    %144 = vmatprep.subr.mxu0 0.0
    %145 = vmatpush1.xpose.msra.mxu0 0.0
    %146 = vmatprep.subr.mxu0 0.0
    %147 = vmatpush1.xpose.msra.mxu0 0.0
    %148 = vmatprep.subr.mxu0 0.0
    %149 = vmatpush1.xpose.msra.mxu0 0.0
    %150 = vmatprep.subr.mxu0 0.0
    %151 = vmatpush1.xpose.msra.mxu0 0.0
    %152 = vmatprep.subr.mxu0 0.0
    %153 = vmatpush1.xpose.msra.mxu0 0.0
    %154 = vmatprep.subr.mxu0 0.0
    %155 = vmatpush1.xpose.msra.mxu0 0.0
    %156 = vmatprep.subr.mxu0 0.0
    %157 = vmatpush1.xpose.msra.mxu0 0.0
    %158 = vmatprep.subr.mxu0 0.0
    %159 = vmatpush1.xpose.msra.mxu0 0.0
    %160 = vmatprep.subr.mxu0 0.0
    %161 = vmatpush1.xpose.msra.mxu0 0.0
    %162 = vmatprep.subr.mxu0 0.0
    %163 = vmatpush1.xpose.msra.mxu0 0.0
    %164 = vmatprep.subr.mxu0 0.0
    %165 = vmatpush1.xpose.msra.mxu0 0.0
    %166 = vmatprep.subr.mxu0 0.0
    %167 = vmatpush1.xpose.msra.mxu0 %v136
    %168 = vmatprep.subr.mxu0 0.0
    %169 = vmatpush1.xpose.msra.mxu0 %v134
    %170 = vmatprep.subr.mxu0 0.0
    %171 = vmatpush2.xpose.msra.mxu0 0.0
    %172 = vmatprep.subr.mxu0 0.0
    %173 = vmatpush2.xpose.msra.mxu0 0.0
    %174 = vmatprep.subr.mxu0 0.0
    %175 = vmatpush2.xpose.msra.mxu0 0.0
    %176 = vmatprep.subr.mxu0 0.0
    %177 = vmatpush2.xpose.msra.mxu0 0.0
    %178 = vmatprep.subr.mxu0 0.0
    %179 = vmatpush2.xpose.msra.mxu0 0.0
    %180 = vmatprep.subr.mxu0 0.0
    %181 = vmatpush2.xpose.msra.mxu0 0.0
    %182 = vmatprep.subr.mxu0 0.0
    %183 = vmatpush2.xpose.msra.mxu0 0.0
    %184 = vmatprep.subr.mxu0 0.0
    %185 = vmatpush2.xpose.msra.mxu0 0.0
    %186 = vmatprep.subr.mxu0 0.0
    %187 = vmatpush2.xpose.msra.mxu0 0.0
    %188 = vmatprep.subr.mxu0 0.0
    %189 = vmatpush2.xpose.msra.mxu0 0.0
    %190 = vmatprep.subr.mxu0 0.0
    %191 = vmatpush2.xpose.msra.mxu0 0.0
    %192 = vmatprep.subr.mxu0 0.0
    %193 = vmatpush2.xpose.msra.mxu0 0.0
    %194 = vmatprep.subr.mxu0 0.0
    %195 = vmatpush2.xpose.msra.mxu0 0.0
    %196 = vmatprep.subr.mxu0 0.0
    %197 = vmatpush2.xpose.msra.mxu0 0.0
    %198 = vmatprep.subr.mxu0 0.0
    %199 = vmatpush2.xpose.msra.mxu0 0.0
    %200 = vmatprep.subr.mxu0 0.0
    %201 = vmatpush2.xpose.msra.mxu0 0.0
    %202 = vmatprep.mubr.f32.mxu0 0.0
    %203 = vmatmul.mubr.f32.gmra.mxu0 %v130
    %v204 = vpop.f32.mrf.mxu0
    %v205 = vadd.f32 %v26, %v204
    %v206 = vpop.f32.mrf.mxu0
    %207 = vmatprep.mubr.f32.mxu0 0.0
    %208 = vmatmul.mubr.f32.gmra.mxu0 %v132
    %v209 = vpop.f32.mrf.mxu0
    %v210 = vadd.f32 %v27, %v209
    %v211 = vpop.f32.mrf.mxu0
    %212 = vdwg.mxu0
    %vm213 = vcmask 130048
    %v214 = vsel %vm213, %v205, -inf
    %215 = vmax.xlane.f32.xlu0 %v214
    %v216 = vpop.xlane.xlu0 %215
    %v217 = vsel %vm213, %v210, -inf
    %218 = vmax.xlane.f32.xlu0 %v217
    %v219 = vpop.xlane.xlu0 %218
    %v220 = vsub.f32 %v205, %v216
    %v221 = vsub.f32 %v210, %v219
    %v222 = vmul.f32 %v220, 1.442695
    %v223 = vpow.pop %v222
    %v224 = vmul.f32 %v221, 1.442695
    %v225 = vpow.pop %v224
    %v226 = vsel %vm213, %v223, 0.0
    %227 = vadd.xlane.f32.xlu0 %v226
    %v228 = vpop.xlane.xlu0 %227
    %v229 = vsel %vm213, %v225, 0.0
    %230 = vadd.xlane.f32.xlu0 %v229
    %v231 = vpop.xlane.xlu0 %230
    %v232 = vrcp.pop %v228
    %v233 = vrcp.pop %v231
    %v234 = vmul.f32 %v223, %v232
    %v235 = vmul.f32 %v225, %v233
    %236 = vrot.lane.b32.xlu0 %v115, 64
    %v237 = vpop.permute.xlu0 %236
    %238 = vrot.lane.b32.xlu0 %v120, 64
    %v239 = vpop.permute.xlu0 %238
    %v243 = vsel %vm213, %v234, 0
    %v246 = vsel %vm213, %v235, 0
    %248 = vmatprep.subr.mxu0 0.0
    %249 = vmatpush1.msra.mxu0 0.0
    %250 = vmatprep.subr.mxu0 0.0
    %251 = vmatpush1.msra.mxu0 0.0
    %252 = vmatprep.subr.mxu0 0.0
    %253 = vmatpush1.msra.mxu0 0.0
    %254 = vmatprep.subr.mxu0 0.0
    %255 = vmatpush1.msra.mxu0 0.0
    %256 = vmatprep.subr.mxu0 0.0
    %257 = vmatpush1.msra.mxu0 0.0
    %258 = vmatprep.subr.mxu0 0.0
    %259 = vmatpush1.msra.mxu0 0.0
    %260 = vmatprep.subr.mxu0 0.0
    %261 = vmatpush1.msra.mxu0 0.0
    %262 = vmatprep.subr.mxu0 0.0
    %263 = vmatpush1.msra.mxu0 0.0
    %264 = vmatprep.subr.mxu0 0.0
    %265 = vmatpush1.msra.mxu0 0.0
    %266 = vmatprep.subr.mxu0 0.0
    %267 = vmatpush1.msra.mxu0 0.0
    %268 = vmatprep.subr.mxu0 0.0
    %269 = vmatpush1.msra.mxu0 0.0
    %270 = vmatprep.subr.mxu0 0.0
    %271 = vmatpush1.msra.mxu0 0.0
    %272 = vmatprep.subr.mxu0 0.0
    %273 = vmatpush1.msra.mxu0 0.0
    %274 = vmatprep.subr.mxu0 0.0
    %275 = vmatpush1.msra.mxu0 0.0
    %276 = vmatprep.subr.mxu0 0.0
    %277 = vmatpush1.msra.mxu0 %v239
    %278 = vmatprep.subr.mxu0 0.0
    %279 = vmatpush1.msra.mxu0 %v237
    %280 = vmatprep.subr.mxu0 0.0
    %281 = vmatpush2.msra.mxu0 0.0
    %282 = vmatprep.subr.mxu0 0.0
    %283 = vmatpush2.msra.mxu0 0.0
    %284 = vmatprep.subr.mxu0 0.0
    %285 = vmatpush2.msra.mxu0 0.0
    %286 = vmatprep.subr.mxu0 0.0
    %287 = vmatpush2.msra.mxu0 0.0
    %288 = vmatprep.subr.mxu0 0.0
    %289 = vmatpush2.msra.mxu0 0.0
    %290 = vmatprep.subr.mxu0 0.0
    %291 = vmatpush2.msra.mxu0 0.0
    %292 = vmatprep.subr.mxu0 0.0
    %293 = vmatpush2.msra.mxu0 0.0
    %294 = vmatprep.subr.mxu0 0.0
    %295 = vmatpush2.msra.mxu0 0.0
    %296 = vmatprep.subr.mxu0 0.0
    %297 = vmatpush2.msra.mxu0 0.0
    %298 = vmatprep.subr.mxu0 0.0
    %299 = vmatpush2.msra.mxu0 0.0
    %300 = vmatprep.subr.mxu0 0.0
    %301 = vmatpush2.msra.mxu0 0.0
    %302 = vmatprep.subr.mxu0 0.0
    %303 = vmatpush2.msra.mxu0 0.0
    %304 = vmatprep.subr.mxu0 0.0
    %305 = vmatpush2.msra.mxu0 0.0
    %306 = vmatprep.subr.mxu0 0.0
    %307 = vmatpush2.msra.mxu0 0.0
    %308 = vmatprep.subr.mxu0 0.0
    %309 = vmatpush2.msra.mxu0 0.0
    %310 = vmatprep.subr.mxu0 0.0
    %311 = vmatpush2.msra.mxu0 0.0
    %312 = vmatprep.mubr.f32.mxu0 0.0
    %313 = vmatmul.mubr.f32.gmra.mxu0 %v243
    %v314 = vpop.f32.mrf.mxu0
    %v315 = vadd.f32 0.0, %v314
    %v316 = vpop.f32.mrf.mxu0
    %317 = vmatprep.mubr.f32.mxu0 0.0
    %318 = vmatmul.mubr.f32.gmra.mxu0 %v246
    %v319 = vpop.f32.mrf.mxu0
    %v320 = vadd.f32 0.0, %v319
    %v321 = vpop.f32.mrf.mxu0
    %322 = vdwg.mxu0
    %323 = vrot.lane.b32.xlu0 %v115, 120
    %v324 = vpop.permute.xlu0 %323
    %325 = vrot.lane.b32.xlu0 %v120, 120
    %v326 = vpop.permute.xlu0 %325
    %327 = vrot.lane.b32.xlu0 %v115, 88
    %v328 = vpop.permute.xlu0 %327
    %329 = vrot.lane.b32.xlu0 %v120, 88
    %v330 = vpop.permute.xlu0 %329
    %v331 = vsel %vm129, %v324, 0
    %v333 = vsel %vm129, %v326, 0
    %v335 = vsel %vm129, %v328, 0
    %v337 = vsel %vm129, %v330, 0
    %339 = vmatprep.subr.mxu0 0.0
    %340 = vmatpush1.xpose.msra.mxu0 0.0
    %341 = vmatprep.subr.mxu0 0.0
    %342 = vmatpush1.xpose.msra.mxu0 0.0
    %343 = vmatprep.subr.mxu0 0.0
    %344 = vmatpush1.xpose.msra.mxu0 0.0
    %345 = vmatprep.subr.mxu0 0.0
    %346 = vmatpush1.xpose.msra.mxu0 0.0
    %347 = vmatprep.subr.mxu0 0.0
    %348 = vmatpush1.xpose.msra.mxu0 0.0
    %349 = vmatprep.subr.mxu0 0.0
    %350 = vmatpush1.xpose.msra.mxu0 0.0
    %351 = vmatprep.subr.mxu0 0.0
    %352 = vmatpush1.xpose.msra.mxu0 0.0
    %353 = vmatprep.subr.mxu0 0.0
    %354 = vmatpush1.xpose.msra.mxu0 0.0
    %355 = vmatprep.subr.mxu0 0.0
    %356 = vmatpush1.xpose.msra.mxu0 0.0
    %357 = vmatprep.subr.mxu0 0.0
    %358 = vmatpush1.xpose.msra.mxu0 0.0
    %359 = vmatprep.subr.mxu0 0.0
    %360 = vmatpush1.xpose.msra.mxu0 0.0
    %361 = vmatprep.subr.mxu0 0.0
    %362 = vmatpush1.xpose.msra.mxu0 0.0
    %363 = vmatprep.subr.mxu0 0.0
    %364 = vmatpush1.xpose.msra.mxu0 0.0
    %365 = vmatprep.subr.mxu0 0.0
    %366 = vmatpush1.xpose.msra.mxu0 0.0
    %367 = vmatprep.subr.mxu0 0.0
    %368 = vmatpush1.xpose.msra.mxu0 %v337
    %369 = vmatprep.subr.mxu0 0.0
    %370 = vmatpush1.xpose.msra.mxu0 %v335
    %371 = vmatprep.subr.mxu0 0.0
    %372 = vmatpush2.xpose.msra.mxu0 0.0
    %373 = vmatprep.subr.mxu0 0.0
    %374 = vmatpush2.xpose.msra.mxu0 0.0
    %375 = vmatprep.subr.mxu0 0.0
    %376 = vmatpush2.xpose.msra.mxu0 0.0
    %377 = vmatprep.subr.mxu0 0.0
    %378 = vmatpush2.xpose.msra.mxu0 0.0
    %379 = vmatprep.subr.mxu0 0.0
    %380 = vmatpush2.xpose.msra.mxu0 0.0
    %381 = vmatprep.subr.mxu0 0.0
    %382 = vmatpush2.xpose.msra.mxu0 0.0
    %383 = vmatprep.subr.mxu0 0.0
    %384 = vmatpush2.xpose.msra.mxu0 0.0
    %385 = vmatprep.subr.mxu0 0.0
    %386 = vmatpush2.xpose.msra.mxu0 0.0
    %387 = vmatprep.subr.mxu0 0.0
    %388 = vmatpush2.xpose.msra.mxu0 0.0
    %389 = vmatprep.subr.mxu0 0.0
    %390 = vmatpush2.xpose.msra.mxu0 0.0
    %391 = vmatprep.subr.mxu0 0.0
    %392 = vmatpush2.xpose.msra.mxu0 0.0
    %393 = vmatprep.subr.mxu0 0.0
    %394 = vmatpush2.xpose.msra.mxu0 0.0
    %395 = vmatprep.subr.mxu0 0.0
    %396 = vmatpush2.xpose.msra.mxu0 0.0
    %397 = vmatprep.subr.mxu0 0.0
    %398 = vmatpush2.xpose.msra.mxu0 0.0
    %399 = vmatprep.subr.mxu0 0.0
    %400 = vmatpush2.xpose.msra.mxu0 0.0
    %401 = vmatprep.subr.mxu0 0.0
    %402 = vmatpush2.xpose.msra.mxu0 0.0
    %403 = vmatprep.mubr.f32.mxu0 0.0
    %404 = vmatmul.mubr.f32.gmra.mxu0 %v331
    %v405 = vpop.f32.mrf.mxu0
    %v406 = vadd.f32 %v26, %v405
    %v407 = vpop.f32.mrf.mxu0
    %408 = vmatprep.mubr.f32.mxu0 0.0
    %409 = vmatmul.mubr.f32.gmra.mxu0 %v333
    %v410 = vpop.f32.mrf.mxu0
    %v411 = vadd.f32 %v27, %v410
    %v412 = vpop.f32.mrf.mxu0
    %413 = vdwg.mxu0
    %v414 = vsel %vm213, %v406, -inf
    %415 = vmax.xlane.f32.xlu0 %v414
    %v416 = vpop.xlane.xlu0 %415
    %v417 = vsel %vm213, %v411, -inf
    %418 = vmax.xlane.f32.xlu0 %v417
    %v419 = vpop.xlane.xlu0 %418
    %v420 = vsub.f32 %v406, %v416
    %v421 = vsub.f32 %v411, %v419
    %v422 = vmul.f32 %v420, 1.442695
    %v423 = vpow.pop %v422
    %v424 = vmul.f32 %v421, 1.442695
    %v425 = vpow.pop %v424
    %v426 = vsel %vm213, %v423, 0.0
    %427 = vadd.xlane.f32.xlu0 %v426
    %v428 = vpop.xlane.xlu0 %427
    %v429 = vsel %vm213, %v425, 0.0
    %430 = vadd.xlane.f32.xlu0 %v429
    %v431 = vpop.xlane.xlu0 %430
    %v432 = vrcp.pop %v428
    %v433 = vrcp.pop %v431
    %v434 = vmul.f32 %v423, %v432
    %v435 = vmul.f32 %v425, %v433
    %436 = vrot.lane.b32.xlu0 %v115, 56
    %v437 = vpop.permute.xlu0 %436
    %438 = vrot.lane.b32.xlu0 %v120, 56
    %v439 = vpop.permute.xlu0 %438
    %v443 = vsel %vm213, %v434, 0
    %v446 = vsel %vm213, %v435, 0
    %448 = vmatprep.subr.mxu0 0.0
    %449 = vmatpush1.msra.mxu0 0.0
    %450 = vmatprep.subr.mxu0 0.0
    %451 = vmatpush1.msra.mxu0 0.0
    %452 = vmatprep.subr.mxu0 0.0
    %453 = vmatpush1.msra.mxu0 0.0
    %454 = vmatprep.subr.mxu0 0.0
    %455 = vmatpush1.msra.mxu0 0.0
    %456 = vmatprep.subr.mxu0 0.0
    %457 = vmatpush1.msra.mxu0 0.0
    %458 = vmatprep.subr.mxu0 0.0
    %459 = vmatpush1.msra.mxu0 0.0
    %460 = vmatprep.subr.mxu0 0.0
    %461 = vmatpush1.msra.mxu0 0.0
    %462 = vmatprep.subr.mxu0 0.0
    %463 = vmatpush1.msra.mxu0 0.0
    %464 = vmatprep.subr.mxu0 0.0
    %465 = vmatpush1.msra.mxu0 0.0
    %466 = vmatprep.subr.mxu0 0.0
    %467 = vmatpush1.msra.mxu0 0.0
    %468 = vmatprep.subr.mxu0 0.0
    %469 = vmatpush1.msra.mxu0 0.0
    %470 = vmatprep.subr.mxu0 0.0
    %471 = vmatpush1.msra.mxu0 0.0
    %472 = vmatprep.subr.mxu0 0.0
    %473 = vmatpush1.msra.mxu0 0.0
    %474 = vmatprep.subr.mxu0 0.0
    %475 = vmatpush1.msra.mxu0 0.0
    %476 = vmatprep.subr.mxu0 0.0
    %477 = vmatpush1.msra.mxu0 %v439
    %478 = vmatprep.subr.mxu0 0.0
    %479 = vmatpush1.msra.mxu0 %v437
    %480 = vmatprep.subr.mxu0 0.0
    %481 = vmatpush2.msra.mxu0 0.0
    %482 = vmatprep.subr.mxu0 0.0
    %483 = vmatpush2.msra.mxu0 0.0
    %484 = vmatprep.subr.mxu0 0.0
    %485 = vmatpush2.msra.mxu0 0.0
    %486 = vmatprep.subr.mxu0 0.0
    %487 = vmatpush2.msra.mxu0 0.0
    %488 = vmatprep.subr.mxu0 0.0
    %489 = vmatpush2.msra.mxu0 0.0
    %490 = vmatprep.subr.mxu0 0.0
    %491 = vmatpush2.msra.mxu0 0.0
    %492 = vmatprep.subr.mxu0 0.0
    %493 = vmatpush2.msra.mxu0 0.0
    %494 = vmatprep.subr.mxu0 0.0
    %495 = vmatpush2.msra.mxu0 0.0
    %496 = vmatprep.subr.mxu0 0.0
    %497 = vmatpush2.msra.mxu0 0.0
    %498 = vmatprep.subr.mxu0 0.0
    %499 = vmatpush2.msra.mxu0 0.0
    %500 = vmatprep.subr.mxu0 0.0
    %501 = vmatpush2.msra.mxu0 0.0
    %502 = vmatprep.subr.mxu0 0.0
    %503 = vmatpush2.msra.mxu0 0.0
    %504 = vmatprep.subr.mxu0 0.0
    %505 = vmatpush2.msra.mxu0 0.0
    %506 = vmatprep.subr.mxu0 0.0
    %507 = vmatpush2.msra.mxu0 0.0
    %508 = vmatprep.subr.mxu0 0.0
    %509 = vmatpush2.msra.mxu0 0.0
    %510 = vmatprep.subr.mxu0 0.0
    %511 = vmatpush2.msra.mxu0 0.0
    %512 = vmatprep.mubr.f32.mxu0 0.0
    %513 = vmatmul.mubr.f32.gmra.mxu0 %v443
    %v514 = vpop.f32.mrf.mxu0
    %v515 = vadd.f32 0.0, %v514
    %v516 = vpop.f32.mrf.mxu0
    %517 = vmatprep.mubr.f32.mxu0 0.0
    %518 = vmatmul.mubr.f32.gmra.mxu0 %v446
    %v519 = vpop.f32.mrf.mxu0
    %v520 = vadd.f32 0.0, %v519
    %v521 = vpop.f32.mrf.mxu0
    %522 = vdwg.mxu0
    %523 = vrot.lane.b32.xlu0 %v115, 112
    %v524 = vpop.permute.xlu0 %523
    %525 = vrot.lane.b32.xlu0 %v120, 112
    %v526 = vpop.permute.xlu0 %525
    %527 = vrot.lane.b32.xlu0 %v115, 80
    %v528 = vpop.permute.xlu0 %527
    %529 = vrot.lane.b32.xlu0 %v120, 80
    %v530 = vpop.permute.xlu0 %529
    %v531 = vsel %vm129, %v524, 0
    %v533 = vsel %vm129, %v526, 0
    %v535 = vsel %vm129, %v528, 0
    %v537 = vsel %vm129, %v530, 0
    %539 = vmatprep.subr.mxu0 0.0
    %540 = vmatpush1.xpose.msra.mxu0 0.0
    %541 = vmatprep.subr.mxu0 0.0
    %542 = vmatpush1.xpose.msra.mxu0 0.0
    %543 = vmatprep.subr.mxu0 0.0
    %544 = vmatpush1.xpose.msra.mxu0 0.0
    %545 = vmatprep.subr.mxu0 0.0
    %546 = vmatpush1.xpose.msra.mxu0 0.0
    %547 = vmatprep.subr.mxu0 0.0
    %548 = vmatpush1.xpose.msra.mxu0 0.0
    %549 = vmatprep.subr.mxu0 0.0
    %550 = vmatpush1.xpose.msra.mxu0 0.0
    %551 = vmatprep.subr.mxu0 0.0
    %552 = vmatpush1.xpose.msra.mxu0 0.0
    %553 = vmatprep.subr.mxu0 0.0
    %554 = vmatpush1.xpose.msra.mxu0 0.0
    %555 = vmatprep.subr.mxu0 0.0
    %556 = vmatpush1.xpose.msra.mxu0 0.0
    %557 = vmatprep.subr.mxu0 0.0
    %558 = vmatpush1.xpose.msra.mxu0 0.0
    %559 = vmatprep.subr.mxu0 0.0
    %560 = vmatpush1.xpose.msra.mxu0 0.0
    %561 = vmatprep.subr.mxu0 0.0
    %562 = vmatpush1.xpose.msra.mxu0 0.0
    %563 = vmatprep.subr.mxu0 0.0
    %564 = vmatpush1.xpose.msra.mxu0 0.0
    %565 = vmatprep.subr.mxu0 0.0
    %566 = vmatpush1.xpose.msra.mxu0 0.0
    %567 = vmatprep.subr.mxu0 0.0
    %568 = vmatpush1.xpose.msra.mxu0 %v537
    %569 = vmatprep.subr.mxu0 0.0
    %570 = vmatpush1.xpose.msra.mxu0 %v535
    %571 = vmatprep.subr.mxu0 0.0
    %572 = vmatpush2.xpose.msra.mxu0 0.0
    %573 = vmatprep.subr.mxu0 0.0
    %574 = vmatpush2.xpose.msra.mxu0 0.0
    %575 = vmatprep.subr.mxu0 0.0
    %576 = vmatpush2.xpose.msra.mxu0 0.0
    %577 = vmatprep.subr.mxu0 0.0
    %578 = vmatpush2.xpose.msra.mxu0 0.0
    %579 = vmatprep.subr.mxu0 0.0
    %580 = vmatpush2.xpose.msra.mxu0 0.0
    %581 = vmatprep.subr.mxu0 0.0
    %582 = vmatpush2.xpose.msra.mxu0 0.0
    %583 = vmatprep.subr.mxu0 0.0
    %584 = vmatpush2.xpose.msra.mxu0 0.0
    %585 = vmatprep.subr.mxu0 0.0
    %586 = vmatpush2.xpose.msra.mxu0 0.0
    %587 = vmatprep.subr.mxu0 0.0
    %588 = vmatpush2.xpose.msra.mxu0 0.0
    %589 = vmatprep.subr.mxu0 0.0
    %590 = vmatpush2.xpose.msra.mxu0 0.0
    %591 = vmatprep.subr.mxu0 0.0
    %592 = vmatpush2.xpose.msra.mxu0 0.0
    %593 = vmatprep.subr.mxu0 0.0
    %594 = vmatpush2.xpose.msra.mxu0 0.0
    %595 = vmatprep.subr.mxu0 0.0
    %596 = vmatpush2.xpose.msra.mxu0 0.0
    %597 = vmatprep.subr.mxu0 0.0
    %598 = vmatpush2.xpose.msra.mxu0 0.0
    %599 = vmatprep.subr.mxu0 0.0
    %600 = vmatpush2.xpose.msra.mxu0 0.0
    %601 = vmatprep.subr.mxu0 0.0
    %602 = vmatpush2.xpose.msra.mxu0 0.0
    %603 = vmatprep.mubr.f32.mxu0 0.0
    %604 = vmatmul.mubr.f32.gmra.mxu0 %v531
    %v605 = vpop.f32.mrf.mxu0
    %v606 = vadd.f32 %v26, %v605
    %v607 = vpop.f32.mrf.mxu0
    %608 = vmatprep.mubr.f32.mxu0 0.0
    %609 = vmatmul.mubr.f32.gmra.mxu0 %v533
    %v610 = vpop.f32.mrf.mxu0
    %v611 = vadd.f32 %v27, %v610
    %v612 = vpop.f32.mrf.mxu0
    %613 = vdwg.mxu0
    %v614 = vsel %vm213, %v606, -inf
    %615 = vmax.xlane.f32.xlu0 %v614
    %v616 = vpop.xlane.xlu0 %615
    %v617 = vsel %vm213, %v611, -inf
    %618 = vmax.xlane.f32.xlu0 %v617
    %v619 = vpop.xlane.xlu0 %618
    %v620 = vsub.f32 %v606, %v616
    %v621 = vsub.f32 %v611, %v619
    %v622 = vmul.f32 %v620, 1.442695
    %v623 = vpow.pop %v622
    %v624 = vmul.f32 %v621, 1.442695
    %v625 = vpow.pop %v624
    %v626 = vsel %vm213, %v623, 0.0
    %627 = vadd.xlane.f32.xlu0 %v626
    %v628 = vpop.xlane.xlu0 %627
    %v629 = vsel %vm213, %v625, 0.0
    %630 = vadd.xlane.f32.xlu0 %v629
    %v631 = vpop.xlane.xlu0 %630
    %v632 = vrcp.pop %v628
    %v633 = vrcp.pop %v631
    %v634 = vmul.f32 %v623, %v632
    %v635 = vmul.f32 %v625, %v633
    %636 = vrot.lane.b32.xlu0 %v115, 48
    %v637 = vpop.permute.xlu0 %636
    %638 = vrot.lane.b32.xlu0 %v120, 48
    %v639 = vpop.permute.xlu0 %638
    %v643 = vsel %vm213, %v634, 0
    %v646 = vsel %vm213, %v635, 0
    %648 = vmatprep.subr.mxu0 0.0
    %649 = vmatpush1.msra.mxu0 0.0
    %650 = vmatprep.subr.mxu0 0.0
    %651 = vmatpush1.msra.mxu0 0.0
    %652 = vmatprep.subr.mxu0 0.0
    %653 = vmatpush1.msra.mxu0 0.0
    %654 = vmatprep.subr.mxu0 0.0
    %655 = vmatpush1.msra.mxu0 0.0
    %656 = vmatprep.subr.mxu0 0.0
    %657 = vmatpush1.msra.mxu0 0.0
    %658 = vmatprep.subr.mxu0 0.0
    %659 = vmatpush1.msra.mxu0 0.0
    %660 = vmatprep.subr.mxu0 0.0
    %661 = vmatpush1.msra.mxu0 0.0
    %662 = vmatprep.subr.mxu0 0.0
    %663 = vmatpush1.msra.mxu0 0.0
    %664 = vmatprep.subr.mxu0 0.0
    %665 = vmatpush1.msra.mxu0 0.0
    %666 = vmatprep.subr.mxu0 0.0
    %667 = vmatpush1.msra.mxu0 0.0
    %668 = vmatprep.subr.mxu0 0.0
    %669 = vmatpush1.msra.mxu0 0.0
    %670 = vmatprep.subr.mxu0 0.0
    %671 = vmatpush1.msra.mxu0 0.0
    %672 = vmatprep.subr.mxu0 0.0
    %673 = vmatpush1.msra.mxu0 0.0
    %674 = vmatprep.subr.mxu0 0.0
    %675 = vmatpush1.msra.mxu0 0.0
    %676 = vmatprep.subr.mxu0 0.0
    %677 = vmatpush1.msra.mxu0 %v639
    %678 = vmatprep.subr.mxu0 0.0
    %679 = vmatpush1.msra.mxu0 %v637
    %680 = vmatprep.subr.mxu0 0.0
    %681 = vmatpush2.msra.mxu0 0.0
    %682 = vmatprep.subr.mxu0 0.0
    %683 = vmatpush2.msra.mxu0 0.0
    %684 = vmatprep.subr.mxu0 0.0
    %685 = vmatpush2.msra.mxu0 0.0
    %686 = vmatprep.subr.mxu0 0.0
    %687 = vmatpush2.msra.mxu0 0.0
    %688 = vmatprep.subr.mxu0 0.0
    %689 = vmatpush2.msra.mxu0 0.0
    %690 = vmatprep.subr.mxu0 0.0
    %691 = vmatpush2.msra.mxu0 0.0
    %692 = vmatprep.subr.mxu0 0.0
    %693 = vmatpush2.msra.mxu0 0.0
    %694 = vmatprep.subr.mxu0 0.0
    %695 = vmatpush2.msra.mxu0 0.0
    %696 = vmatprep.subr.mxu0 0.0
    %697 = vmatpush2.msra.mxu0 0.0
    %698 = vmatprep.subr.mxu0 0.0
    %699 = vmatpush2.msra.mxu0 0.0
    %700 = vmatprep.subr.mxu0 0.0
    %701 = vmatpush2.msra.mxu0 0.0
    %702 = vmatprep.subr.mxu0 0.0
    %703 = vmatpush2.msra.mxu0 0.0
    %704 = vmatprep.subr.mxu0 0.0
    %705 = vmatpush2.msra.mxu0 0.0
    %706 = vmatprep.subr.mxu0 0.0
    %707 = vmatpush2.msra.mxu0 0.0
    %708 = vmatprep.subr.mxu0 0.0
    %709 = vmatpush2.msra.mxu0 0.0
    %710 = vmatprep.subr.mxu0 0.0
    %711 = vmatpush2.msra.mxu0 0.0
    %712 = vmatprep.mubr.f32.mxu0 0.0
    %713 = vmatmul.mubr.f32.gmra.mxu0 %v643
    %v714 = vpop.f32.mrf.mxu0
    %v715 = vadd.f32 0.0, %v714
    %v716 = vpop.f32.mrf.mxu0
    %717 = vmatprep.mubr.f32.mxu0 0.0
    %718 = vmatmul.mubr.f32.gmra.mxu0 %v646
    %v719 = vpop.f32.mrf.mxu0
    %v720 = vadd.f32 0.0, %v719
    %v721 = vpop.f32.mrf.mxu0
    %722 = vdwg.mxu0
    %723 = vrot.lane.b32.xlu0 %v115, 104
    %v724 = vpop.permute.xlu0 %723
    %725 = vrot.lane.b32.xlu0 %v120, 104
    %v726 = vpop.permute.xlu0 %725
    %727 = vrot.lane.b32.xlu0 %v115, 72
    %v728 = vpop.permute.xlu0 %727
    %729 = vrot.lane.b32.xlu0 %v120, 72
    %v730 = vpop.permute.xlu0 %729
    %v731 = vsel %vm129, %v724, 0
    %v733 = vsel %vm129, %v726, 0
    %v735 = vsel %vm129, %v728, 0
    %v737 = vsel %vm129, %v730, 0
    %739 = vmatprep.subr.mxu0 0.0
    %740 = vmatpush1.xpose.msra.mxu0 0.0
    %741 = vmatprep.subr.mxu0 0.0
    %742 = vmatpush1.xpose.msra.mxu0 0.0
    %743 = vmatprep.subr.mxu0 0.0
    %744 = vmatpush1.xpose.msra.mxu0 0.0
    %745 = vmatprep.subr.mxu0 0.0
    %746 = vmatpush1.xpose.msra.mxu0 0.0
    %747 = vmatprep.subr.mxu0 0.0
    %748 = vmatpush1.xpose.msra.mxu0 0.0
    %749 = vmatprep.subr.mxu0 0.0
    %750 = vmatpush1.xpose.msra.mxu0 0.0
    %751 = vmatprep.subr.mxu0 0.0
    %752 = vmatpush1.xpose.msra.mxu0 0.0
    %753 = vmatprep.subr.mxu0 0.0
    %754 = vmatpush1.xpose.msra.mxu0 0.0
    %755 = vmatprep.subr.mxu0 0.0
    %756 = vmatpush1.xpose.msra.mxu0 0.0
    %757 = vmatprep.subr.mxu0 0.0
    %758 = vmatpush1.xpose.msra.mxu0 0.0
    %759 = vmatprep.subr.mxu0 0.0
    %760 = vmatpush1.xpose.msra.mxu0 0.0
    %761 = vmatprep.subr.mxu0 0.0
    %762 = vmatpush1.xpose.msra.mxu0 0.0
    %763 = vmatprep.subr.mxu0 0.0
    %764 = vmatpush1.xpose.msra.mxu0 0.0
    %765 = vmatprep.subr.mxu0 0.0
    %766 = vmatpush1.xpose.msra.mxu0 0.0
    %767 = vmatprep.subr.mxu0 0.0
    %768 = vmatpush1.xpose.msra.mxu0 %v737
    %769 = vmatprep.subr.mxu0 0.0
    %770 = vmatpush1.xpose.msra.mxu0 %v735
    %771 = vmatprep.subr.mxu0 0.0
    %772 = vmatpush2.xpose.msra.mxu0 0.0
    %773 = vmatprep.subr.mxu0 0.0
    %774 = vmatpush2.xpose.msra.mxu0 0.0
    %775 = vmatprep.subr.mxu0 0.0
    %776 = vmatpush2.xpose.msra.mxu0 0.0
    %777 = vmatprep.subr.mxu0 0.0
    %778 = vmatpush2.xpose.msra.mxu0 0.0
    %779 = vmatprep.subr.mxu0 0.0
    %780 = vmatpush2.xpose.msra.mxu0 0.0
    %781 = vmatprep.subr.mxu0 0.0
    %782 = vmatpush2.xpose.msra.mxu0 0.0
    %783 = vmatprep.subr.mxu0 0.0
    %784 = vmatpush2.xpose.msra.mxu0 0.0
    %785 = vmatprep.subr.mxu0 0.0
    %786 = vmatpush2.xpose.msra.mxu0 0.0
    %787 = vmatprep.subr.mxu0 0.0
    %788 = vmatpush2.xpose.msra.mxu0 0.0
    %789 = vmatprep.subr.mxu0 0.0
    %790 = vmatpush2.xpose.msra.mxu0 0.0
    %791 = vmatprep.subr.mxu0 0.0
    %792 = vmatpush2.xpose.msra.mxu0 0.0
    %793 = vmatprep.subr.mxu0 0.0
    %794 = vmatpush2.xpose.msra.mxu0 0.0
    %795 = vmatprep.subr.mxu0 0.0
    %796 = vmatpush2.xpose.msra.mxu0 0.0
    %797 = vmatprep.subr.mxu0 0.0
    %798 = vmatpush2.xpose.msra.mxu0 0.0
    %799 = vmatprep.subr.mxu0 0.0
    %800 = vmatpush2.xpose.msra.mxu0 0.0
    %801 = vmatprep.subr.mxu0 0.0
    %802 = vmatpush2.xpose.msra.mxu0 0.0
    %803 = vmatprep.mubr.f32.mxu0 0.0
    %804 = vmatmul.mubr.f32.gmra.mxu0 %v731
    %v805 = vpop.f32.mrf.mxu0
    %v806 = vadd.f32 %v26, %v805
    %v807 = vpop.f32.mrf.mxu0
    %808 = vmatprep.mubr.f32.mxu0 0.0
    %809 = vmatmul.mubr.f32.gmra.mxu0 %v733
    %v810 = vpop.f32.mrf.mxu0
    %v811 = vadd.f32 %v27, %v810
    %v812 = vpop.f32.mrf.mxu0
    %813 = vdwg.mxu0
    %v814 = vsel %vm213, %v806, -inf
    %815 = vmax.xlane.f32.xlu0 %v814
    %v816 = vpop.xlane.xlu0 %815
    %v817 = vsel %vm213, %v811, -inf
    %818 = vmax.xlane.f32.xlu0 %v817
    %v819 = vpop.xlane.xlu0 %818
    %v820 = vsub.f32 %v806, %v816
    %v821 = vsub.f32 %v811, %v819
    %v822 = vmul.f32 %v820, 1.442695
    %v823 = vpow.pop %v822
    %v824 = vmul.f32 %v821, 1.442695
    %v825 = vpow.pop %v824
    %v826 = vsel %vm213, %v823, 0.0
    %827 = vadd.xlane.f32.xlu0 %v826
    %v828 = vpop.xlane.xlu0 %827
    %v829 = vsel %vm213, %v825, 0.0
    %830 = vadd.xlane.f32.xlu0 %v829
    %v831 = vpop.xlane.xlu0 %830
    %v832 = vrcp.pop %v828
    %v833 = vrcp.pop %v831
    %v834 = vmul.f32 %v823, %v832
    %v835 = vmul.f32 %v825, %v833
    %836 = vrot.lane.b32.xlu0 %v115, 40
    %v837 = vpop.permute.xlu0 %836
    %838 = vrot.lane.b32.xlu0 %v120, 40
    %v839 = vpop.permute.xlu0 %838
    %v843 = vsel %vm213, %v834, 0
    %v846 = vsel %vm213, %v835, 0
    %848 = vmatprep.subr.mxu0 0.0
    %849 = vmatpush1.msra.mxu0 0.0
    %850 = vmatprep.subr.mxu0 0.0
    %851 = vmatpush1.msra.mxu0 0.0
    %852 = vmatprep.subr.mxu0 0.0
    %853 = vmatpush1.msra.mxu0 0.0
    %854 = vmatprep.subr.mxu0 0.0
    %855 = vmatpush1.msra.mxu0 0.0
    %856 = vmatprep.subr.mxu0 0.0
    %857 = vmatpush1.msra.mxu0 0.0
    %858 = vmatprep.subr.mxu0 0.0
    %859 = vmatpush1.msra.mxu0 0.0
    %860 = vmatprep.subr.mxu0 0.0
    %861 = vmatpush1.msra.mxu0 0.0
    %862 = vmatprep.subr.mxu0 0.0
    %863 = vmatpush1.msra.mxu0 0.0
    %864 = vmatprep.subr.mxu0 0.0
    %865 = vmatpush1.msra.mxu0 0.0
    %866 = vmatprep.subr.mxu0 0.0
    %867 = vmatpush1.msra.mxu0 0.0
    %868 = vmatprep.subr.mxu0 0.0
    %869 = vmatpush1.msra.mxu0 0.0
    %870 = vmatprep.subr.mxu0 0.0
    %871 = vmatpush1.msra.mxu0 0.0
    %872 = vmatprep.subr.mxu0 0.0
    %873 = vmatpush1.msra.mxu0 0.0
    %874 = vmatprep.subr.mxu0 0.0
    %875 = vmatpush1.msra.mxu0 0.0
    %876 = vmatprep.subr.mxu0 0.0
    %877 = vmatpush1.msra.mxu0 %v839
    %878 = vmatprep.subr.mxu0 0.0
    %879 = vmatpush1.msra.mxu0 %v837
    %880 = vmatprep.subr.mxu0 0.0
    %881 = vmatpush2.msra.mxu0 0.0
    %882 = vmatprep.subr.mxu0 0.0
    %883 = vmatpush2.msra.mxu0 0.0
    %884 = vmatprep.subr.mxu0 0.0
    %885 = vmatpush2.msra.mxu0 0.0
    %886 = vmatprep.subr.mxu0 0.0
    %887 = vmatpush2.msra.mxu0 0.0
    %888 = vmatprep.subr.mxu0 0.0
    %889 = vmatpush2.msra.mxu0 0.0
    %890 = vmatprep.subr.mxu0 0.0
    %891 = vmatpush2.msra.mxu0 0.0
    %892 = vmatprep.subr.mxu0 0.0
    %893 = vmatpush2.msra.mxu0 0.0
    %894 = vmatprep.subr.mxu0 0.0
    %895 = vmatpush2.msra.mxu0 0.0
    %896 = vmatprep.subr.mxu0 0.0
    %897 = vmatpush2.msra.mxu0 0.0
    %898 = vmatprep.subr.mxu0 0.0
    %899 = vmatpush2.msra.mxu0 0.0
    %900 = vmatprep.subr.mxu0 0.0
    %901 = vmatpush2.msra.mxu0 0.0
    %902 = vmatprep.subr.mxu0 0.0
    %903 = vmatpush2.msra.mxu0 0.0
    %904 = vmatprep.subr.mxu0 0.0
    %905 = vmatpush2.msra.mxu0 0.0
    %906 = vmatprep.subr.mxu0 0.0
    %907 = vmatpush2.msra.mxu0 0.0
    %908 = vmatprep.subr.mxu0 0.0
    %909 = vmatpush2.msra.mxu0 0.0
    %910 = vmatprep.subr.mxu0 0.0
    %911 = vmatpush2.msra.mxu0 0.0
    %912 = vmatprep.mubr.f32.mxu0 0.0
    %913 = vmatmul.mubr.f32.gmra.mxu0 %v843
    %v914 = vpop.f32.mrf.mxu0
    %v915 = vadd.f32 0.0, %v914
    %v916 = vpop.f32.mrf.mxu0
    %917 = vmatprep.mubr.f32.mxu0 0.0
    %918 = vmatmul.mubr.f32.gmra.mxu0 %v846
    %v919 = vpop.f32.mrf.mxu0
    %v920 = vadd.f32 0.0, %v919
    %v921 = vpop.f32.mrf.mxu0
    %922 = vdwg.mxu0
    %925 = vrot.lane.b32.xlu0 %v515, 8
    %v926 = vpop.permute.xlu0 %925
    %927 = vrot.lane.b32.xlu0 %v520, 8
    %v928 = vpop.permute.xlu0 %927
    %933 = vrot.lane.b32.xlu0 %v715, 16
    %v934 = vpop.permute.xlu0 %933
    %935 = vrot.lane.b32.xlu0 %v720, 16
    %v936 = vpop.permute.xlu0 %935
    %941 = vrot.lane.b32.xlu0 %v915, 24
    %v942 = vpop.permute.xlu0 %941
    %943 = vrot.lane.b32.xlu0 %v920, 24
    %v944 = vpop.permute.xlu0 %943
    %v947 = vsel %vm129, %v315, %v926
    %v948 = vsel %vm129, %v320, %v928
    %v949 = vsel %vm213, %v947, %v934
    %v950 = vsel %vm213, %v948, %v936
    %vm951 = vcmask 195584
    %v952 = vsel %vm951, %v949, %v942
    %v953 = vsel %vm951, %v950, %v944
    %v954 = vlaneseq
    %v955 = vshrl.u32 %v954, 7
    %v956 = vsub.s32 1, %v955
    %v957 = vrot.slane %v36, %v956
    %962 = vrot.lane.b32.xlu0 %v28, 32
    %v963 = vpop.permute.xlu0 %962
    %964 = vrot.lane.b32.xlu0 %v29, 32
    %v965 = vpop.permute.xlu0 %964
    %966 = vrot.lane.b32.xlu0 %v30, 32
    %v967 = vpop.permute.xlu0 %966
    %968 = vrot.lane.b32.xlu0 %v31, 32
    %v969 = vpop.permute.xlu0 %968
    %v975 = vsel %vm41, %v952, 0
    %v978 = vsel %vm41, %v953, 0
    %980 = vmatprep.subr.mxu0 0.0
    %981 = vmatpush1.msra.mxu0 0.0
    %982 = vmatprep.subr.mxu0 0.0
    %983 = vmatpush1.msra.mxu0 0.0
    %984 = vmatprep.subr.mxu0 0.0
    %985 = vmatpush1.msra.mxu0 0.0
    %986 = vmatprep.subr.mxu0 0.0
    %987 = vmatpush1.msra.mxu0 0.0
    %988 = vmatprep.subr.mxu0 0.0
    %989 = vmatpush1.msra.mxu0 0.0
    %990 = vmatprep.subr.mxu0 0.0
    %991 = vmatpush1.msra.mxu0 0.0
    %992 = vmatprep.subr.mxu0 0.0
    %993 = vmatpush1.msra.mxu0 0.0
    %994 = vmatprep.subr.mxu0 0.0
    %995 = vmatpush1.msra.mxu0 0.0
    %996 = vmatprep.subr.mxu0 0.0
    %997 = vmatpush1.msra.mxu0 0.0
    %998 = vmatprep.subr.mxu0 0.0
    %999 = vmatpush1.msra.mxu0 0.0
    %1000 = vmatprep.subr.mxu0 0.0
    %1001 = vmatpush1.msra.mxu0 0.0
    %1002 = vmatprep.subr.mxu0 0.0
    %1003 = vmatpush1.msra.mxu0 0.0
    %1004 = vmatprep.subr.mxu0 0.0
    %1005 = vmatpush1.msra.mxu0 %v969
    %1006 = vmatprep.subr.mxu0 0.0
    %1007 = vmatpush1.msra.mxu0 %v967
    %1008 = vmatprep.subr.mxu0 0.0
    %1009 = vmatpush1.msra.mxu0 %v965
    %1010 = vmatprep.subr.mxu0 0.0
    %1011 = vmatpush1.msra.mxu0 %v963
    %1012 = vmatprep.subr.mxu0 0.0
    %1013 = vmatpush2.msra.mxu0 0.0
    %1014 = vmatprep.subr.mxu0 0.0
    %1015 = vmatpush2.msra.mxu0 0.0
    %1016 = vmatprep.subr.mxu0 0.0
    %1017 = vmatpush2.msra.mxu0 0.0
    %1018 = vmatprep.subr.mxu0 0.0
    %1019 = vmatpush2.msra.mxu0 0.0
    %1020 = vmatprep.subr.mxu0 0.0
    %1021 = vmatpush2.msra.mxu0 0.0
    %1022 = vmatprep.subr.mxu0 0.0
    %1023 = vmatpush2.msra.mxu0 0.0
    %1024 = vmatprep.subr.mxu0 0.0
    %1025 = vmatpush2.msra.mxu0 0.0
    %1026 = vmatprep.subr.mxu0 0.0
    %1027 = vmatpush2.msra.mxu0 0.0
    %1028 = vmatprep.subr.mxu0 0.0
    %1029 = vmatpush2.msra.mxu0 0.0
    %1030 = vmatprep.subr.mxu0 0.0
    %1031 = vmatpush2.msra.mxu0 0.0
    %1032 = vmatprep.subr.mxu0 0.0
    %1033 = vmatpush2.msra.mxu0 0.0
    %1034 = vmatprep.subr.mxu0 0.0
    %1035 = vmatpush2.msra.mxu0 0.0
    %1036 = vmatprep.subr.mxu0 0.0
    %1037 = vmatpush2.msra.mxu0 0.0
    %1038 = vmatprep.subr.mxu0 0.0
    %1039 = vmatpush2.msra.mxu0 0.0
    %1040 = vmatprep.subr.mxu0 0.0
    %1041 = vmatpush2.msra.mxu0 0.0
    %1042 = vmatprep.subr.mxu0 0.0
    %1043 = vmatpush2.msra.mxu0 0.0
    %1044 = vmatprep.mubr.f32.mxu0 0.0
    %1045 = vmatmul.mubr.f32.gmra.mxu0 %v975
    %v1046 = vpop.f32.mrf.mxu0
    %v1047 = vadd.f32 %v957, %v1046
    %v1048 = vpop.f32.mrf.mxu0
    %1049 = vmatprep.mubr.f32.mxu0 0.0
    %1050 = vmatmul.mubr.f32.gmra.mxu0 %v978
    %v1051 = vpop.f32.mrf.mxu0
    %v1052 = vadd.f32 %v957, %v1051
    %v1053 = vpop.f32.mrf.mxu0
    %1054 = vdwg.mxu0
    %v1055 = vadd.f32 %v24, %v1047
    %v1056 = vadd.f32 %v25, %v1052
    %v1057 = vsel %vm41, %v1055, 0.0
    %1058 = vadd.xlane.f32.xlu0 %v1057
    %v1059 = vpop.xlane.xlu0 %1058
    %v1060 = vsel %vm41, %v1056, 0.0
    %1061 = vadd.xlane.f32.xlu0 %v1060
    %v1062 = vpop.xlane.xlu0 %1061
    %v1063 = vrcp.pop 32.0
    %v1064 = vmul.f32 %v1059, %v1063
    %v1065 = vmul.f32 %v1062, %v1063
    %v1066 = vsub.f32 %v1055, %v1064
    %v1067 = vsub.f32 %v1056, %v1065
    %v1068 = vmul.f32 %v1066, %v1066
    %v1069 = vmul.f32 %v1067, %v1067
    %v1070 = vsel %vm41, %v1068, 0.0
    %1071 = vadd.xlane.f32.xlu0 %v1070
    %v1072 = vpop.xlane.xlu0 %1071
    %v1073 = vsel %vm41, %v1069, 0.0
    %1074 = vadd.xlane.f32.xlu0 %v1073
    %v1075 = vpop.xlane.xlu0 %1074
    %v1076 = vmul.f32 %v1072, %v1063
    %v1077 = vmul.f32 %v1075, %v1063
    %v1078 = vadd.f32 %v1076, 1e-12
    %v1079 = vadd.f32 %v1077, 1e-12
    %v1080 = vrsqrt.pop %v1078
    %v1081 = vrsqrt.pop %v1079
    %v1082 = vmul.f32 %v1066, %v1080
    %v1083 = vmul.f32 %v1067, %v1081
    %v1084 = vlaneseq
    %v1085 = vshrl.u32 %v1084, 7
    %v1086 = vsub.s32 2, %v1085
    %v1087 = vrot.slane %v36, %v1086
    %v1088 = vmul.f32 %v1082, %v1087
    %v1089 = vmul.f32 %v1083, %v1087
    %v1090 = vlaneseq
    %v1091 = vshrl.u32 %v1090, 7
    %v1092 = vsub.s32 3, %v1091
    %v1093 = vrot.slane %v36, %v1092
    %v1094 = vadd.f32 %v1088, %v1093
    %v1095 = vadd.f32 %v1089, %v1093
    %v1096 = vlaneseq
    %v1097 = vshrl.u32 %v1096, 7
    %v1098 = vsub.s32 4, %v1097
    %v1099 = vrot.slane %v36, %v1098
    %v1101 = vsel %vm41, %v1094, 0
    %v1104 = vsel %vm41, %v1095, 0
    %1106 = vmatprep.subr.mxu0 0.0
    %1107 = vmatpush1.msra.mxu0 0.0
    %1108 = vmatprep.subr.mxu0 0.0
    %1109 = vmatpush1.msra.mxu0 0.0
    %1110 = vmatprep.subr.mxu0 0.0
    %1111 = vmatpush1.msra.mxu0 0.0
    %1112 = vmatprep.subr.mxu0 0.0
    %1113 = vmatpush1.msra.mxu0 0.0
    %1114 = vmatprep.subr.mxu0 0.0
    %1115 = vmatpush1.msra.mxu0 0.0
    %1116 = vmatprep.subr.mxu0 0.0
    %1117 = vmatpush1.msra.mxu0 0.0
    %1118 = vmatprep.subr.mxu0 0.0
    %1119 = vmatpush1.msra.mxu0 0.0
    %1120 = vmatprep.subr.mxu0 0.0
    %1121 = vmatpush1.msra.mxu0 0.0
    %1122 = vmatprep.subr.mxu0 0.0
    %1123 = vmatpush1.msra.mxu0 0.0
    %1124 = vmatprep.subr.mxu0 0.0
    %1125 = vmatpush1.msra.mxu0 0.0
    %1126 = vmatprep.subr.mxu0 0.0
    %1127 = vmatpush1.msra.mxu0 0.0
    %1128 = vmatprep.subr.mxu0 0.0
    %1129 = vmatpush1.msra.mxu0 0.0
    %1130 = vmatprep.subr.mxu0 0.0
    %1131 = vmatpush1.msra.mxu0 %v35
    %1132 = vmatprep.subr.mxu0 0.0
    %1133 = vmatpush1.msra.mxu0 %v34
    %1134 = vmatprep.subr.mxu0 0.0
    %1135 = vmatpush1.msra.mxu0 %v33
    %1136 = vmatprep.subr.mxu0 0.0
    %1137 = vmatpush1.msra.mxu0 %v32
    %1138 = vmatprep.subr.mxu0 0.0
    %1139 = vmatpush2.msra.mxu0 0.0
    %1140 = vmatprep.subr.mxu0 0.0
    %1141 = vmatpush2.msra.mxu0 0.0
    %1142 = vmatprep.subr.mxu0 0.0
    %1143 = vmatpush2.msra.mxu0 0.0
    %1144 = vmatprep.subr.mxu0 0.0
    %1145 = vmatpush2.msra.mxu0 0.0
    %1146 = vmatprep.subr.mxu0 0.0
    %1147 = vmatpush2.msra.mxu0 0.0
    %1148 = vmatprep.subr.mxu0 0.0
    %1149 = vmatpush2.msra.mxu0 0.0
    %1150 = vmatprep.subr.mxu0 0.0
    %1151 = vmatpush2.msra.mxu0 0.0
    %1152 = vmatprep.subr.mxu0 0.0
    %1153 = vmatpush2.msra.mxu0 0.0
    %1154 = vmatprep.subr.mxu0 0.0
    %1155 = vmatpush2.msra.mxu0 0.0
    %1156 = vmatprep.subr.mxu0 0.0
    %1157 = vmatpush2.msra.mxu0 0.0
    %1158 = vmatprep.subr.mxu0 0.0
    %1159 = vmatpush2.msra.mxu0 0.0
    %1160 = vmatprep.subr.mxu0 0.0
    %1161 = vmatpush2.msra.mxu0 0.0
    %1162 = vmatprep.subr.mxu0 0.0
    %1163 = vmatpush2.msra.mxu0 0.0
    %1164 = vmatprep.subr.mxu0 0.0
    %1165 = vmatpush2.msra.mxu0 0.0
    %1166 = vmatprep.subr.mxu0 0.0
    %1167 = vmatpush2.msra.mxu0 0.0
    %1168 = vmatprep.subr.mxu0 0.0
    %1169 = vmatpush2.msra.mxu0 0.0
    %1170 = vmatprep.mubr.f32.mxu0 0.0
    %1171 = vmatmul.mubr.f32.gmra.mxu0 %v1101
    %v1172 = vpop.f32.mrf.mxu0
    %v1173 = vadd.f32 %v1099, %v1172
    %v1174 = vpop.f32.mrf.mxu0
    %1175 = vmatprep.mubr.f32.mxu0 0.0
    %1176 = vmatmul.mubr.f32.gmra.mxu0 %v1104
    %v1177 = vpop.f32.mrf.mxu0
    %v1178 = vadd.f32 %v1099, %v1177
    %v1179 = vpop.f32.mrf.mxu0
    %1180 = vdwg.mxu0
    %v1181 = vmul.f32 %v1173, 0.5
    %v1182 = vmul.f32 %v1178, 0.5
    %v1183 = vmul.f32 %v1173, 0.70710677
    %v1184 = vmul.f32 %v1178, 0.70710677
    %v1185 = verf.f32.pop %v1183
    %v1186 = verf.f32.pop %v1184
    %v1187 = vadd.f32 %v1185, 1.0
    %v1188 = vadd.f32 %v1186, 1.0
    %v1189 = vmul.f32 %v1181, %v1187
    %v1190 = vmul.f32 %v1182, %v1188
    %v1191 = vld [vmem:[%s3] sm:$0xff]
    %v1192 = vld [vmem:[%s3 + $0x8] sm:$0xff]
    %v1193 = vld [vmem:[%s3 + $0x10] sm:$0xff]
    %v1194 = vld [vmem:[%s3 + $0x18] sm:$0xff]
    %v1195 = vld [vmem:[%s3 + $0x20] sm:$0xff]
    %v1196 = vld [vmem:[%s3 + $0x28] sm:$0xff]
    %v1197 = vld [vmem:[%s3 + $0x30] sm:$0xff]
    %v1198 = vld [vmem:[%s3 + $0x38] sm:$0xff]
    %v1199 = vld [vmem:[%s3 + $0x40] sm:$0xff]
    %v1200 = vld [vmem:[%s3 + $0x48] sm:$0xff]
    %v1201 = vld [vmem:[%s3 + $0x50] sm:$0xff]
    %v1202 = vld [vmem:[%s3 + $0x58] sm:$0xff]
    %v1203 = vld [vmem:[%s3 + $0x60] sm:$0xff]
    %v1204 = vld [vmem:[%s3 + $0x68] sm:$0xff]
    %v1205 = vld [vmem:[%s3 + $0x70] sm:$0xff]
    %v1206 = vld [vmem:[%s3 + $0x78] sm:$0xff]
    %v1207 = vlaneseq
    %v1208 = vshrl.u32 %v1207, 7
    %v1209 = vsub.s32 5, %v1208
    %v1210 = vrot.slane %v36, %v1209
    %1211 = vmatprep.subr.mxu0 0.0
    %1212 = vmatpush1.msra.mxu0 %v1206
    %1213 = vmatprep.subr.mxu0 0.0
    %1214 = vmatpush1.msra.mxu0 %v1205
    %1215 = vmatprep.subr.mxu0 0.0
    %1216 = vmatpush1.msra.mxu0 %v1204
    %1217 = vmatprep.subr.mxu0 0.0
    %1218 = vmatpush1.msra.mxu0 %v1203
    %1219 = vmatprep.subr.mxu0 0.0
    %1220 = vmatpush1.msra.mxu0 %v1202
    %1221 = vmatprep.subr.mxu0 0.0
    %1222 = vmatpush1.msra.mxu0 %v1201
    %1223 = vmatprep.subr.mxu0 0.0
    %1224 = vmatpush1.msra.mxu0 %v1200
    %1225 = vmatprep.subr.mxu0 0.0
    %1226 = vmatpush1.msra.mxu0 %v1199
    %1227 = vmatprep.subr.mxu0 0.0
    %1228 = vmatpush1.msra.mxu0 %v1198
    %1229 = vmatprep.subr.mxu0 0.0
    %1230 = vmatpush1.msra.mxu0 %v1197
    %1231 = vmatprep.subr.mxu0 0.0
    %1232 = vmatpush1.msra.mxu0 %v1196
    %1233 = vmatprep.subr.mxu0 0.0
    %1234 = vmatpush1.msra.mxu0 %v1195
    %1235 = vmatprep.subr.mxu0 0.0
    %1236 = vmatpush1.msra.mxu0 %v1194
    %1237 = vmatprep.subr.mxu0 0.0
    %1238 = vmatpush1.msra.mxu0 %v1193
    %1239 = vmatprep.subr.mxu0 0.0
    %1240 = vmatpush1.msra.mxu0 %v1192
    %1241 = vmatprep.subr.mxu0 0.0
    %1242 = vmatpush1.msra.mxu0 %v1191
    %1243 = vmatprep.subr.mxu0 0.0
    %1244 = vmatpush2.msra.mxu0 0.0
    %1245 = vmatprep.subr.mxu0 0.0
    %1246 = vmatpush2.msra.mxu0 0.0
    %1247 = vmatprep.subr.mxu0 0.0
    %1248 = vmatpush2.msra.mxu0 0.0
    %1249 = vmatprep.subr.mxu0 0.0
    %1250 = vmatpush2.msra.mxu0 0.0
    %1251 = vmatprep.subr.mxu0 0.0
    %1252 = vmatpush2.msra.mxu0 0.0
    %1253 = vmatprep.subr.mxu0 0.0
    %1254 = vmatpush2.msra.mxu0 0.0
    %1255 = vmatprep.subr.mxu0 0.0
    %1256 = vmatpush2.msra.mxu0 0.0
    %1257 = vmatprep.subr.mxu0 0.0
    %1258 = vmatpush2.msra.mxu0 0.0
    %1259 = vmatprep.subr.mxu0 0.0
    %1260 = vmatpush2.msra.mxu0 0.0
    %1261 = vmatprep.subr.mxu0 0.0
    %1262 = vmatpush2.msra.mxu0 0.0
    %1263 = vmatprep.subr.mxu0 0.0
    %1264 = vmatpush2.msra.mxu0 0.0
    %1265 = vmatprep.subr.mxu0 0.0
    %1266 = vmatpush2.msra.mxu0 0.0
    %1267 = vmatprep.subr.mxu0 0.0
    %1268 = vmatpush2.msra.mxu0 0.0
    %1269 = vmatprep.subr.mxu0 0.0
    %1270 = vmatpush2.msra.mxu0 0.0
    %1271 = vmatprep.subr.mxu0 0.0
    %1272 = vmatpush2.msra.mxu0 0.0
    %1273 = vmatprep.subr.mxu0 0.0
    %1274 = vmatpush2.msra.mxu0 0.0
    %1275 = vmatprep.mubr.f32.mxu0 0.0
    %1276 = vmatmul.mubr.f32.gmra.mxu0 %v1189
    %v1277 = vpop.f32.mrf.mxu0
    %v1278 = vadd.f32 %v1210, %v1277
    %v1279 = vpop.f32.mrf.mxu0
    %1280 = vmatprep.mubr.f32.mxu0 0.0
    %1281 = vmatmul.mubr.f32.gmra.mxu0 %v1190
    %v1282 = vpop.f32.mrf.mxu0
    %v1283 = vadd.f32 %v1210, %v1282
    %v1284 = vpop.f32.mrf.mxu0
    %1285 = vdwg.mxu0
    %v1286 = vadd.f32 %v1094, %v1278
    %v1287 = vadd.f32 %v1095, %v1283
    %v1288 = vsel %vm41, %v1286, 0.0
    %1289 = vadd.xlane.f32.xlu0 %v1288
    %v1290 = vpop.xlane.xlu0 %1289
    %v1291 = vsel %vm41, %v1287, 0.0
    %1292 = vadd.xlane.f32.xlu0 %v1291
    %v1293 = vpop.xlane.xlu0 %1292
    %v1294 = vmul.f32 %v1290, %v1063
    %v1295 = vmul.f32 %v1293, %v1063
    %v1296 = vsub.f32 %v1286, %v1294
    %v1297 = vsub.f32 %v1287, %v1295
    %v1298 = vmul.f32 %v1296, %v1296
    %v1299 = vmul.f32 %v1297, %v1297
    %v1300 = vsel %vm41, %v1298, 0.0
    %1301 = vadd.xlane.f32.xlu0 %v1300
    %v1302 = vpop.xlane.xlu0 %1301
    %v1303 = vsel %vm41, %v1299, 0.0
    %1304 = vadd.xlane.f32.xlu0 %v1303
    %v1305 = vpop.xlane.xlu0 %1304
    %v1306 = vmul.f32 %v1302, %v1063
    %v1307 = vmul.f32 %v1305, %v1063
    %v1308 = vadd.f32 %v1306, 1e-12
    %v1309 = vadd.f32 %v1307, 1e-12
    %v1310 = vrsqrt.pop %v1308
    %v1311 = vrsqrt.pop %v1309
    %v1312 = vmul.f32 %v1296, %v1310
    %v1313 = vmul.f32 %v1297, %v1311
    %v1314 = vlaneseq
    %v1315 = vshrl.u32 %v1314, 7
    %v1316 = vsub.s32 6, %v1315
    %v1317 = vrot.slane %v36, %v1316
    %v1318 = vmul.f32 %v1312, %v1317
    %v1319 = vmul.f32 %v1313, %v1317
    %v1320 = vlaneseq
    %v1321 = vshrl.u32 %v1320, 7
    %v1322 = vsub.s32 7, %v1321
    %v1323 = vrot.slane %v36, %v1322
    %v1324 = vadd.f32 %v1318, %v1323
    %v1325 = vadd.f32 %v1319, %v1323
    %s1326 = scalar_lea.vmem %s2, 64
    %v1327 = vld [vmem:[%s1326] sm:$0xff]
    %v1328 = vld [vmem:[%s1326 + $0x8] sm:$0xff]
    %v1329 = vld [vmem:[%s1326 + $0x10] sm:$0xff]
    %v1330 = vld [vmem:[%s1326 + $0x18] sm:$0xff]
    %v1331 = vld [vmem:[%s1326 + $0x20] sm:$0xff]
    %v1332 = vld [vmem:[%s1326 + $0x28] sm:$0xff]
    %v1333 = vld [vmem:[%s1326 + $0x30] sm:$0xff]
    %v1334 = vld [vmem:[%s1326 + $0x38] sm:$0xff]
    %s1335 = scalar_lea.vmem %s4, 8
    %v1336 = vld [vmem:[%s1335] sm:$0xff]
    %v1337 = vlaneseq
    %v1338 = vshrl.u32 %v1337, 7
    %v1339 = vsub.s32 0, %v1338
    %v1340 = vrot.slane %v1336, %v1339
    %v1342 = vsel %vm41, %v1324, 0
    %v1345 = vsel %vm41, %v1325, 0
    %1347 = vmatprep.subr.mxu0 0.0
    %1348 = vmatpush1.msra.mxu0 0.0
    %1349 = vmatprep.subr.mxu0 0.0
    %1350 = vmatpush1.msra.mxu0 0.0
    %1351 = vmatprep.subr.mxu0 0.0
    %1352 = vmatpush1.msra.mxu0 0.0
    %1353 = vmatprep.subr.mxu0 0.0
    %1354 = vmatpush1.msra.mxu0 0.0
    %1355 = vmatprep.subr.mxu0 0.0
    %1356 = vmatpush1.msra.mxu0 0.0
    %1357 = vmatprep.subr.mxu0 0.0
    %1358 = vmatpush1.msra.mxu0 0.0
    %1359 = vmatprep.subr.mxu0 0.0
    %1360 = vmatpush1.msra.mxu0 0.0
    %1361 = vmatprep.subr.mxu0 0.0
    %1362 = vmatpush1.msra.mxu0 0.0
    %1363 = vmatprep.subr.mxu0 0.0
    %1364 = vmatpush1.msra.mxu0 0.0
    %1365 = vmatprep.subr.mxu0 0.0
    %1366 = vmatpush1.msra.mxu0 0.0
    %1367 = vmatprep.subr.mxu0 0.0
    %1368 = vmatpush1.msra.mxu0 0.0
    %1369 = vmatprep.subr.mxu0 0.0
    %1370 = vmatpush1.msra.mxu0 0.0
    %1371 = vmatprep.subr.mxu0 0.0
    %1372 = vmatpush1.msra.mxu0 %v1330
    %1373 = vmatprep.subr.mxu0 0.0
    %1374 = vmatpush1.msra.mxu0 %v1329
    %1375 = vmatprep.subr.mxu0 0.0
    %1376 = vmatpush1.msra.mxu0 %v1328
    %1377 = vmatprep.subr.mxu0 0.0
    %1378 = vmatpush1.msra.mxu0 %v1327
    %1379 = vmatprep.subr.mxu0 0.0
    %1380 = vmatpush2.msra.mxu0 0.0
    %1381 = vmatprep.subr.mxu0 0.0
    %1382 = vmatpush2.msra.mxu0 0.0
    %1383 = vmatprep.subr.mxu0 0.0
    %1384 = vmatpush2.msra.mxu0 0.0
    %1385 = vmatprep.subr.mxu0 0.0
    %1386 = vmatpush2.msra.mxu0 0.0
    %1387 = vmatprep.subr.mxu0 0.0
    %1388 = vmatpush2.msra.mxu0 0.0
    %1389 = vmatprep.subr.mxu0 0.0
    %1390 = vmatpush2.msra.mxu0 0.0
    %1391 = vmatprep.subr.mxu0 0.0
    %1392 = vmatpush2.msra.mxu0 0.0
    %1393 = vmatprep.subr.mxu0 0.0
    %1394 = vmatpush2.msra.mxu0 0.0
    %1395 = vmatprep.subr.mxu0 0.0
    %1396 = vmatpush2.msra.mxu0 0.0
    %1397 = vmatprep.subr.mxu0 0.0
    %1398 = vmatpush2.msra.mxu0 0.0
    %1399 = vmatprep.subr.mxu0 0.0
    %1400 = vmatpush2.msra.mxu0 0.0
    %1401 = vmatprep.subr.mxu0 0.0
    %1402 = vmatpush2.msra.mxu0 0.0
    %1403 = vmatprep.subr.mxu0 0.0
    %1404 = vmatpush2.msra.mxu0 0.0
    %1405 = vmatprep.subr.mxu0 0.0
    %1406 = vmatpush2.msra.mxu0 0.0
    %1407 = vmatprep.subr.mxu0 0.0
    %1408 = vmatpush2.msra.mxu0 0.0
    %1409 = vmatprep.subr.mxu0 0.0
    %1410 = vmatpush2.msra.mxu0 0.0
    %1411 = vmatprep.mubr.f32.mxu0 0.0
    %1412 = vmatmul.mubr.f32.gmra.mxu0 %v1342
    %v1413 = vpop.f32.mrf.mxu0
    %v1414 = vadd.f32 %v1340, %v1413
    %v1415 = vpop.f32.mrf.mxu0
    %1416 = vmatprep.mubr.f32.mxu0 0.0
    %1417 = vmatmul.mubr.f32.gmra.mxu0 %v1345
    %v1418 = vpop.f32.mrf.mxu0
    %v1419 = vadd.f32 %v1340, %v1418
    %v1420 = vpop.f32.mrf.mxu0
    %1421 = vdwg.mxu0
    %1424 = vrot.lane.b32.xlu0 %v1414, 96
    %v1425 = vpop.permute.xlu0 %1424
    %1426 = vrot.lane.b32.xlu0 %v1419, 96
    %v1427 = vpop.permute.xlu0 %1426
    %v1428 = vsel %vm129, %v1414, 0
    %v1430 = vsel %vm129, %v1419, 0
    %v1432 = vsel %vm129, %v1425, 0
    %v1434 = vsel %vm129, %v1427, 0
    %1436 = vmatprep.subr.mxu0 0.0
    %1437 = vmatpush1.xpose.msra.mxu0 0.0
    %1438 = vmatprep.subr.mxu0 0.0
    %1439 = vmatpush1.xpose.msra.mxu0 0.0
    %1440 = vmatprep.subr.mxu0 0.0
    %1441 = vmatpush1.xpose.msra.mxu0 0.0
    %1442 = vmatprep.subr.mxu0 0.0
    %1443 = vmatpush1.xpose.msra.mxu0 0.0
    %1444 = vmatprep.subr.mxu0 0.0
    %1445 = vmatpush1.xpose.msra.mxu0 0.0
    %1446 = vmatprep.subr.mxu0 0.0
    %1447 = vmatpush1.xpose.msra.mxu0 0.0
    %1448 = vmatprep.subr.mxu0 0.0
    %1449 = vmatpush1.xpose.msra.mxu0 0.0
    %1450 = vmatprep.subr.mxu0 0.0
    %1451 = vmatpush1.xpose.msra.mxu0 0.0
    %1452 = vmatprep.subr.mxu0 0.0
    %1453 = vmatpush1.xpose.msra.mxu0 0.0
    %1454 = vmatprep.subr.mxu0 0.0
    %1455 = vmatpush1.xpose.msra.mxu0 0.0
    %1456 = vmatprep.subr.mxu0 0.0
    %1457 = vmatpush1.xpose.msra.mxu0 0.0
    %1458 = vmatprep.subr.mxu0 0.0
    %1459 = vmatpush1.xpose.msra.mxu0 0.0
    %1460 = vmatprep.subr.mxu0 0.0
    %1461 = vmatpush1.xpose.msra.mxu0 0.0
    %1462 = vmatprep.subr.mxu0 0.0
    %1463 = vmatpush1.xpose.msra.mxu0 0.0
    %1464 = vmatprep.subr.mxu0 0.0
    %1465 = vmatpush1.xpose.msra.mxu0 %v1434
    %1466 = vmatprep.subr.mxu0 0.0
    %1467 = vmatpush1.xpose.msra.mxu0 %v1432
    %1468 = vmatprep.subr.mxu0 0.0
    %1469 = vmatpush2.xpose.msra.mxu0 0.0
    %1470 = vmatprep.subr.mxu0 0.0
    %1471 = vmatpush2.xpose.msra.mxu0 0.0
    %1472 = vmatprep.subr.mxu0 0.0
    %1473 = vmatpush2.xpose.msra.mxu0 0.0
    %1474 = vmatprep.subr.mxu0 0.0
    %1475 = vmatpush2.xpose.msra.mxu0 0.0
    %1476 = vmatprep.subr.mxu0 0.0
    %1477 = vmatpush2.xpose.msra.mxu0 0.0
    %1478 = vmatprep.subr.mxu0 0.0
    %1479 = vmatpush2.xpose.msra.mxu0 0.0
    %1480 = vmatprep.subr.mxu0 0.0
    %1481 = vmatpush2.xpose.msra.mxu0 0.0
    %1482 = vmatprep.subr.mxu0 0.0
    %1483 = vmatpush2.xpose.msra.mxu0 0.0
    %1484 = vmatprep.subr.mxu0 0.0
    %1485 = vmatpush2.xpose.msra.mxu0 0.0
    %1486 = vmatprep.subr.mxu0 0.0
    %1487 = vmatpush2.xpose.msra.mxu0 0.0
    %1488 = vmatprep.subr.mxu0 0.0
    %1489 = vmatpush2.xpose.msra.mxu0 0.0
    %1490 = vmatprep.subr.mxu0 0.0
    %1491 = vmatpush2.xpose.msra.mxu0 0.0
    %1492 = vmatprep.subr.mxu0 0.0
    %1493 = vmatpush2.xpose.msra.mxu0 0.0
    %1494 = vmatprep.subr.mxu0 0.0
    %1495 = vmatpush2.xpose.msra.mxu0 0.0
    %1496 = vmatprep.subr.mxu0 0.0
    %1497 = vmatpush2.xpose.msra.mxu0 0.0
    %1498 = vmatprep.subr.mxu0 0.0
    %1499 = vmatpush2.xpose.msra.mxu0 0.0
    %1500 = vmatprep.mubr.f32.mxu0 0.0
    %1501 = vmatmul.mubr.f32.gmra.mxu0 %v1428
    %v1502 = vpop.f32.mrf.mxu0
    %v1503 = vadd.f32 %v26, %v1502
    %v1504 = vpop.f32.mrf.mxu0
    %1505 = vmatprep.mubr.f32.mxu0 0.0
    %1506 = vmatmul.mubr.f32.gmra.mxu0 %v1430
    %v1507 = vpop.f32.mrf.mxu0
    %v1508 = vadd.f32 %v27, %v1507
    %v1509 = vpop.f32.mrf.mxu0
    %1510 = vdwg.mxu0
    %v1511 = vsel %vm213, %v1503, -inf
    %1512 = vmax.xlane.f32.xlu0 %v1511
    %v1513 = vpop.xlane.xlu0 %1512
    %v1514 = vsel %vm213, %v1508, -inf
    %1515 = vmax.xlane.f32.xlu0 %v1514
    %v1516 = vpop.xlane.xlu0 %1515
    %v1517 = vsub.f32 %v1503, %v1513
    %v1518 = vsub.f32 %v1508, %v1516
    %v1519 = vmul.f32 %v1517, 1.442695
    %v1520 = vpow.pop %v1519
    %v1521 = vmul.f32 %v1518, 1.442695
    %v1522 = vpow.pop %v1521
    %v1523 = vsel %vm213, %v1520, 0.0
    %1524 = vadd.xlane.f32.xlu0 %v1523
    %v1525 = vpop.xlane.xlu0 %1524
    %v1526 = vsel %vm213, %v1522, 0.0
    %1527 = vadd.xlane.f32.xlu0 %v1526
    %v1528 = vpop.xlane.xlu0 %1527
    %v1529 = vrcp.pop %v1525
    %v1530 = vrcp.pop %v1528
    %v1531 = vmul.f32 %v1520, %v1529
    %v1532 = vmul.f32 %v1522, %v1530
    %1533 = vrot.lane.b32.xlu0 %v1414, 64
    %v1534 = vpop.permute.xlu0 %1533
    %1535 = vrot.lane.b32.xlu0 %v1419, 64
    %v1536 = vpop.permute.xlu0 %1535
    %v1540 = vsel %vm213, %v1531, 0
    %v1543 = vsel %vm213, %v1532, 0
    %1545 = vmatprep.subr.mxu0 0.0
    %1546 = vmatpush1.msra.mxu0 0.0
    %1547 = vmatprep.subr.mxu0 0.0
    %1548 = vmatpush1.msra.mxu0 0.0
    %1549 = vmatprep.subr.mxu0 0.0
    %1550 = vmatpush1.msra.mxu0 0.0
    %1551 = vmatprep.subr.mxu0 0.0
    %1552 = vmatpush1.msra.mxu0 0.0
    %1553 = vmatprep.subr.mxu0 0.0
    %1554 = vmatpush1.msra.mxu0 0.0
    %1555 = vmatprep.subr.mxu0 0.0
    %1556 = vmatpush1.msra.mxu0 0.0
    %1557 = vmatprep.subr.mxu0 0.0
    %1558 = vmatpush1.msra.mxu0 0.0
    %1559 = vmatprep.subr.mxu0 0.0
    %1560 = vmatpush1.msra.mxu0 0.0
    %1561 = vmatprep.subr.mxu0 0.0
    %1562 = vmatpush1.msra.mxu0 0.0
    %1563 = vmatprep.subr.mxu0 0.0
    %1564 = vmatpush1.msra.mxu0 0.0
    %1565 = vmatprep.subr.mxu0 0.0
    %1566 = vmatpush1.msra.mxu0 0.0
    %1567 = vmatprep.subr.mxu0 0.0
    %1568 = vmatpush1.msra.mxu0 0.0
    %1569 = vmatprep.subr.mxu0 0.0
    %1570 = vmatpush1.msra.mxu0 0.0
    %1571 = vmatprep.subr.mxu0 0.0
    %1572 = vmatpush1.msra.mxu0 0.0
    %1573 = vmatprep.subr.mxu0 0.0
    %1574 = vmatpush1.msra.mxu0 %v1536
    %1575 = vmatprep.subr.mxu0 0.0
    %1576 = vmatpush1.msra.mxu0 %v1534
    %1577 = vmatprep.subr.mxu0 0.0
    %1578 = vmatpush2.msra.mxu0 0.0
    %1579 = vmatprep.subr.mxu0 0.0
    %1580 = vmatpush2.msra.mxu0 0.0
    %1581 = vmatprep.subr.mxu0 0.0
    %1582 = vmatpush2.msra.mxu0 0.0
    %1583 = vmatprep.subr.mxu0 0.0
    %1584 = vmatpush2.msra.mxu0 0.0
    %1585 = vmatprep.subr.mxu0 0.0
    %1586 = vmatpush2.msra.mxu0 0.0
    %1587 = vmatprep.subr.mxu0 0.0
    %1588 = vmatpush2.msra.mxu0 0.0
    %1589 = vmatprep.subr.mxu0 0.0
    %1590 = vmatpush2.msra.mxu0 0.0
    %1591 = vmatprep.subr.mxu0 0.0
    %1592 = vmatpush2.msra.mxu0 0.0
    %1593 = vmatprep.subr.mxu0 0.0
    %1594 = vmatpush2.msra.mxu0 0.0
    %1595 = vmatprep.subr.mxu0 0.0
    %1596 = vmatpush2.msra.mxu0 0.0
    %1597 = vmatprep.subr.mxu0 0.0
    %1598 = vmatpush2.msra.mxu0 0.0
    %1599 = vmatprep.subr.mxu0 0.0
    %1600 = vmatpush2.msra.mxu0 0.0
    %1601 = vmatprep.subr.mxu0 0.0
    %1602 = vmatpush2.msra.mxu0 0.0
    %1603 = vmatprep.subr.mxu0 0.0
    %1604 = vmatpush2.msra.mxu0 0.0
    %1605 = vmatprep.subr.mxu0 0.0
    %1606 = vmatpush2.msra.mxu0 0.0
    %1607 = vmatprep.subr.mxu0 0.0
    %1608 = vmatpush2.msra.mxu0 0.0
    %1609 = vmatprep.mubr.f32.mxu0 0.0
    %1610 = vmatmul.mubr.f32.gmra.mxu0 %v1540
    %v1611 = vpop.f32.mrf.mxu0
    %v1612 = vadd.f32 0.0, %v1611
    %v1613 = vpop.f32.mrf.mxu0
    %1614 = vmatprep.mubr.f32.mxu0 0.0
    %1615 = vmatmul.mubr.f32.gmra.mxu0 %v1543
    %v1616 = vpop.f32.mrf.mxu0
    %v1617 = vadd.f32 0.0, %v1616
    %v1618 = vpop.f32.mrf.mxu0
    %1619 = vdwg.mxu0
    %1620 = vrot.lane.b32.xlu0 %v1414, 120
    %v1621 = vpop.permute.xlu0 %1620
    %1622 = vrot.lane.b32.xlu0 %v1419, 120
    %v1623 = vpop.permute.xlu0 %1622
    %1624 = vrot.lane.b32.xlu0 %v1414, 88
    %v1625 = vpop.permute.xlu0 %1624
    %1626 = vrot.lane.b32.xlu0 %v1419, 88
    %v1627 = vpop.permute.xlu0 %1626
    %v1628 = vsel %vm129, %v1621, 0
    %v1630 = vsel %vm129, %v1623, 0
    %v1632 = vsel %vm129, %v1625, 0
    %v1634 = vsel %vm129, %v1627, 0
    %1636 = vmatprep.subr.mxu0 0.0
    %1637 = vmatpush1.xpose.msra.mxu0 0.0
    %1638 = vmatprep.subr.mxu0 0.0
    %1639 = vmatpush1.xpose.msra.mxu0 0.0
    %1640 = vmatprep.subr.mxu0 0.0
    %1641 = vmatpush1.xpose.msra.mxu0 0.0
    %1642 = vmatprep.subr.mxu0 0.0
    %1643 = vmatpush1.xpose.msra.mxu0 0.0
    %1644 = vmatprep.subr.mxu0 0.0
    %1645 = vmatpush1.xpose.msra.mxu0 0.0
    %1646 = vmatprep.subr.mxu0 0.0
    %1647 = vmatpush1.xpose.msra.mxu0 0.0
    %1648 = vmatprep.subr.mxu0 0.0
    %1649 = vmatpush1.xpose.msra.mxu0 0.0
    %1650 = vmatprep.subr.mxu0 0.0
    %1651 = vmatpush1.xpose.msra.mxu0 0.0
    %1652 = vmatprep.subr.mxu0 0.0
    %1653 = vmatpush1.xpose.msra.mxu0 0.0
    %1654 = vmatprep.subr.mxu0 0.0
    %1655 = vmatpush1.xpose.msra.mxu0 0.0
    %1656 = vmatprep.subr.mxu0 0.0
    %1657 = vmatpush1.xpose.msra.mxu0 0.0
    %1658 = vmatprep.subr.mxu0 0.0
    %1659 = vmatpush1.xpose.msra.mxu0 0.0
    %1660 = vmatprep.subr.mxu0 0.0
    %1661 = vmatpush1.xpose.msra.mxu0 0.0
    %1662 = vmatprep.subr.mxu0 0.0
    %1663 = vmatpush1.xpose.msra.mxu0 0.0
    %1664 = vmatprep.subr.mxu0 0.0
    %1665 = vmatpush1.xpose.msra.mxu0 %v1634
    %1666 = vmatprep.subr.mxu0 0.0
    %1667 = vmatpush1.xpose.msra.mxu0 %v1632
    %1668 = vmatprep.subr.mxu0 0.0
    %1669 = vmatpush2.xpose.msra.mxu0 0.0
    %1670 = vmatprep.subr.mxu0 0.0
    %1671 = vmatpush2.xpose.msra.mxu0 0.0
    %1672 = vmatprep.subr.mxu0 0.0
    %1673 = vmatpush2.xpose.msra.mxu0 0.0
    %1674 = vmatprep.subr.mxu0 0.0
    %1675 = vmatpush2.xpose.msra.mxu0 0.0
    %1676 = vmatprep.subr.mxu0 0.0
    %1677 = vmatpush2.xpose.msra.mxu0 0.0
    %1678 = vmatprep.subr.mxu0 0.0
    %1679 = vmatpush2.xpose.msra.mxu0 0.0
    %1680 = vmatprep.subr.mxu0 0.0
    %1681 = vmatpush2.xpose.msra.mxu0 0.0
    %1682 = vmatprep.subr.mxu0 0.0
    %1683 = vmatpush2.xpose.msra.mxu0 0.0
    %1684 = vmatprep.subr.mxu0 0.0
    %1685 = vmatpush2.xpose.msra.mxu0 0.0
    %1686 = vmatprep.subr.mxu0 0.0
    %1687 = vmatpush2.xpose.msra.mxu0 0.0
    %1688 = vmatprep.subr.mxu0 0.0
    %1689 = vmatpush2.xpose.msra.mxu0 0.0
    %1690 = vmatprep.subr.mxu0 0.0
    %1691 = vmatpush2.xpose.msra.mxu0 0.0
    %1692 = vmatprep.subr.mxu0 0.0
    %1693 = vmatpush2.xpose.msra.mxu0 0.0
    %1694 = vmatprep.subr.mxu0 0.0
    %1695 = vmatpush2.xpose.msra.mxu0 0.0
    %1696 = vmatprep.subr.mxu0 0.0
    %1697 = vmatpush2.xpose.msra.mxu0 0.0
    %1698 = vmatprep.subr.mxu0 0.0
    %1699 = vmatpush2.xpose.msra.mxu0 0.0
    %1700 = vmatprep.mubr.f32.mxu0 0.0
    %1701 = vmatmul.mubr.f32.gmra.mxu0 %v1628
    %v1702 = vpop.f32.mrf.mxu0
    %v1703 = vadd.f32 %v26, %v1702
    %v1704 = vpop.f32.mrf.mxu0
    %1705 = vmatprep.mubr.f32.mxu0 0.0
    %1706 = vmatmul.mubr.f32.gmra.mxu0 %v1630
    %v1707 = vpop.f32.mrf.mxu0
    %v1708 = vadd.f32 %v27, %v1707
    %v1709 = vpop.f32.mrf.mxu0
    %1710 = vdwg.mxu0
    %v1711 = vsel %vm213, %v1703, -inf
    %1712 = vmax.xlane.f32.xlu0 %v1711
    %v1713 = vpop.xlane.xlu0 %1712
    %v1714 = vsel %vm213, %v1708, -inf
    %1715 = vmax.xlane.f32.xlu0 %v1714
    %v1716 = vpop.xlane.xlu0 %1715
    %v1717 = vsub.f32 %v1703, %v1713
    %v1718 = vsub.f32 %v1708, %v1716
    %v1719 = vmul.f32 %v1717, 1.442695
    %v1720 = vpow.pop %v1719
    %v1721 = vmul.f32 %v1718, 1.442695
    %v1722 = vpow.pop %v1721
    %v1723 = vsel %vm213, %v1720, 0.0
    %1724 = vadd.xlane.f32.xlu0 %v1723
    %v1725 = vpop.xlane.xlu0 %1724
    %v1726 = vsel %vm213, %v1722, 0.0
    %1727 = vadd.xlane.f32.xlu0 %v1726
    %v1728 = vpop.xlane.xlu0 %1727
    %v1729 = vrcp.pop %v1725
    %v1730 = vrcp.pop %v1728
    %v1731 = vmul.f32 %v1720, %v1729
    %v1732 = vmul.f32 %v1722, %v1730
    %1733 = vrot.lane.b32.xlu0 %v1414, 56
    %v1734 = vpop.permute.xlu0 %1733
    %1735 = vrot.lane.b32.xlu0 %v1419, 56
    %v1736 = vpop.permute.xlu0 %1735
    %v1740 = vsel %vm213, %v1731, 0
    %v1743 = vsel %vm213, %v1732, 0
    %1745 = vmatprep.subr.mxu0 0.0
    %1746 = vmatpush1.msra.mxu0 0.0
    %1747 = vmatprep.subr.mxu0 0.0
    %1748 = vmatpush1.msra.mxu0 0.0
    %1749 = vmatprep.subr.mxu0 0.0
    %1750 = vmatpush1.msra.mxu0 0.0
    %1751 = vmatprep.subr.mxu0 0.0
    %1752 = vmatpush1.msra.mxu0 0.0
    %1753 = vmatprep.subr.mxu0 0.0
    %1754 = vmatpush1.msra.mxu0 0.0
    %1755 = vmatprep.subr.mxu0 0.0
    %1756 = vmatpush1.msra.mxu0 0.0
    %1757 = vmatprep.subr.mxu0 0.0
    %1758 = vmatpush1.msra.mxu0 0.0
    %1759 = vmatprep.subr.mxu0 0.0
    %1760 = vmatpush1.msra.mxu0 0.0
    %1761 = vmatprep.subr.mxu0 0.0
    %1762 = vmatpush1.msra.mxu0 0.0
    %1763 = vmatprep.subr.mxu0 0.0
    %1764 = vmatpush1.msra.mxu0 0.0
    %1765 = vmatprep.subr.mxu0 0.0
    %1766 = vmatpush1.msra.mxu0 0.0
    %1767 = vmatprep.subr.mxu0 0.0
    %1768 = vmatpush1.msra.mxu0 0.0
    %1769 = vmatprep.subr.mxu0 0.0
    %1770 = vmatpush1.msra.mxu0 0.0
    %1771 = vmatprep.subr.mxu0 0.0
    %1772 = vmatpush1.msra.mxu0 0.0
    %1773 = vmatprep.subr.mxu0 0.0
    %1774 = vmatpush1.msra.mxu0 %v1736
    %1775 = vmatprep.subr.mxu0 0.0
    %1776 = vmatpush1.msra.mxu0 %v1734
    %1777 = vmatprep.subr.mxu0 0.0
    %1778 = vmatpush2.msra.mxu0 0.0
    %1779 = vmatprep.subr.mxu0 0.0
    %1780 = vmatpush2.msra.mxu0 0.0
    %1781 = vmatprep.subr.mxu0 0.0
    %1782 = vmatpush2.msra.mxu0 0.0
    %1783 = vmatprep.subr.mxu0 0.0
    %1784 = vmatpush2.msra.mxu0 0.0
    %1785 = vmatprep.subr.mxu0 0.0
    %1786 = vmatpush2.msra.mxu0 0.0
    %1787 = vmatprep.subr.mxu0 0.0
    %1788 = vmatpush2.msra.mxu0 0.0
    %1789 = vmatprep.subr.mxu0 0.0
    %1790 = vmatpush2.msra.mxu0 0.0
    %1791 = vmatprep.subr.mxu0 0.0
    %1792 = vmatpush2.msra.mxu0 0.0
    %1793 = vmatprep.subr.mxu0 0.0
    %1794 = vmatpush2.msra.mxu0 0.0
    %1795 = vmatprep.subr.mxu0 0.0
    %1796 = vmatpush2.msra.mxu0 0.0
    %1797 = vmatprep.subr.mxu0 0.0
    %1798 = vmatpush2.msra.mxu0 0.0
    %1799 = vmatprep.subr.mxu0 0.0
    %1800 = vmatpush2.msra.mxu0 0.0
    %1801 = vmatprep.subr.mxu0 0.0
    %1802 = vmatpush2.msra.mxu0 0.0
    %1803 = vmatprep.subr.mxu0 0.0
    %1804 = vmatpush2.msra.mxu0 0.0
    %1805 = vmatprep.subr.mxu0 0.0
    %1806 = vmatpush2.msra.mxu0 0.0
    %1807 = vmatprep.subr.mxu0 0.0
    %1808 = vmatpush2.msra.mxu0 0.0
    %1809 = vmatprep.mubr.f32.mxu0 0.0
    %1810 = vmatmul.mubr.f32.gmra.mxu0 %v1740
    %v1811 = vpop.f32.mrf.mxu0
    %v1812 = vadd.f32 0.0, %v1811
    %v1813 = vpop.f32.mrf.mxu0
    %1814 = vmatprep.mubr.f32.mxu0 0.0
    %1815 = vmatmul.mubr.f32.gmra.mxu0 %v1743
    %v1816 = vpop.f32.mrf.mxu0
    %v1817 = vadd.f32 0.0, %v1816
    %v1818 = vpop.f32.mrf.mxu0
    %1819 = vdwg.mxu0
    %1820 = vrot.lane.b32.xlu0 %v1414, 112
    %v1821 = vpop.permute.xlu0 %1820
    %1822 = vrot.lane.b32.xlu0 %v1419, 112
    %v1823 = vpop.permute.xlu0 %1822
    %1824 = vrot.lane.b32.xlu0 %v1414, 80
    %v1825 = vpop.permute.xlu0 %1824
    %1826 = vrot.lane.b32.xlu0 %v1419, 80
    %v1827 = vpop.permute.xlu0 %1826
    %v1828 = vsel %vm129, %v1821, 0
    %v1830 = vsel %vm129, %v1823, 0
    %v1832 = vsel %vm129, %v1825, 0
    %v1834 = vsel %vm129, %v1827, 0
    %1836 = vmatprep.subr.mxu0 0.0
    %1837 = vmatpush1.xpose.msra.mxu0 0.0
    %1838 = vmatprep.subr.mxu0 0.0
    %1839 = vmatpush1.xpose.msra.mxu0 0.0
    %1840 = vmatprep.subr.mxu0 0.0
    %1841 = vmatpush1.xpose.msra.mxu0 0.0
    %1842 = vmatprep.subr.mxu0 0.0
    %1843 = vmatpush1.xpose.msra.mxu0 0.0
    %1844 = vmatprep.subr.mxu0 0.0
    %1845 = vmatpush1.xpose.msra.mxu0 0.0
    %1846 = vmatprep.subr.mxu0 0.0
    %1847 = vmatpush1.xpose.msra.mxu0 0.0
    %1848 = vmatprep.subr.mxu0 0.0
    %1849 = vmatpush1.xpose.msra.mxu0 0.0
    %1850 = vmatprep.subr.mxu0 0.0
    %1851 = vmatpush1.xpose.msra.mxu0 0.0
    %1852 = vmatprep.subr.mxu0 0.0
    %1853 = vmatpush1.xpose.msra.mxu0 0.0
    %1854 = vmatprep.subr.mxu0 0.0
    %1855 = vmatpush1.xpose.msra.mxu0 0.0
    %1856 = vmatprep.subr.mxu0 0.0
    %1857 = vmatpush1.xpose.msra.mxu0 0.0
    %1858 = vmatprep.subr.mxu0 0.0
    %1859 = vmatpush1.xpose.msra.mxu0 0.0
    %1860 = vmatprep.subr.mxu0 0.0
    %1861 = vmatpush1.xpose.msra.mxu0 0.0
    %1862 = vmatprep.subr.mxu0 0.0
    %1863 = vmatpush1.xpose.msra.mxu0 0.0
    %1864 = vmatprep.subr.mxu0 0.0
    %1865 = vmatpush1.xpose.msra.mxu0 %v1834
    %1866 = vmatprep.subr.mxu0 0.0
    %1867 = vmatpush1.xpose.msra.mxu0 %v1832
    %1868 = vmatprep.subr.mxu0 0.0
    %1869 = vmatpush2.xpose.msra.mxu0 0.0
    %1870 = vmatprep.subr.mxu0 0.0
    %1871 = vmatpush2.xpose.msra.mxu0 0.0
    %1872 = vmatprep.subr.mxu0 0.0
    %1873 = vmatpush2.xpose.msra.mxu0 0.0
    %1874 = vmatprep.subr.mxu0 0.0
    %1875 = vmatpush2.xpose.msra.mxu0 0.0
    %1876 = vmatprep.subr.mxu0 0.0
    %1877 = vmatpush2.xpose.msra.mxu0 0.0
    %1878 = vmatprep.subr.mxu0 0.0
    %1879 = vmatpush2.xpose.msra.mxu0 0.0
    %1880 = vmatprep.subr.mxu0 0.0
    %1881 = vmatpush2.xpose.msra.mxu0 0.0
    %1882 = vmatprep.subr.mxu0 0.0
    %1883 = vmatpush2.xpose.msra.mxu0 0.0
    %1884 = vmatprep.subr.mxu0 0.0
    %1885 = vmatpush2.xpose.msra.mxu0 0.0
    %1886 = vmatprep.subr.mxu0 0.0
    %1887 = vmatpush2.xpose.msra.mxu0 0.0
    %1888 = vmatprep.subr.mxu0 0.0
    %1889 = vmatpush2.xpose.msra.mxu0 0.0
    %1890 = vmatprep.subr.mxu0 0.0
    %1891 = vmatpush2.xpose.msra.mxu0 0.0
    %1892 = vmatprep.subr.mxu0 0.0
    %1893 = vmatpush2.xpose.msra.mxu0 0.0
    %1894 = vmatprep.subr.mxu0 0.0
    %1895 = vmatpush2.xpose.msra.mxu0 0.0
    %1896 = vmatprep.subr.mxu0 0.0
    %1897 = vmatpush2.xpose.msra.mxu0 0.0
    %1898 = vmatprep.subr.mxu0 0.0
    %1899 = vmatpush2.xpose.msra.mxu0 0.0
    %1900 = vmatprep.mubr.f32.mxu0 0.0
    %1901 = vmatmul.mubr.f32.gmra.mxu0 %v1828
    %v1902 = vpop.f32.mrf.mxu0
    %v1903 = vadd.f32 %v26, %v1902
    %v1904 = vpop.f32.mrf.mxu0
    %1905 = vmatprep.mubr.f32.mxu0 0.0
    %1906 = vmatmul.mubr.f32.gmra.mxu0 %v1830
    %v1907 = vpop.f32.mrf.mxu0
    %v1908 = vadd.f32 %v27, %v1907
    %v1909 = vpop.f32.mrf.mxu0
    %1910 = vdwg.mxu0
    %v1911 = vsel %vm213, %v1903, -inf
    %1912 = vmax.xlane.f32.xlu0 %v1911
    %v1913 = vpop.xlane.xlu0 %1912
    %v1914 = vsel %vm213, %v1908, -inf
    %1915 = vmax.xlane.f32.xlu0 %v1914
    %v1916 = vpop.xlane.xlu0 %1915
    %v1917 = vsub.f32 %v1903, %v1913
    %v1918 = vsub.f32 %v1908, %v1916
    %v1919 = vmul.f32 %v1917, 1.442695
    %v1920 = vpow.pop %v1919
    %v1921 = vmul.f32 %v1918, 1.442695
    %v1922 = vpow.pop %v1921
    %v1923 = vsel %vm213, %v1920, 0.0
    %1924 = vadd.xlane.f32.xlu0 %v1923
    %v1925 = vpop.xlane.xlu0 %1924
    %v1926 = vsel %vm213, %v1922, 0.0
    %1927 = vadd.xlane.f32.xlu0 %v1926
    %v1928 = vpop.xlane.xlu0 %1927
    %v1929 = vrcp.pop %v1925
    %v1930 = vrcp.pop %v1928
    %v1931 = vmul.f32 %v1920, %v1929
    %v1932 = vmul.f32 %v1922, %v1930
    %1933 = vrot.lane.b32.xlu0 %v1414, 48
    %v1934 = vpop.permute.xlu0 %1933
    %1935 = vrot.lane.b32.xlu0 %v1419, 48
    %v1936 = vpop.permute.xlu0 %1935
    %v1940 = vsel %vm213, %v1931, 0
    %v1943 = vsel %vm213, %v1932, 0
    %1945 = vmatprep.subr.mxu0 0.0
    %1946 = vmatpush1.msra.mxu0 0.0
    %1947 = vmatprep.subr.mxu0 0.0
    %1948 = vmatpush1.msra.mxu0 0.0
    %1949 = vmatprep.subr.mxu0 0.0
    %1950 = vmatpush1.msra.mxu0 0.0
    %1951 = vmatprep.subr.mxu0 0.0
    %1952 = vmatpush1.msra.mxu0 0.0
    %1953 = vmatprep.subr.mxu0 0.0
    %1954 = vmatpush1.msra.mxu0 0.0
    %1955 = vmatprep.subr.mxu0 0.0
    %1956 = vmatpush1.msra.mxu0 0.0
    %1957 = vmatprep.subr.mxu0 0.0
    %1958 = vmatpush1.msra.mxu0 0.0
    %1959 = vmatprep.subr.mxu0 0.0
    %1960 = vmatpush1.msra.mxu0 0.0
    %1961 = vmatprep.subr.mxu0 0.0
    %1962 = vmatpush1.msra.mxu0 0.0
    %1963 = vmatprep.subr.mxu0 0.0
    %1964 = vmatpush1.msra.mxu0 0.0
    %1965 = vmatprep.subr.mxu0 0.0
    %1966 = vmatpush1.msra.mxu0 0.0
    %1967 = vmatprep.subr.mxu0 0.0
    %1968 = vmatpush1.msra.mxu0 0.0
    %1969 = vmatprep.subr.mxu0 0.0
    %1970 = vmatpush1.msra.mxu0 0.0
    %1971 = vmatprep.subr.mxu0 0.0
    %1972 = vmatpush1.msra.mxu0 0.0
    %1973 = vmatprep.subr.mxu0 0.0
    %1974 = vmatpush1.msra.mxu0 %v1936
    %1975 = vmatprep.subr.mxu0 0.0
    %1976 = vmatpush1.msra.mxu0 %v1934
    %1977 = vmatprep.subr.mxu0 0.0
    %1978 = vmatpush2.msra.mxu0 0.0
    %1979 = vmatprep.subr.mxu0 0.0
    %1980 = vmatpush2.msra.mxu0 0.0
    %1981 = vmatprep.subr.mxu0 0.0
    %1982 = vmatpush2.msra.mxu0 0.0
    %1983 = vmatprep.subr.mxu0 0.0
    %1984 = vmatpush2.msra.mxu0 0.0
    %1985 = vmatprep.subr.mxu0 0.0
    %1986 = vmatpush2.msra.mxu0 0.0
    %1987 = vmatprep.subr.mxu0 0.0
    %1988 = vmatpush2.msra.mxu0 0.0
    %1989 = vmatprep.subr.mxu0 0.0
    %1990 = vmatpush2.msra.mxu0 0.0
    %1991 = vmatprep.subr.mxu0 0.0
    %1992 = vmatpush2.msra.mxu0 0.0
    %1993 = vmatprep.subr.mxu0 0.0
    %1994 = vmatpush2.msra.mxu0 0.0
    %1995 = vmatprep.subr.mxu0 0.0
    %1996 = vmatpush2.msra.mxu0 0.0
    %1997 = vmatprep.subr.mxu0 0.0
    %1998 = vmatpush2.msra.mxu0 0.0
    %1999 = vmatprep.subr.mxu0 0.0
    %2000 = vmatpush2.msra.mxu0 0.0
    %2001 = vmatprep.subr.mxu0 0.0
    %2002 = vmatpush2.msra.mxu0 0.0
    %2003 = vmatprep.subr.mxu0 0.0
    %2004 = vmatpush2.msra.mxu0 0.0
    %2005 = vmatprep.subr.mxu0 0.0
    %2006 = vmatpush2.msra.mxu0 0.0
    %2007 = vmatprep.subr.mxu0 0.0
    %2008 = vmatpush2.msra.mxu0 0.0
    %2009 = vmatprep.mubr.f32.mxu0 0.0
    %2010 = vmatmul.mubr.f32.gmra.mxu0 %v1940
    %v2011 = vpop.f32.mrf.mxu0
    %v2012 = vadd.f32 0.0, %v2011
    %v2013 = vpop.f32.mrf.mxu0
    %2014 = vmatprep.mubr.f32.mxu0 0.0
    %2015 = vmatmul.mubr.f32.gmra.mxu0 %v1943
    %v2016 = vpop.f32.mrf.mxu0
    %v2017 = vadd.f32 0.0, %v2016
    %v2018 = vpop.f32.mrf.mxu0
    %2019 = vdwg.mxu0
    %2020 = vrot.lane.b32.xlu0 %v1414, 104
    %v2021 = vpop.permute.xlu0 %2020
    %2022 = vrot.lane.b32.xlu0 %v1419, 104
    %v2023 = vpop.permute.xlu0 %2022
    %2024 = vrot.lane.b32.xlu0 %v1414, 72
    %v2025 = vpop.permute.xlu0 %2024
    %2026 = vrot.lane.b32.xlu0 %v1419, 72
    %v2027 = vpop.permute.xlu0 %2026
    %v2028 = vsel %vm129, %v2021, 0
    %v2030 = vsel %vm129, %v2023, 0
    %v2032 = vsel %vm129, %v2025, 0
    %v2034 = vsel %vm129, %v2027, 0
    %2036 = vmatprep.subr.mxu0 0.0
    %2037 = vmatpush1.xpose.msra.mxu0 0.0
    %2038 = vmatprep.subr.mxu0 0.0
    %2039 = vmatpush1.xpose.msra.mxu0 0.0
    %2040 = vmatprep.subr.mxu0 0.0
    %2041 = vmatpush1.xpose.msra.mxu0 0.0
    %2042 = vmatprep.subr.mxu0 0.0
    %2043 = vmatpush1.xpose.msra.mxu0 0.0
    %2044 = vmatprep.subr.mxu0 0.0
    %2045 = vmatpush1.xpose.msra.mxu0 0.0
    %2046 = vmatprep.subr.mxu0 0.0
    %2047 = vmatpush1.xpose.msra.mxu0 0.0
    %2048 = vmatprep.subr.mxu0 0.0
    %2049 = vmatpush1.xpose.msra.mxu0 0.0
    %2050 = vmatprep.subr.mxu0 0.0
    %2051 = vmatpush1.xpose.msra.mxu0 0.0
    %2052 = vmatprep.subr.mxu0 0.0
    %2053 = vmatpush1.xpose.msra.mxu0 0.0
    %2054 = vmatprep.subr.mxu0 0.0
    %2055 = vmatpush1.xpose.msra.mxu0 0.0
    %2056 = vmatprep.subr.mxu0 0.0
    %2057 = vmatpush1.xpose.msra.mxu0 0.0
    %2058 = vmatprep.subr.mxu0 0.0
    %2059 = vmatpush1.xpose.msra.mxu0 0.0
    %2060 = vmatprep.subr.mxu0 0.0
    %2061 = vmatpush1.xpose.msra.mxu0 0.0
    %2062 = vmatprep.subr.mxu0 0.0
    %2063 = vmatpush1.xpose.msra.mxu0 0.0
    %2064 = vmatprep.subr.mxu0 0.0
    %2065 = vmatpush1.xpose.msra.mxu0 %v2034
    %2066 = vmatprep.subr.mxu0 0.0
    %2067 = vmatpush1.xpose.msra.mxu0 %v2032
    %2068 = vmatprep.subr.mxu0 0.0
    %2069 = vmatpush2.xpose.msra.mxu0 0.0
    %2070 = vmatprep.subr.mxu0 0.0
    %2071 = vmatpush2.xpose.msra.mxu0 0.0
    %2072 = vmatprep.subr.mxu0 0.0
    %2073 = vmatpush2.xpose.msra.mxu0 0.0
    %2074 = vmatprep.subr.mxu0 0.0
    %2075 = vmatpush2.xpose.msra.mxu0 0.0
    %2076 = vmatprep.subr.mxu0 0.0
    %2077 = vmatpush2.xpose.msra.mxu0 0.0
    %2078 = vmatprep.subr.mxu0 0.0
    %2079 = vmatpush2.xpose.msra.mxu0 0.0
    %2080 = vmatprep.subr.mxu0 0.0
    %2081 = vmatpush2.xpose.msra.mxu0 0.0
    %2082 = vmatprep.subr.mxu0 0.0
    %2083 = vmatpush2.xpose.msra.mxu0 0.0
    %2084 = vmatprep.subr.mxu0 0.0
    %2085 = vmatpush2.xpose.msra.mxu0 0.0
    %2086 = vmatprep.subr.mxu0 0.0
    %2087 = vmatpush2.xpose.msra.mxu0 0.0
    %2088 = vmatprep.subr.mxu0 0.0
    %2089 = vmatpush2.xpose.msra.mxu0 0.0
    %2090 = vmatprep.subr.mxu0 0.0
    %2091 = vmatpush2.xpose.msra.mxu0 0.0
    %2092 = vmatprep.subr.mxu0 0.0
    %2093 = vmatpush2.xpose.msra.mxu0 0.0
    %2094 = vmatprep.subr.mxu0 0.0
    %2095 = vmatpush2.xpose.msra.mxu0 0.0
    %2096 = vmatprep.subr.mxu0 0.0
    %2097 = vmatpush2.xpose.msra.mxu0 0.0
    %2098 = vmatprep.subr.mxu0 0.0
    %2099 = vmatpush2.xpose.msra.mxu0 0.0
    %2100 = vmatprep.mubr.f32.mxu0 0.0
    %2101 = vmatmul.mubr.f32.gmra.mxu0 %v2028
    %v2102 = vpop.f32.mrf.mxu0
    %v2103 = vadd.f32 %v26, %v2102
    %v2104 = vpop.f32.mrf.mxu0
    %2105 = vmatprep.mubr.f32.mxu0 0.0
    %2106 = vmatmul.mubr.f32.gmra.mxu0 %v2030
    %v2107 = vpop.f32.mrf.mxu0
    %v2108 = vadd.f32 %v27, %v2107
    %v2109 = vpop.f32.mrf.mxu0
    %2110 = vdwg.mxu0
    %v2111 = vsel %vm213, %v2103, -inf
    %2112 = vmax.xlane.f32.xlu0 %v2111
    %v2113 = vpop.xlane.xlu0 %2112
    %v2114 = vsel %vm213, %v2108, -inf
    %2115 = vmax.xlane.f32.xlu0 %v2114
    %v2116 = vpop.xlane.xlu0 %2115
    %v2117 = vsub.f32 %v2103, %v2113
    %v2118 = vsub.f32 %v2108, %v2116
    %v2119 = vmul.f32 %v2117, 1.442695
    %v2120 = vpow.pop %v2119
    %v2121 = vmul.f32 %v2118, 1.442695
    %v2122 = vpow.pop %v2121
    %v2123 = vsel %vm213, %v2120, 0.0
    %2124 = vadd.xlane.f32.xlu0 %v2123
    %v2125 = vpop.xlane.xlu0 %2124
    %v2126 = vsel %vm213, %v2122, 0.0
    %2127 = vadd.xlane.f32.xlu0 %v2126
    %v2128 = vpop.xlane.xlu0 %2127
    %v2129 = vrcp.pop %v2125
    %v2130 = vrcp.pop %v2128
    %v2131 = vmul.f32 %v2120, %v2129
    %v2132 = vmul.f32 %v2122, %v2130
    %2133 = vrot.lane.b32.xlu0 %v1414, 40
    %v2134 = vpop.permute.xlu0 %2133
    %2135 = vrot.lane.b32.xlu0 %v1419, 40
    %v2136 = vpop.permute.xlu0 %2135
    %v2140 = vsel %vm213, %v2131, 0
    %v2143 = vsel %vm213, %v2132, 0
    %2145 = vmatprep.subr.mxu0 0.0
    %2146 = vmatpush1.msra.mxu0 0.0
    %2147 = vmatprep.subr.mxu0 0.0
    %2148 = vmatpush1.msra.mxu0 0.0
    %2149 = vmatprep.subr.mxu0 0.0
    %2150 = vmatpush1.msra.mxu0 0.0
    %2151 = vmatprep.subr.mxu0 0.0
    %2152 = vmatpush1.msra.mxu0 0.0
    %2153 = vmatprep.subr.mxu0 0.0
    %2154 = vmatpush1.msra.mxu0 0.0
    %2155 = vmatprep.subr.mxu0 0.0
    %2156 = vmatpush1.msra.mxu0 0.0
    %2157 = vmatprep.subr.mxu0 0.0
    %2158 = vmatpush1.msra.mxu0 0.0
    %2159 = vmatprep.subr.mxu0 0.0
    %2160 = vmatpush1.msra.mxu0 0.0
    %2161 = vmatprep.subr.mxu0 0.0
    %2162 = vmatpush1.msra.mxu0 0.0
    %2163 = vmatprep.subr.mxu0 0.0
    %2164 = vmatpush1.msra.mxu0 0.0
    %2165 = vmatprep.subr.mxu0 0.0
    %2166 = vmatpush1.msra.mxu0 0.0
    %2167 = vmatprep.subr.mxu0 0.0
    %2168 = vmatpush1.msra.mxu0 0.0
    %2169 = vmatprep.subr.mxu0 0.0
    %2170 = vmatpush1.msra.mxu0 0.0
    %2171 = vmatprep.subr.mxu0 0.0
    %2172 = vmatpush1.msra.mxu0 0.0
    %2173 = vmatprep.subr.mxu0 0.0
    %2174 = vmatpush1.msra.mxu0 %v2136
    %2175 = vmatprep.subr.mxu0 0.0
    %2176 = vmatpush1.msra.mxu0 %v2134
    %2177 = vmatprep.subr.mxu0 0.0
    %2178 = vmatpush2.msra.mxu0 0.0
    %2179 = vmatprep.subr.mxu0 0.0
    %2180 = vmatpush2.msra.mxu0 0.0
    %2181 = vmatprep.subr.mxu0 0.0
    %2182 = vmatpush2.msra.mxu0 0.0
    %2183 = vmatprep.subr.mxu0 0.0
    %2184 = vmatpush2.msra.mxu0 0.0
    %2185 = vmatprep.subr.mxu0 0.0
    %2186 = vmatpush2.msra.mxu0 0.0
    %2187 = vmatprep.subr.mxu0 0.0
    %2188 = vmatpush2.msra.mxu0 0.0
    %2189 = vmatprep.subr.mxu0 0.0
    %2190 = vmatpush2.msra.mxu0 0.0
    %2191 = vmatprep.subr.mxu0 0.0
    %2192 = vmatpush2.msra.mxu0 0.0
    %2193 = vmatprep.subr.mxu0 0.0
    %2194 = vmatpush2.msra.mxu0 0.0
    %2195 = vmatprep.subr.mxu0 0.0
    %2196 = vmatpush2.msra.mxu0 0.0
    %2197 = vmatprep.subr.mxu0 0.0
    %2198 = vmatpush2.msra.mxu0 0.0
    %2199 = vmatprep.subr.mxu0 0.0
    %2200 = vmatpush2.msra.mxu0 0.0
    %2201 = vmatprep.subr.mxu0 0.0
    %2202 = vmatpush2.msra.mxu0 0.0
    %2203 = vmatprep.subr.mxu0 0.0
    %2204 = vmatpush2.msra.mxu0 0.0
    %2205 = vmatprep.subr.mxu0 0.0
    %2206 = vmatpush2.msra.mxu0 0.0
    %2207 = vmatprep.subr.mxu0 0.0
    %2208 = vmatpush2.msra.mxu0 0.0
    %2209 = vmatprep.mubr.f32.mxu0 0.0
    %2210 = vmatmul.mubr.f32.gmra.mxu0 %v2140
    %v2211 = vpop.f32.mrf.mxu0
    %v2212 = vadd.f32 0.0, %v2211
    %v2213 = vpop.f32.mrf.mxu0
    %2214 = vmatprep.mubr.f32.mxu0 0.0
    %2215 = vmatmul.mubr.f32.gmra.mxu0 %v2143
    %v2216 = vpop.f32.mrf.mxu0
    %v2217 = vadd.f32 0.0, %v2216
    %v2218 = vpop.f32.mrf.mxu0
    %2219 = vdwg.mxu0
    %2222 = vrot.lane.b32.xlu0 %v1812, 8
    %v2223 = vpop.permute.xlu0 %2222
    %2224 = vrot.lane.b32.xlu0 %v1817, 8
    %v2225 = vpop.permute.xlu0 %2224
    %2230 = vrot.lane.b32.xlu0 %v2012, 16
    %v2231 = vpop.permute.xlu0 %2230
    %2232 = vrot.lane.b32.xlu0 %v2017, 16
    %v2233 = vpop.permute.xlu0 %2232
    %2238 = vrot.lane.b32.xlu0 %v2212, 24
    %v2239 = vpop.permute.xlu0 %2238
    %2240 = vrot.lane.b32.xlu0 %v2217, 24
    %v2241 = vpop.permute.xlu0 %2240
    %v2244 = vsel %vm129, %v1612, %v2223
    %v2245 = vsel %vm129, %v1617, %v2225
    %v2246 = vsel %vm213, %v2244, %v2231
    %v2247 = vsel %vm213, %v2245, %v2233
    %v2248 = vsel %vm951, %v2246, %v2239
    %v2249 = vsel %vm951, %v2247, %v2241
    %v2250 = vlaneseq
    %v2251 = vshrl.u32 %v2250, 7
    %v2252 = vsub.s32 1, %v2251
    %v2253 = vrot.slane %v1336, %v2252
    %2258 = vrot.lane.b32.xlu0 %v1327, 32
    %v2259 = vpop.permute.xlu0 %2258
    %2260 = vrot.lane.b32.xlu0 %v1328, 32
    %v2261 = vpop.permute.xlu0 %2260
    %2262 = vrot.lane.b32.xlu0 %v1329, 32
    %v2263 = vpop.permute.xlu0 %2262
    %2264 = vrot.lane.b32.xlu0 %v1330, 32
    %v2265 = vpop.permute.xlu0 %2264
    %v2271 = vsel %vm41, %v2248, 0
    %v2274 = vsel %vm41, %v2249, 0
    %2276 = vmatprep.subr.mxu0 0.0
    %2277 = vmatpush1.msra.mxu0 0.0
    %2278 = vmatprep.subr.mxu0 0.0
    %2279 = vmatpush1.msra.mxu0 0.0
    %2280 = vmatprep.subr.mxu0 0.0
    %2281 = vmatpush1.msra.mxu0 0.0
    %2282 = vmatprep.subr.mxu0 0.0
    %2283 = vmatpush1.msra.mxu0 0.0
    %2284 = vmatprep.subr.mxu0 0.0
    %2285 = vmatpush1.msra.mxu0 0.0
    %2286 = vmatprep.subr.mxu0 0.0
    %2287 = vmatpush1.msra.mxu0 0.0
    %2288 = vmatprep.subr.mxu0 0.0
    %2289 = vmatpush1.msra.mxu0 0.0
    %2290 = vmatprep.subr.mxu0 0.0
    %2291 = vmatpush1.msra.mxu0 0.0
    %2292 = vmatprep.subr.mxu0 0.0
    %2293 = vmatpush1.msra.mxu0 0.0
    %2294 = vmatprep.subr.mxu0 0.0
    %2295 = vmatpush1.msra.mxu0 0.0
    %2296 = vmatprep.subr.mxu0 0.0
    %2297 = vmatpush1.msra.mxu0 0.0
    %2298 = vmatprep.subr.mxu0 0.0
    %2299 = vmatpush1.msra.mxu0 0.0
    %2300 = vmatprep.subr.mxu0 0.0
    %2301 = vmatpush1.msra.mxu0 %v2265
    %2302 = vmatprep.subr.mxu0 0.0
    %2303 = vmatpush1.msra.mxu0 %v2263
    %2304 = vmatprep.subr.mxu0 0.0
    %2305 = vmatpush1.msra.mxu0 %v2261
    %2306 = vmatprep.subr.mxu0 0.0
    %2307 = vmatpush1.msra.mxu0 %v2259
    %2308 = vmatprep.subr.mxu0 0.0
    %2309 = vmatpush2.msra.mxu0 0.0
    %2310 = vmatprep.subr.mxu0 0.0
    %2311 = vmatpush2.msra.mxu0 0.0
    %2312 = vmatprep.subr.mxu0 0.0
    %2313 = vmatpush2.msra.mxu0 0.0
    %2314 = vmatprep.subr.mxu0 0.0
    %2315 = vmatpush2.msra.mxu0 0.0
    %2316 = vmatprep.subr.mxu0 0.0
    %2317 = vmatpush2.msra.mxu0 0.0
    %2318 = vmatprep.subr.mxu0 0.0
    %2319 = vmatpush2.msra.mxu0 0.0
    %2320 = vmatprep.subr.mxu0 0.0
    %2321 = vmatpush2.msra.mxu0 0.0
    %2322 = vmatprep.subr.mxu0 0.0
    %2323 = vmatpush2.msra.mxu0 0.0
    %2324 = vmatprep.subr.mxu0 0.0
    %2325 = vmatpush2.msra.mxu0 0.0
    %2326 = vmatprep.subr.mxu0 0.0
    %2327 = vmatpush2.msra.mxu0 0.0
    %2328 = vmatprep.subr.mxu0 0.0
    %2329 = vmatpush2.msra.mxu0 0.0
    %2330 = vmatprep.subr.mxu0 0.0
    %2331 = vmatpush2.msra.mxu0 0.0
    %2332 = vmatprep.subr.mxu0 0.0
    %2333 = vmatpush2.msra.mxu0 0.0
    %2334 = vmatprep.subr.mxu0 0.0
    %2335 = vmatpush2.msra.mxu0 0.0
    %2336 = vmatprep.subr.mxu0 0.0
    %2337 = vmatpush2.msra.mxu0 0.0
    %2338 = vmatprep.subr.mxu0 0.0
    %2339 = vmatpush2.msra.mxu0 0.0
    %2340 = vmatprep.mubr.f32.mxu0 0.0
    %2341 = vmatmul.mubr.f32.gmra.mxu0 %v2271
    %v2342 = vpop.f32.mrf.mxu0
    %v2343 = vadd.f32 %v2253, %v2342
    %v2344 = vpop.f32.mrf.mxu0
    %2345 = vmatprep.mubr.f32.mxu0 0.0
    %2346 = vmatmul.mubr.f32.gmra.mxu0 %v2274
    %v2347 = vpop.f32.mrf.mxu0
    %v2348 = vadd.f32 %v2253, %v2347
    %v2349 = vpop.f32.mrf.mxu0
    %2350 = vdwg.mxu0
    %v2351 = vadd.f32 %v1324, %v2343
    %v2352 = vadd.f32 %v1325, %v2348
    %v2353 = vsel %vm41, %v2351, 0.0
    %2354 = vadd.xlane.f32.xlu0 %v2353
    %v2355 = vpop.xlane.xlu0 %2354
    %v2356 = vsel %vm41, %v2352, 0.0
    %2357 = vadd.xlane.f32.xlu0 %v2356
    %v2358 = vpop.xlane.xlu0 %2357
    %v2359 = vmul.f32 %v2355, %v1063
    %v2360 = vmul.f32 %v2358, %v1063
    %v2361 = vsub.f32 %v2351, %v2359
    %v2362 = vsub.f32 %v2352, %v2360
    %v2363 = vmul.f32 %v2361, %v2361
    %v2364 = vmul.f32 %v2362, %v2362
    %v2365 = vsel %vm41, %v2363, 0.0
    %2366 = vadd.xlane.f32.xlu0 %v2365
    %v2367 = vpop.xlane.xlu0 %2366
    %v2368 = vsel %vm41, %v2364, 0.0
    %2369 = vadd.xlane.f32.xlu0 %v2368
    %v2370 = vpop.xlane.xlu0 %2369
    %v2371 = vmul.f32 %v2367, %v1063
    %v2372 = vmul.f32 %v2370, %v1063
    %v2373 = vadd.f32 %v2371, 1e-12
    %v2374 = vadd.f32 %v2372, 1e-12
    %v2375 = vrsqrt.pop %v2373
    %v2376 = vrsqrt.pop %v2374
    %v2377 = vmul.f32 %v2361, %v2375
    %v2378 = vmul.f32 %v2362, %v2376
    %v2379 = vlaneseq
    %v2380 = vshrl.u32 %v2379, 7
    %v2381 = vsub.s32 2, %v2380
    %v2382 = vrot.slane %v1336, %v2381
    %v2383 = vmul.f32 %v2377, %v2382
    %v2384 = vmul.f32 %v2378, %v2382
    %v2385 = vlaneseq
    %v2386 = vshrl.u32 %v2385, 7
    %v2387 = vsub.s32 3, %v2386
    %v2388 = vrot.slane %v1336, %v2387
    %v2389 = vadd.f32 %v2383, %v2388
    %v2390 = vadd.f32 %v2384, %v2388
    %v2391 = vlaneseq
    %v2392 = vshrl.u32 %v2391, 7
    %v2393 = vsub.s32 4, %v2392
    %v2394 = vrot.slane %v1336, %v2393
    %v2396 = vsel %vm41, %v2389, 0
    %v2399 = vsel %vm41, %v2390, 0
    %2401 = vmatprep.subr.mxu0 0.0
    %2402 = vmatpush1.msra.mxu0 0.0
    %2403 = vmatprep.subr.mxu0 0.0
    %2404 = vmatpush1.msra.mxu0 0.0
    %2405 = vmatprep.subr.mxu0 0.0
    %2406 = vmatpush1.msra.mxu0 0.0
    %2407 = vmatprep.subr.mxu0 0.0
    %2408 = vmatpush1.msra.mxu0 0.0
    %2409 = vmatprep.subr.mxu0 0.0
    %2410 = vmatpush1.msra.mxu0 0.0
    %2411 = vmatprep.subr.mxu0 0.0
    %2412 = vmatpush1.msra.mxu0 0.0
    %2413 = vmatprep.subr.mxu0 0.0
    %2414 = vmatpush1.msra.mxu0 0.0
    %2415 = vmatprep.subr.mxu0 0.0
    %2416 = vmatpush1.msra.mxu0 0.0
    %2417 = vmatprep.subr.mxu0 0.0
    %2418 = vmatpush1.msra.mxu0 0.0
    %2419 = vmatprep.subr.mxu0 0.0
    %2420 = vmatpush1.msra.mxu0 0.0
    %2421 = vmatprep.subr.mxu0 0.0
    %2422 = vmatpush1.msra.mxu0 0.0
    %2423 = vmatprep.subr.mxu0 0.0
    %2424 = vmatpush1.msra.mxu0 0.0
    %2425 = vmatprep.subr.mxu0 0.0
    %2426 = vmatpush1.msra.mxu0 %v1334
    %2427 = vmatprep.subr.mxu0 0.0
    %2428 = vmatpush1.msra.mxu0 %v1333
    %2429 = vmatprep.subr.mxu0 0.0
    %2430 = vmatpush1.msra.mxu0 %v1332
    %2431 = vmatprep.subr.mxu0 0.0
    %2432 = vmatpush1.msra.mxu0 %v1331
    %2433 = vmatprep.subr.mxu0 0.0
    %2434 = vmatpush2.msra.mxu0 0.0
    %2435 = vmatprep.subr.mxu0 0.0
    %2436 = vmatpush2.msra.mxu0 0.0
    %2437 = vmatprep.subr.mxu0 0.0
    %2438 = vmatpush2.msra.mxu0 0.0
    %2439 = vmatprep.subr.mxu0 0.0
    %2440 = vmatpush2.msra.mxu0 0.0
    %2441 = vmatprep.subr.mxu0 0.0
    %2442 = vmatpush2.msra.mxu0 0.0
    %2443 = vmatprep.subr.mxu0 0.0
    %2444 = vmatpush2.msra.mxu0 0.0
    %2445 = vmatprep.subr.mxu0 0.0
    %2446 = vmatpush2.msra.mxu0 0.0
    %2447 = vmatprep.subr.mxu0 0.0
    %2448 = vmatpush2.msra.mxu0 0.0
    %2449 = vmatprep.subr.mxu0 0.0
    %2450 = vmatpush2.msra.mxu0 0.0
    %2451 = vmatprep.subr.mxu0 0.0
    %2452 = vmatpush2.msra.mxu0 0.0
    %2453 = vmatprep.subr.mxu0 0.0
    %2454 = vmatpush2.msra.mxu0 0.0
    %2455 = vmatprep.subr.mxu0 0.0
    %2456 = vmatpush2.msra.mxu0 0.0
    %2457 = vmatprep.subr.mxu0 0.0
    %2458 = vmatpush2.msra.mxu0 0.0
    %2459 = vmatprep.subr.mxu0 0.0
    %2460 = vmatpush2.msra.mxu0 0.0
    %2461 = vmatprep.subr.mxu0 0.0
    %2462 = vmatpush2.msra.mxu0 0.0
    %2463 = vmatprep.subr.mxu0 0.0
    %2464 = vmatpush2.msra.mxu0 0.0
    %2465 = vmatprep.mubr.f32.mxu0 0.0
    %2466 = vmatmul.mubr.f32.gmra.mxu0 %v2396
    %v2467 = vpop.f32.mrf.mxu0
    %v2468 = vadd.f32 %v2394, %v2467
    %v2469 = vpop.f32.mrf.mxu0
    %2470 = vmatprep.mubr.f32.mxu0 0.0
    %2471 = vmatmul.mubr.f32.gmra.mxu0 %v2399
    %v2472 = vpop.f32.mrf.mxu0
    %v2473 = vadd.f32 %v2394, %v2472
    %v2474 = vpop.f32.mrf.mxu0
    %2475 = vdwg.mxu0
    %v2476 = vmul.f32 %v2468, 0.5
    %v2477 = vmul.f32 %v2473, 0.5
    %v2478 = vmul.f32 %v2468, 0.70710677
    %v2479 = vmul.f32 %v2473, 0.70710677
    %v2480 = verf.f32.pop %v2478
    %v2481 = verf.f32.pop %v2479
    %v2482 = vadd.f32 %v2480, 1.0
    %v2483 = vadd.f32 %v2481, 1.0
    %v2484 = vmul.f32 %v2476, %v2482
    %v2485 = vmul.f32 %v2477, %v2483
    %s2486 = scalar_lea.vmem %s3, 128
    %v2487 = vld [vmem:[%s2486] sm:$0xff]
    %v2488 = vld [vmem:[%s2486 + $0x8] sm:$0xff]
    %v2489 = vld [vmem:[%s2486 + $0x10] sm:$0xff]
    %v2490 = vld [vmem:[%s2486 + $0x18] sm:$0xff]
    %v2491 = vld [vmem:[%s2486 + $0x20] sm:$0xff]
    %v2492 = vld [vmem:[%s2486 + $0x28] sm:$0xff]
    %v2493 = vld [vmem:[%s2486 + $0x30] sm:$0xff]
    %v2494 = vld [vmem:[%s2486 + $0x38] sm:$0xff]
    %v2495 = vld [vmem:[%s2486 + $0x40] sm:$0xff]
    %v2496 = vld [vmem:[%s2486 + $0x48] sm:$0xff]
    %v2497 = vld [vmem:[%s2486 + $0x50] sm:$0xff]
    %v2498 = vld [vmem:[%s2486 + $0x58] sm:$0xff]
    %v2499 = vld [vmem:[%s2486 + $0x60] sm:$0xff]
    %v2500 = vld [vmem:[%s2486 + $0x68] sm:$0xff]
    %v2501 = vld [vmem:[%s2486 + $0x70] sm:$0xff]
    %v2502 = vld [vmem:[%s2486 + $0x78] sm:$0xff]
    %v2503 = vlaneseq
    %v2504 = vshrl.u32 %v2503, 7
    %v2505 = vsub.s32 5, %v2504
    %v2506 = vrot.slane %v1336, %v2505
    %2507 = vmatprep.subr.mxu0 0.0
    %2508 = vmatpush1.msra.mxu0 %v2502
    %2509 = vmatprep.subr.mxu0 0.0
    %2510 = vmatpush1.msra.mxu0 %v2501
    %2511 = vmatprep.subr.mxu0 0.0
    %2512 = vmatpush1.msra.mxu0 %v2500
    %2513 = vmatprep.subr.mxu0 0.0
    %2514 = vmatpush1.msra.mxu0 %v2499
    %2515 = vmatprep.subr.mxu0 0.0
    %2516 = vmatpush1.msra.mxu0 %v2498
    %2517 = vmatprep.subr.mxu0 0.0
    %2518 = vmatpush1.msra.mxu0 %v2497
    %2519 = vmatprep.subr.mxu0 0.0
    %2520 = vmatpush1.msra.mxu0 %v2496
    %2521 = vmatprep.subr.mxu0 0.0
    %2522 = vmatpush1.msra.mxu0 %v2495
    %2523 = vmatprep.subr.mxu0 0.0
    %2524 = vmatpush1.msra.mxu0 %v2494
    %2525 = vmatprep.subr.mxu0 0.0
    %2526 = vmatpush1.msra.mxu0 %v2493
    %2527 = vmatprep.subr.mxu0 0.0
    %2528 = vmatpush1.msra.mxu0 %v2492
    %2529 = vmatprep.subr.mxu0 0.0
    %2530 = vmatpush1.msra.mxu0 %v2491
    %2531 = vmatprep.subr.mxu0 0.0
    %2532 = vmatpush1.msra.mxu0 %v2490
    %2533 = vmatprep.subr.mxu0 0.0
    %2534 = vmatpush1.msra.mxu0 %v2489
    %2535 = vmatprep.subr.mxu0 0.0
    %2536 = vmatpush1.msra.mxu0 %v2488
    %2537 = vmatprep.subr.mxu0 0.0
    %2538 = vmatpush1.msra.mxu0 %v2487
    %2539 = vmatprep.subr.mxu0 0.0
    %2540 = vmatpush2.msra.mxu0 0.0
    %2541 = vmatprep.subr.mxu0 0.0
    %2542 = vmatpush2.msra.mxu0 0.0
    %2543 = vmatprep.subr.mxu0 0.0
    %2544 = vmatpush2.msra.mxu0 0.0
    %2545 = vmatprep.subr.mxu0 0.0
    %2546 = vmatpush2.msra.mxu0 0.0
    %2547 = vmatprep.subr.mxu0 0.0
    %2548 = vmatpush2.msra.mxu0 0.0
    %2549 = vmatprep.subr.mxu0 0.0
    %2550 = vmatpush2.msra.mxu0 0.0
    %2551 = vmatprep.subr.mxu0 0.0
    %2552 = vmatpush2.msra.mxu0 0.0
    %2553 = vmatprep.subr.mxu0 0.0
    %2554 = vmatpush2.msra.mxu0 0.0
    %2555 = vmatprep.subr.mxu0 0.0
    %2556 = vmatpush2.msra.mxu0 0.0
    %2557 = vmatprep.subr.mxu0 0.0
    %2558 = vmatpush2.msra.mxu0 0.0
    %2559 = vmatprep.subr.mxu0 0.0
    %2560 = vmatpush2.msra.mxu0 0.0
    %2561 = vmatprep.subr.mxu0 0.0
    %2562 = vmatpush2.msra.mxu0 0.0
    %2563 = vmatprep.subr.mxu0 0.0
    %2564 = vmatpush2.msra.mxu0 0.0
    %2565 = vmatprep.subr.mxu0 0.0
    %2566 = vmatpush2.msra.mxu0 0.0
    %2567 = vmatprep.subr.mxu0 0.0
    %2568 = vmatpush2.msra.mxu0 0.0
    %2569 = vmatprep.subr.mxu0 0.0
    %2570 = vmatpush2.msra.mxu0 0.0
    %2571 = vmatprep.mubr.f32.mxu0 0.0
    %2572 = vmatmul.mubr.f32.gmra.mxu0 %v2484
    %v2573 = vpop.f32.mrf.mxu0
    %v2574 = vadd.f32 %v2506, %v2573
    %v2575 = vpop.f32.mrf.mxu0
    %2576 = vmatprep.mubr.f32.mxu0 0.0
    %2577 = vmatmul.mubr.f32.gmra.mxu0 %v2485
    %v2578 = vpop.f32.mrf.mxu0
    %v2579 = vadd.f32 %v2506, %v2578
    %v2580 = vpop.f32.mrf.mxu0
    %2581 = vdwg.mxu0
    %v2582 = vadd.f32 %v2389, %v2574
    %v2583 = vadd.f32 %v2390, %v2579
    %v2584 = vsel %vm41, %v2582, 0.0
    %2585 = vadd.xlane.f32.xlu0 %v2584
    %v2586 = vpop.xlane.xlu0 %2585
    %v2587 = vsel %vm41, %v2583, 0.0
    %2588 = vadd.xlane.f32.xlu0 %v2587
    %v2589 = vpop.xlane.xlu0 %2588
    %v2590 = vmul.f32 %v2586, %v1063
    %v2591 = vmul.f32 %v2589, %v1063
    %v2592 = vsub.f32 %v2582, %v2590
    %v2593 = vsub.f32 %v2583, %v2591
    %v2594 = vmul.f32 %v2592, %v2592
    %v2595 = vmul.f32 %v2593, %v2593
    %v2596 = vsel %vm41, %v2594, 0.0
    %2597 = vadd.xlane.f32.xlu0 %v2596
    %v2598 = vpop.xlane.xlu0 %2597
    %v2599 = vsel %vm41, %v2595, 0.0
    %2600 = vadd.xlane.f32.xlu0 %v2599
    %v2601 = vpop.xlane.xlu0 %2600
    %v2602 = vmul.f32 %v2598, %v1063
    %v2603 = vmul.f32 %v2601, %v1063
    %v2604 = vadd.f32 %v2602, 1e-12
    %v2605 = vadd.f32 %v2603, 1e-12
    %v2606 = vrsqrt.pop %v2604
    %v2607 = vrsqrt.pop %v2605
    %v2608 = vmul.f32 %v2592, %v2606
    %v2609 = vmul.f32 %v2593, %v2607
    %v2610 = vlaneseq
    %v2611 = vshrl.u32 %v2610, 7
    %v2612 = vsub.s32 6, %v2611
    %v2613 = vrot.slane %v1336, %v2612
    %v2614 = vmul.f32 %v2608, %v2613
    %v2615 = vmul.f32 %v2609, %v2613
    %v2616 = vlaneseq
    %v2617 = vshrl.u32 %v2616, 7
    %v2618 = vsub.s32 7, %v2617
    %v2619 = vrot.slane %v1336, %v2618
    %v2620 = vadd.f32 %v2614, %v2619
    %v2621 = vadd.f32 %v2615, %v2619
    %s2622 = scalar_lea.vmem %s2, 128
    %v2623 = vld [vmem:[%s2622] sm:$0xff]
    %v2624 = vld [vmem:[%s2622 + $0x8] sm:$0xff]
    %v2625 = vld [vmem:[%s2622 + $0x10] sm:$0xff]
    %v2626 = vld [vmem:[%s2622 + $0x18] sm:$0xff]
    %v2627 = vld [vmem:[%s2622 + $0x20] sm:$0xff]
    %v2628 = vld [vmem:[%s2622 + $0x28] sm:$0xff]
    %v2629 = vld [vmem:[%s2622 + $0x30] sm:$0xff]
    %v2630 = vld [vmem:[%s2622 + $0x38] sm:$0xff]
    %s2631 = scalar_lea.vmem %s4, 16
    %v2632 = vld [vmem:[%s2631] sm:$0xff]
    %v2633 = vlaneseq
    %v2634 = vshrl.u32 %v2633, 7
    %v2635 = vsub.s32 0, %v2634
    %v2636 = vrot.slane %v2632, %v2635
    %v2638 = vsel %vm41, %v2620, 0
    %v2641 = vsel %vm41, %v2621, 0
    %2643 = vmatprep.subr.mxu0 0.0
    %2644 = vmatpush1.msra.mxu0 0.0
    %2645 = vmatprep.subr.mxu0 0.0
    %2646 = vmatpush1.msra.mxu0 0.0
    %2647 = vmatprep.subr.mxu0 0.0
    %2648 = vmatpush1.msra.mxu0 0.0
    %2649 = vmatprep.subr.mxu0 0.0
    %2650 = vmatpush1.msra.mxu0 0.0
    %2651 = vmatprep.subr.mxu0 0.0
    %2652 = vmatpush1.msra.mxu0 0.0
    %2653 = vmatprep.subr.mxu0 0.0
    %2654 = vmatpush1.msra.mxu0 0.0
    %2655 = vmatprep.subr.mxu0 0.0
    %2656 = vmatpush1.msra.mxu0 0.0
    %2657 = vmatprep.subr.mxu0 0.0
    %2658 = vmatpush1.msra.mxu0 0.0
    %2659 = vmatprep.subr.mxu0 0.0
    %2660 = vmatpush1.msra.mxu0 0.0
    %2661 = vmatprep.subr.mxu0 0.0
    %2662 = vmatpush1.msra.mxu0 0.0
    %2663 = vmatprep.subr.mxu0 0.0
    %2664 = vmatpush1.msra.mxu0 0.0
    %2665 = vmatprep.subr.mxu0 0.0
    %2666 = vmatpush1.msra.mxu0 0.0
    %2667 = vmatprep.subr.mxu0 0.0
    %2668 = vmatpush1.msra.mxu0 %v2626
    %2669 = vmatprep.subr.mxu0 0.0
    %2670 = vmatpush1.msra.mxu0 %v2625
    %2671 = vmatprep.subr.mxu0 0.0
    %2672 = vmatpush1.msra.mxu0 %v2624
    %2673 = vmatprep.subr.mxu0 0.0
    %2674 = vmatpush1.msra.mxu0 %v2623
    %2675 = vmatprep.subr.mxu0 0.0
    %2676 = vmatpush2.msra.mxu0 0.0
    %2677 = vmatprep.subr.mxu0 0.0
    %2678 = vmatpush2.msra.mxu0 0.0
    %2679 = vmatprep.subr.mxu0 0.0
    %2680 = vmatpush2.msra.mxu0 0.0
    %2681 = vmatprep.subr.mxu0 0.0
    %2682 = vmatpush2.msra.mxu0 0.0
    %2683 = vmatprep.subr.mxu0 0.0
    %2684 = vmatpush2.msra.mxu0 0.0
    %2685 = vmatprep.subr.mxu0 0.0
    %2686 = vmatpush2.msra.mxu0 0.0
    %2687 = vmatprep.subr.mxu0 0.0
    %2688 = vmatpush2.msra.mxu0 0.0
    %2689 = vmatprep.subr.mxu0 0.0
    %2690 = vmatpush2.msra.mxu0 0.0
    %2691 = vmatprep.subr.mxu0 0.0
    %2692 = vmatpush2.msra.mxu0 0.0
    %2693 = vmatprep.subr.mxu0 0.0
    %2694 = vmatpush2.msra.mxu0 0.0
    %2695 = vmatprep.subr.mxu0 0.0
    %2696 = vmatpush2.msra.mxu0 0.0
    %2697 = vmatprep.subr.mxu0 0.0
    %2698 = vmatpush2.msra.mxu0 0.0
    %2699 = vmatprep.subr.mxu0 0.0
    %2700 = vmatpush2.msra.mxu0 0.0
    %2701 = vmatprep.subr.mxu0 0.0
    %2702 = vmatpush2.msra.mxu0 0.0
    %2703 = vmatprep.subr.mxu0 0.0
    %2704 = vmatpush2.msra.mxu0 0.0
    %2705 = vmatprep.subr.mxu0 0.0
    %2706 = vmatpush2.msra.mxu0 0.0
    %2707 = vmatprep.mubr.f32.mxu0 0.0
    %2708 = vmatmul.mubr.f32.gmra.mxu0 %v2638
    %v2709 = vpop.f32.mrf.mxu0
    %v2710 = vadd.f32 %v2636, %v2709
    %v2711 = vpop.f32.mrf.mxu0
    %2712 = vmatprep.mubr.f32.mxu0 0.0
    %2713 = vmatmul.mubr.f32.gmra.mxu0 %v2641
    %v2714 = vpop.f32.mrf.mxu0
    %v2715 = vadd.f32 %v2636, %v2714
    %v2716 = vpop.f32.mrf.mxu0
    %2717 = vdwg.mxu0
    %2720 = vrot.lane.b32.xlu0 %v2710, 96
    %v2721 = vpop.permute.xlu0 %2720
    %2722 = vrot.lane.b32.xlu0 %v2715, 96
    %v2723 = vpop.permute.xlu0 %2722
    %v2724 = vsel %vm129, %v2710, 0
    %v2726 = vsel %vm129, %v2715, 0
    %v2728 = vsel %vm129, %v2721, 0
    %v2730 = vsel %vm129, %v2723, 0
    %2732 = vmatprep.subr.mxu0 0.0
    %2733 = vmatpush1.xpose.msra.mxu0 0.0
    %2734 = vmatprep.subr.mxu0 0.0
    %2735 = vmatpush1.xpose.msra.mxu0 0.0
    %2736 = vmatprep.subr.mxu0 0.0
    %2737 = vmatpush1.xpose.msra.mxu0 0.0
    %2738 = vmatprep.subr.mxu0 0.0
    %2739 = vmatpush1.xpose.msra.mxu0 0.0
    %2740 = vmatprep.subr.mxu0 0.0
    %2741 = vmatpush1.xpose.msra.mxu0 0.0
    %2742 = vmatprep.subr.mxu0 0.0
    %2743 = vmatpush1.xpose.msra.mxu0 0.0
    %2744 = vmatprep.subr.mxu0 0.0
    %2745 = vmatpush1.xpose.msra.mxu0 0.0
    %2746 = vmatprep.subr.mxu0 0.0
    %2747 = vmatpush1.xpose.msra.mxu0 0.0
    %2748 = vmatprep.subr.mxu0 0.0
    %2749 = vmatpush1.xpose.msra.mxu0 0.0
    %2750 = vmatprep.subr.mxu0 0.0
    %2751 = vmatpush1.xpose.msra.mxu0 0.0
    %2752 = vmatprep.subr.mxu0 0.0
    %2753 = vmatpush1.xpose.msra.mxu0 0.0
    %2754 = vmatprep.subr.mxu0 0.0
    %2755 = vmatpush1.xpose.msra.mxu0 0.0
    %2756 = vmatprep.subr.mxu0 0.0
    %2757 = vmatpush1.xpose.msra.mxu0 0.0
    %2758 = vmatprep.subr.mxu0 0.0
    %2759 = vmatpush1.xpose.msra.mxu0 0.0
    %2760 = vmatprep.subr.mxu0 0.0
    %2761 = vmatpush1.xpose.msra.mxu0 %v2730
    %2762 = vmatprep.subr.mxu0 0.0
    %2763 = vmatpush1.xpose.msra.mxu0 %v2728
    %2764 = vmatprep.subr.mxu0 0.0
    %2765 = vmatpush2.xpose.msra.mxu0 0.0
    %2766 = vmatprep.subr.mxu0 0.0
    %2767 = vmatpush2.xpose.msra.mxu0 0.0
    %2768 = vmatprep.subr.mxu0 0.0
    %2769 = vmatpush2.xpose.msra.mxu0 0.0
    %2770 = vmatprep.subr.mxu0 0.0
    %2771 = vmatpush2.xpose.msra.mxu0 0.0
    %2772 = vmatprep.subr.mxu0 0.0
    %2773 = vmatpush2.xpose.msra.mxu0 0.0
    %2774 = vmatprep.subr.mxu0 0.0
    %2775 = vmatpush2.xpose.msra.mxu0 0.0
    %2776 = vmatprep.subr.mxu0 0.0
    %2777 = vmatpush2.xpose.msra.mxu0 0.0
    %2778 = vmatprep.subr.mxu0 0.0
    %2779 = vmatpush2.xpose.msra.mxu0 0.0
    %2780 = vmatprep.subr.mxu0 0.0
    %2781 = vmatpush2.xpose.msra.mxu0 0.0
    %2782 = vmatprep.subr.mxu0 0.0
    %2783 = vmatpush2.xpose.msra.mxu0 0.0
    %2784 = vmatprep.subr.mxu0 0.0
    %2785 = vmatpush2.xpose.msra.mxu0 0.0
    %2786 = vmatprep.subr.mxu0 0.0
    %2787 = vmatpush2.xpose.msra.mxu0 0.0
    %2788 = vmatprep.subr.mxu0 0.0
    %2789 = vmatpush2.xpose.msra.mxu0 0.0
    %2790 = vmatprep.subr.mxu0 0.0
    %2791 = vmatpush2.xpose.msra.mxu0 0.0
    %2792 = vmatprep.subr.mxu0 0.0
    %2793 = vmatpush2.xpose.msra.mxu0 0.0
    %2794 = vmatprep.subr.mxu0 0.0
    %2795 = vmatpush2.xpose.msra.mxu0 0.0
    %2796 = vmatprep.mubr.f32.mxu0 0.0
    %2797 = vmatmul.mubr.f32.gmra.mxu0 %v2724
    %v2798 = vpop.f32.mrf.mxu0
    %v2799 = vadd.f32 %v26, %v2798
    %v2800 = vpop.f32.mrf.mxu0
    %2801 = vmatprep.mubr.f32.mxu0 0.0
    %2802 = vmatmul.mubr.f32.gmra.mxu0 %v2726
    %v2803 = vpop.f32.mrf.mxu0
    %v2804 = vadd.f32 %v27, %v2803
    %v2805 = vpop.f32.mrf.mxu0
    %2806 = vdwg.mxu0
    %v2807 = vsel %vm213, %v2799, -inf
    %2808 = vmax.xlane.f32.xlu0 %v2807
    %v2809 = vpop.xlane.xlu0 %2808
    %v2810 = vsel %vm213, %v2804, -inf
    %2811 = vmax.xlane.f32.xlu0 %v2810
    %v2812 = vpop.xlane.xlu0 %2811
    %v2813 = vsub.f32 %v2799, %v2809
    %v2814 = vsub.f32 %v2804, %v2812
    %v2815 = vmul.f32 %v2813, 1.442695
    %v2816 = vpow.pop %v2815
    %v2817 = vmul.f32 %v2814, 1.442695
    %v2818 = vpow.pop %v2817
    %v2819 = vsel %vm213, %v2816, 0.0
    %2820 = vadd.xlane.f32.xlu0 %v2819
    %v2821 = vpop.xlane.xlu0 %2820
    %v2822 = vsel %vm213, %v2818, 0.0
    %2823 = vadd.xlane.f32.xlu0 %v2822
    %v2824 = vpop.xlane.xlu0 %2823
    %v2825 = vrcp.pop %v2821
    %v2826 = vrcp.pop %v2824
    %v2827 = vmul.f32 %v2816, %v2825
    %v2828 = vmul.f32 %v2818, %v2826
    %2829 = vrot.lane.b32.xlu0 %v2710, 64
    %v2830 = vpop.permute.xlu0 %2829
    %2831 = vrot.lane.b32.xlu0 %v2715, 64
    %v2832 = vpop.permute.xlu0 %2831
    %v2836 = vsel %vm213, %v2827, 0
    %v2839 = vsel %vm213, %v2828, 0
    %2841 = vmatprep.subr.mxu0 0.0
    %2842 = vmatpush1.msra.mxu0 0.0
    %2843 = vmatprep.subr.mxu0 0.0
    %2844 = vmatpush1.msra.mxu0 0.0
    %2845 = vmatprep.subr.mxu0 0.0
    %2846 = vmatpush1.msra.mxu0 0.0
    %2847 = vmatprep.subr.mxu0 0.0
    %2848 = vmatpush1.msra.mxu0 0.0
    %2849 = vmatprep.subr.mxu0 0.0
    %2850 = vmatpush1.msra.mxu0 0.0
    %2851 = vmatprep.subr.mxu0 0.0
    %2852 = vmatpush1.msra.mxu0 0.0
    %2853 = vmatprep.subr.mxu0 0.0
    %2854 = vmatpush1.msra.mxu0 0.0
    %2855 = vmatprep.subr.mxu0 0.0
    %2856 = vmatpush1.msra.mxu0 0.0
    %2857 = vmatprep.subr.mxu0 0.0
    %2858 = vmatpush1.msra.mxu0 0.0
    %2859 = vmatprep.subr.mxu0 0.0
    %2860 = vmatpush1.msra.mxu0 0.0
    %2861 = vmatprep.subr.mxu0 0.0
    %2862 = vmatpush1.msra.mxu0 0.0
    %2863 = vmatprep.subr.mxu0 0.0
    %2864 = vmatpush1.msra.mxu0 0.0
    %2865 = vmatprep.subr.mxu0 0.0
    %2866 = vmatpush1.msra.mxu0 0.0
    %2867 = vmatprep.subr.mxu0 0.0
    %2868 = vmatpush1.msra.mxu0 0.0
    %2869 = vmatprep.subr.mxu0 0.0
    %2870 = vmatpush1.msra.mxu0 %v2832
    %2871 = vmatprep.subr.mxu0 0.0
    %2872 = vmatpush1.msra.mxu0 %v2830
    %2873 = vmatprep.subr.mxu0 0.0
    %2874 = vmatpush2.msra.mxu0 0.0
    %2875 = vmatprep.subr.mxu0 0.0
    %2876 = vmatpush2.msra.mxu0 0.0
    %2877 = vmatprep.subr.mxu0 0.0
    %2878 = vmatpush2.msra.mxu0 0.0
    %2879 = vmatprep.subr.mxu0 0.0
    %2880 = vmatpush2.msra.mxu0 0.0
    %2881 = vmatprep.subr.mxu0 0.0
    %2882 = vmatpush2.msra.mxu0 0.0
    %2883 = vmatprep.subr.mxu0 0.0
    %2884 = vmatpush2.msra.mxu0 0.0
    %2885 = vmatprep.subr.mxu0 0.0
    %2886 = vmatpush2.msra.mxu0 0.0
    %2887 = vmatprep.subr.mxu0 0.0
    %2888 = vmatpush2.msra.mxu0 0.0
    %2889 = vmatprep.subr.mxu0 0.0
    %2890 = vmatpush2.msra.mxu0 0.0
    %2891 = vmatprep.subr.mxu0 0.0
    %2892 = vmatpush2.msra.mxu0 0.0
    %2893 = vmatprep.subr.mxu0 0.0
    %2894 = vmatpush2.msra.mxu0 0.0
    %2895 = vmatprep.subr.mxu0 0.0
    %2896 = vmatpush2.msra.mxu0 0.0
    %2897 = vmatprep.subr.mxu0 0.0
    %2898 = vmatpush2.msra.mxu0 0.0
    %2899 = vmatprep.subr.mxu0 0.0
    %2900 = vmatpush2.msra.mxu0 0.0
    %2901 = vmatprep.subr.mxu0 0.0
    %2902 = vmatpush2.msra.mxu0 0.0
    %2903 = vmatprep.subr.mxu0 0.0
    %2904 = vmatpush2.msra.mxu0 0.0
    %2905 = vmatprep.mubr.f32.mxu0 0.0
    %2906 = vmatmul.mubr.f32.gmra.mxu0 %v2836
    %v2907 = vpop.f32.mrf.mxu0
    %v2908 = vadd.f32 0.0, %v2907
    %v2909 = vpop.f32.mrf.mxu0
    %2910 = vmatprep.mubr.f32.mxu0 0.0
    %2911 = vmatmul.mubr.f32.gmra.mxu0 %v2839
    %v2912 = vpop.f32.mrf.mxu0
    %v2913 = vadd.f32 0.0, %v2912
    %v2914 = vpop.f32.mrf.mxu0
    %2915 = vdwg.mxu0
    %2916 = vrot.lane.b32.xlu0 %v2710, 120
    %v2917 = vpop.permute.xlu0 %2916
    %2918 = vrot.lane.b32.xlu0 %v2715, 120
    %v2919 = vpop.permute.xlu0 %2918
    %2920 = vrot.lane.b32.xlu0 %v2710, 88
    %v2921 = vpop.permute.xlu0 %2920
    %2922 = vrot.lane.b32.xlu0 %v2715, 88
    %v2923 = vpop.permute.xlu0 %2922
    %v2924 = vsel %vm129, %v2917, 0
    %v2926 = vsel %vm129, %v2919, 0
    %v2928 = vsel %vm129, %v2921, 0
    %v2930 = vsel %vm129, %v2923, 0
    %2932 = vmatprep.subr.mxu0 0.0
    %2933 = vmatpush1.xpose.msra.mxu0 0.0
    %2934 = vmatprep.subr.mxu0 0.0
    %2935 = vmatpush1.xpose.msra.mxu0 0.0
    %2936 = vmatprep.subr.mxu0 0.0
    %2937 = vmatpush1.xpose.msra.mxu0 0.0
    %2938 = vmatprep.subr.mxu0 0.0
    %2939 = vmatpush1.xpose.msra.mxu0 0.0
    %2940 = vmatprep.subr.mxu0 0.0
    %2941 = vmatpush1.xpose.msra.mxu0 0.0
    %2942 = vmatprep.subr.mxu0 0.0
    %2943 = vmatpush1.xpose.msra.mxu0 0.0
    %2944 = vmatprep.subr.mxu0 0.0
    %2945 = vmatpush1.xpose.msra.mxu0 0.0
    %2946 = vmatprep.subr.mxu0 0.0
    %2947 = vmatpush1.xpose.msra.mxu0 0.0
    %2948 = vmatprep.subr.mxu0 0.0
    %2949 = vmatpush1.xpose.msra.mxu0 0.0
    %2950 = vmatprep.subr.mxu0 0.0
    %2951 = vmatpush1.xpose.msra.mxu0 0.0
    %2952 = vmatprep.subr.mxu0 0.0
    %2953 = vmatpush1.xpose.msra.mxu0 0.0
    %2954 = vmatprep.subr.mxu0 0.0
    %2955 = vmatpush1.xpose.msra.mxu0 0.0
    %2956 = vmatprep.subr.mxu0 0.0
    %2957 = vmatpush1.xpose.msra.mxu0 0.0
    %2958 = vmatprep.subr.mxu0 0.0
    %2959 = vmatpush1.xpose.msra.mxu0 0.0
    %2960 = vmatprep.subr.mxu0 0.0
    %2961 = vmatpush1.xpose.msra.mxu0 %v2930
    %2962 = vmatprep.subr.mxu0 0.0
    %2963 = vmatpush1.xpose.msra.mxu0 %v2928
    %2964 = vmatprep.subr.mxu0 0.0
    %2965 = vmatpush2.xpose.msra.mxu0 0.0
    %2966 = vmatprep.subr.mxu0 0.0
    %2967 = vmatpush2.xpose.msra.mxu0 0.0
    %2968 = vmatprep.subr.mxu0 0.0
    %2969 = vmatpush2.xpose.msra.mxu0 0.0
    %2970 = vmatprep.subr.mxu0 0.0
    %2971 = vmatpush2.xpose.msra.mxu0 0.0
    %2972 = vmatprep.subr.mxu0 0.0
    %2973 = vmatpush2.xpose.msra.mxu0 0.0
    %2974 = vmatprep.subr.mxu0 0.0
    %2975 = vmatpush2.xpose.msra.mxu0 0.0
    %2976 = vmatprep.subr.mxu0 0.0
    %2977 = vmatpush2.xpose.msra.mxu0 0.0
    %2978 = vmatprep.subr.mxu0 0.0
    %2979 = vmatpush2.xpose.msra.mxu0 0.0
    %2980 = vmatprep.subr.mxu0 0.0
    %2981 = vmatpush2.xpose.msra.mxu0 0.0
    %2982 = vmatprep.subr.mxu0 0.0
    %2983 = vmatpush2.xpose.msra.mxu0 0.0
    %2984 = vmatprep.subr.mxu0 0.0
    %2985 = vmatpush2.xpose.msra.mxu0 0.0
    %2986 = vmatprep.subr.mxu0 0.0
    %2987 = vmatpush2.xpose.msra.mxu0 0.0
    %2988 = vmatprep.subr.mxu0 0.0
    %2989 = vmatpush2.xpose.msra.mxu0 0.0
    %2990 = vmatprep.subr.mxu0 0.0
    %2991 = vmatpush2.xpose.msra.mxu0 0.0
    %2992 = vmatprep.subr.mxu0 0.0
    %2993 = vmatpush2.xpose.msra.mxu0 0.0
    %2994 = vmatprep.subr.mxu0 0.0
    %2995 = vmatpush2.xpose.msra.mxu0 0.0
    %2996 = vmatprep.mubr.f32.mxu0 0.0
    %2997 = vmatmul.mubr.f32.gmra.mxu0 %v2924
    %v2998 = vpop.f32.mrf.mxu0
    %v2999 = vadd.f32 %v26, %v2998
    %v3000 = vpop.f32.mrf.mxu0
    %3001 = vmatprep.mubr.f32.mxu0 0.0
    %3002 = vmatmul.mubr.f32.gmra.mxu0 %v2926
    %v3003 = vpop.f32.mrf.mxu0
    %v3004 = vadd.f32 %v27, %v3003
    %v3005 = vpop.f32.mrf.mxu0
    %3006 = vdwg.mxu0
    %v3007 = vsel %vm213, %v2999, -inf
    %3008 = vmax.xlane.f32.xlu0 %v3007
    %v3009 = vpop.xlane.xlu0 %3008
    %v3010 = vsel %vm213, %v3004, -inf
    %3011 = vmax.xlane.f32.xlu0 %v3010
    %v3012 = vpop.xlane.xlu0 %3011
    %v3013 = vsub.f32 %v2999, %v3009
    %v3014 = vsub.f32 %v3004, %v3012
    %v3015 = vmul.f32 %v3013, 1.442695
    %v3016 = vpow.pop %v3015
    %v3017 = vmul.f32 %v3014, 1.442695
    %v3018 = vpow.pop %v3017
    %v3019 = vsel %vm213, %v3016, 0.0
    %3020 = vadd.xlane.f32.xlu0 %v3019
    %v3021 = vpop.xlane.xlu0 %3020
    %v3022 = vsel %vm213, %v3018, 0.0
    %3023 = vadd.xlane.f32.xlu0 %v3022
    %v3024 = vpop.xlane.xlu0 %3023
    %v3025 = vrcp.pop %v3021
    %v3026 = vrcp.pop %v3024
    %v3027 = vmul.f32 %v3016, %v3025
    %v3028 = vmul.f32 %v3018, %v3026
    %3029 = vrot.lane.b32.xlu0 %v2710, 56
    %v3030 = vpop.permute.xlu0 %3029
    %3031 = vrot.lane.b32.xlu0 %v2715, 56
    %v3032 = vpop.permute.xlu0 %3031
    %v3036 = vsel %vm213, %v3027, 0
    %v3039 = vsel %vm213, %v3028, 0
    %3041 = vmatprep.subr.mxu0 0.0
    %3042 = vmatpush1.msra.mxu0 0.0
    %3043 = vmatprep.subr.mxu0 0.0
    %3044 = vmatpush1.msra.mxu0 0.0
    %3045 = vmatprep.subr.mxu0 0.0
    %3046 = vmatpush1.msra.mxu0 0.0
    %3047 = vmatprep.subr.mxu0 0.0
    %3048 = vmatpush1.msra.mxu0 0.0
    %3049 = vmatprep.subr.mxu0 0.0
    %3050 = vmatpush1.msra.mxu0 0.0
    %3051 = vmatprep.subr.mxu0 0.0
    %3052 = vmatpush1.msra.mxu0 0.0
    %3053 = vmatprep.subr.mxu0 0.0
    %3054 = vmatpush1.msra.mxu0 0.0
    %3055 = vmatprep.subr.mxu0 0.0
    %3056 = vmatpush1.msra.mxu0 0.0
    %3057 = vmatprep.subr.mxu0 0.0
    %3058 = vmatpush1.msra.mxu0 0.0
    %3059 = vmatprep.subr.mxu0 0.0
    %3060 = vmatpush1.msra.mxu0 0.0
    %3061 = vmatprep.subr.mxu0 0.0
    %3062 = vmatpush1.msra.mxu0 0.0
    %3063 = vmatprep.subr.mxu0 0.0
    %3064 = vmatpush1.msra.mxu0 0.0
    %3065 = vmatprep.subr.mxu0 0.0
    %3066 = vmatpush1.msra.mxu0 0.0
    %3067 = vmatprep.subr.mxu0 0.0
    %3068 = vmatpush1.msra.mxu0 0.0
    %3069 = vmatprep.subr.mxu0 0.0
    %3070 = vmatpush1.msra.mxu0 %v3032
    %3071 = vmatprep.subr.mxu0 0.0
    %3072 = vmatpush1.msra.mxu0 %v3030
    %3073 = vmatprep.subr.mxu0 0.0
    %3074 = vmatpush2.msra.mxu0 0.0
    %3075 = vmatprep.subr.mxu0 0.0
    %3076 = vmatpush2.msra.mxu0 0.0
    %3077 = vmatprep.subr.mxu0 0.0
    %3078 = vmatpush2.msra.mxu0 0.0
    %3079 = vmatprep.subr.mxu0 0.0
    %3080 = vmatpush2.msra.mxu0 0.0
    %3081 = vmatprep.subr.mxu0 0.0
    %3082 = vmatpush2.msra.mxu0 0.0
    %3083 = vmatprep.subr.mxu0 0.0
    %3084 = vmatpush2.msra.mxu0 0.0
    %3085 = vmatprep.subr.mxu0 0.0
    %3086 = vmatpush2.msra.mxu0 0.0
    %3087 = vmatprep.subr.mxu0 0.0
    %3088 = vmatpush2.msra.mxu0 0.0
    %3089 = vmatprep.subr.mxu0 0.0
    %3090 = vmatpush2.msra.mxu0 0.0
    %3091 = vmatprep.subr.mxu0 0.0
    %3092 = vmatpush2.msra.mxu0 0.0
    %3093 = vmatprep.subr.mxu0 0.0
    %3094 = vmatpush2.msra.mxu0 0.0
    %3095 = vmatprep.subr.mxu0 0.0
    %3096 = vmatpush2.msra.mxu0 0.0
    %3097 = vmatprep.subr.mxu0 0.0
    %3098 = vmatpush2.msra.mxu0 0.0
    %3099 = vmatprep.subr.mxu0 0.0
    %3100 = vmatpush2.msra.mxu0 0.0
    %3101 = vmatprep.subr.mxu0 0.0
    %3102 = vmatpush2.msra.mxu0 0.0
    %3103 = vmatprep.subr.mxu0 0.0
    %3104 = vmatpush2.msra.mxu0 0.0
    %3105 = vmatprep.mubr.f32.mxu0 0.0
    %3106 = vmatmul.mubr.f32.gmra.mxu0 %v3036
    %v3107 = vpop.f32.mrf.mxu0
    %v3108 = vadd.f32 0.0, %v3107
    %v3109 = vpop.f32.mrf.mxu0
    %3110 = vmatprep.mubr.f32.mxu0 0.0
    %3111 = vmatmul.mubr.f32.gmra.mxu0 %v3039
    %v3112 = vpop.f32.mrf.mxu0
    %v3113 = vadd.f32 0.0, %v3112
    %v3114 = vpop.f32.mrf.mxu0
    %3115 = vdwg.mxu0
    %3116 = vrot.lane.b32.xlu0 %v2710, 112
    %v3117 = vpop.permute.xlu0 %3116
    %3118 = vrot.lane.b32.xlu0 %v2715, 112
    %v3119 = vpop.permute.xlu0 %3118
    %3120 = vrot.lane.b32.xlu0 %v2710, 80
    %v3121 = vpop.permute.xlu0 %3120
    %3122 = vrot.lane.b32.xlu0 %v2715, 80
    %v3123 = vpop.permute.xlu0 %3122
    %v3124 = vsel %vm129, %v3117, 0
    %v3126 = vsel %vm129, %v3119, 0
    %v3128 = vsel %vm129, %v3121, 0
    %v3130 = vsel %vm129, %v3123, 0
    %3132 = vmatprep.subr.mxu0 0.0
    %3133 = vmatpush1.xpose.msra.mxu0 0.0
    %3134 = vmatprep.subr.mxu0 0.0
    %3135 = vmatpush1.xpose.msra.mxu0 0.0
    %3136 = vmatprep.subr.mxu0 0.0
    %3137 = vmatpush1.xpose.msra.mxu0 0.0
    %3138 = vmatprep.subr.mxu0 0.0
    %3139 = vmatpush1.xpose.msra.mxu0 0.0
    %3140 = vmatprep.subr.mxu0 0.0
    %3141 = vmatpush1.xpose.msra.mxu0 0.0
    %3142 = vmatprep.subr.mxu0 0.0
    %3143 = vmatpush1.xpose.msra.mxu0 0.0
    %3144 = vmatprep.subr.mxu0 0.0
    %3145 = vmatpush1.xpose.msra.mxu0 0.0
    %3146 = vmatprep.subr.mxu0 0.0
    %3147 = vmatpush1.xpose.msra.mxu0 0.0
    %3148 = vmatprep.subr.mxu0 0.0
    %3149 = vmatpush1.xpose.msra.mxu0 0.0
    %3150 = vmatprep.subr.mxu0 0.0
    %3151 = vmatpush1.xpose.msra.mxu0 0.0
    %3152 = vmatprep.subr.mxu0 0.0
    %3153 = vmatpush1.xpose.msra.mxu0 0.0
    %3154 = vmatprep.subr.mxu0 0.0
    %3155 = vmatpush1.xpose.msra.mxu0 0.0
    %3156 = vmatprep.subr.mxu0 0.0
    %3157 = vmatpush1.xpose.msra.mxu0 0.0
    %3158 = vmatprep.subr.mxu0 0.0
    %3159 = vmatpush1.xpose.msra.mxu0 0.0
    %3160 = vmatprep.subr.mxu0 0.0
    %3161 = vmatpush1.xpose.msra.mxu0 %v3130
    %3162 = vmatprep.subr.mxu0 0.0
    %3163 = vmatpush1.xpose.msra.mxu0 %v3128
    %3164 = vmatprep.subr.mxu0 0.0
    %3165 = vmatpush2.xpose.msra.mxu0 0.0
    %3166 = vmatprep.subr.mxu0 0.0
    %3167 = vmatpush2.xpose.msra.mxu0 0.0
    %3168 = vmatprep.subr.mxu0 0.0
    %3169 = vmatpush2.xpose.msra.mxu0 0.0
    %3170 = vmatprep.subr.mxu0 0.0
    %3171 = vmatpush2.xpose.msra.mxu0 0.0
    %3172 = vmatprep.subr.mxu0 0.0
    %3173 = vmatpush2.xpose.msra.mxu0 0.0
    %3174 = vmatprep.subr.mxu0 0.0
    %3175 = vmatpush2.xpose.msra.mxu0 0.0
    %3176 = vmatprep.subr.mxu0 0.0
    %3177 = vmatpush2.xpose.msra.mxu0 0.0
    %3178 = vmatprep.subr.mxu0 0.0
    %3179 = vmatpush2.xpose.msra.mxu0 0.0
    %3180 = vmatprep.subr.mxu0 0.0
    %3181 = vmatpush2.xpose.msra.mxu0 0.0
    %3182 = vmatprep.subr.mxu0 0.0
    %3183 = vmatpush2.xpose.msra.mxu0 0.0
    %3184 = vmatprep.subr.mxu0 0.0
    %3185 = vmatpush2.xpose.msra.mxu0 0.0
    %3186 = vmatprep.subr.mxu0 0.0
    %3187 = vmatpush2.xpose.msra.mxu0 0.0
    %3188 = vmatprep.subr.mxu0 0.0
    %3189 = vmatpush2.xpose.msra.mxu0 0.0
    %3190 = vmatprep.subr.mxu0 0.0
    %3191 = vmatpush2.xpose.msra.mxu0 0.0
    %3192 = vmatprep.subr.mxu0 0.0
    %3193 = vmatpush2.xpose.msra.mxu0 0.0
    %3194 = vmatprep.subr.mxu0 0.0
    %3195 = vmatpush2.xpose.msra.mxu0 0.0
    %3196 = vmatprep.mubr.f32.mxu0 0.0
    %3197 = vmatmul.mubr.f32.gmra.mxu0 %v3124
    %v3198 = vpop.f32.mrf.mxu0
    %v3199 = vadd.f32 %v26, %v3198
    %v3200 = vpop.f32.mrf.mxu0
    %3201 = vmatprep.mubr.f32.mxu0 0.0
    %3202 = vmatmul.mubr.f32.gmra.mxu0 %v3126
    %v3203 = vpop.f32.mrf.mxu0
    %v3204 = vadd.f32 %v27, %v3203
    %v3205 = vpop.f32.mrf.mxu0
    %3206 = vdwg.mxu0
    %v3207 = vsel %vm213, %v3199, -inf
    %3208 = vmax.xlane.f32.xlu0 %v3207
    %v3209 = vpop.xlane.xlu0 %3208
    %v3210 = vsel %vm213, %v3204, -inf
    %3211 = vmax.xlane.f32.xlu0 %v3210
    %v3212 = vpop.xlane.xlu0 %3211
    %v3213 = vsub.f32 %v3199, %v3209
    %v3214 = vsub.f32 %v3204, %v3212
    %v3215 = vmul.f32 %v3213, 1.442695
    %v3216 = vpow.pop %v3215
    %v3217 = vmul.f32 %v3214, 1.442695
    %v3218 = vpow.pop %v3217
    %v3219 = vsel %vm213, %v3216, 0.0
    %3220 = vadd.xlane.f32.xlu0 %v3219
    %v3221 = vpop.xlane.xlu0 %3220
    %v3222 = vsel %vm213, %v3218, 0.0
    %3223 = vadd.xlane.f32.xlu0 %v3222
    %v3224 = vpop.xlane.xlu0 %3223
    %v3225 = vrcp.pop %v3221
    %v3226 = vrcp.pop %v3224
    %v3227 = vmul.f32 %v3216, %v3225
    %v3228 = vmul.f32 %v3218, %v3226
    %3229 = vrot.lane.b32.xlu0 %v2710, 48
    %v3230 = vpop.permute.xlu0 %3229
    %3231 = vrot.lane.b32.xlu0 %v2715, 48
    %v3232 = vpop.permute.xlu0 %3231
    %v3236 = vsel %vm213, %v3227, 0
    %v3239 = vsel %vm213, %v3228, 0
    %3241 = vmatprep.subr.mxu0 0.0
    %3242 = vmatpush1.msra.mxu0 0.0
    %3243 = vmatprep.subr.mxu0 0.0
    %3244 = vmatpush1.msra.mxu0 0.0
    %3245 = vmatprep.subr.mxu0 0.0
    %3246 = vmatpush1.msra.mxu0 0.0
    %3247 = vmatprep.subr.mxu0 0.0
    %3248 = vmatpush1.msra.mxu0 0.0
    %3249 = vmatprep.subr.mxu0 0.0
    %3250 = vmatpush1.msra.mxu0 0.0
    %3251 = vmatprep.subr.mxu0 0.0
    %3252 = vmatpush1.msra.mxu0 0.0
    %3253 = vmatprep.subr.mxu0 0.0
    %3254 = vmatpush1.msra.mxu0 0.0
    %3255 = vmatprep.subr.mxu0 0.0
    %3256 = vmatpush1.msra.mxu0 0.0
    %3257 = vmatprep.subr.mxu0 0.0
    %3258 = vmatpush1.msra.mxu0 0.0
    %3259 = vmatprep.subr.mxu0 0.0
    %3260 = vmatpush1.msra.mxu0 0.0
    %3261 = vmatprep.subr.mxu0 0.0
    %3262 = vmatpush1.msra.mxu0 0.0
    %3263 = vmatprep.subr.mxu0 0.0
    %3264 = vmatpush1.msra.mxu0 0.0
    %3265 = vmatprep.subr.mxu0 0.0
    %3266 = vmatpush1.msra.mxu0 0.0
    %3267 = vmatprep.subr.mxu0 0.0
    %3268 = vmatpush1.msra.mxu0 0.0
    %3269 = vmatprep.subr.mxu0 0.0
    %3270 = vmatpush1.msra.mxu0 %v3232
    %3271 = vmatprep.subr.mxu0 0.0
    %3272 = vmatpush1.msra.mxu0 %v3230
    %3273 = vmatprep.subr.mxu0 0.0
    %3274 = vmatpush2.msra.mxu0 0.0
    %3275 = vmatprep.subr.mxu0 0.0
    %3276 = vmatpush2.msra.mxu0 0.0
    %3277 = vmatprep.subr.mxu0 0.0
    %3278 = vmatpush2.msra.mxu0 0.0
    %3279 = vmatprep.subr.mxu0 0.0
    %3280 = vmatpush2.msra.mxu0 0.0
    %3281 = vmatprep.subr.mxu0 0.0
    %3282 = vmatpush2.msra.mxu0 0.0
    %3283 = vmatprep.subr.mxu0 0.0
    %3284 = vmatpush2.msra.mxu0 0.0
    %3285 = vmatprep.subr.mxu0 0.0
    %3286 = vmatpush2.msra.mxu0 0.0
    %3287 = vmatprep.subr.mxu0 0.0
    %3288 = vmatpush2.msra.mxu0 0.0
    %3289 = vmatprep.subr.mxu0 0.0
    %3290 = vmatpush2.msra.mxu0 0.0
    %3291 = vmatprep.subr.mxu0 0.0
    %3292 = vmatpush2.msra.mxu0 0.0
    %3293 = vmatprep.subr.mxu0 0.0
    %3294 = vmatpush2.msra.mxu0 0.0
    %3295 = vmatprep.subr.mxu0 0.0
    %3296 = vmatpush2.msra.mxu0 0.0
    %3297 = vmatprep.subr.mxu0 0.0
    %3298 = vmatpush2.msra.mxu0 0.0
    %3299 = vmatprep.subr.mxu0 0.0
    %3300 = vmatpush2.msra.mxu0 0.0
    %3301 = vmatprep.subr.mxu0 0.0
    %3302 = vmatpush2.msra.mxu0 0.0
    %3303 = vmatprep.subr.mxu0 0.0
    %3304 = vmatpush2.msra.mxu0 0.0
    %3305 = vmatprep.mubr.f32.mxu0 0.0
    %3306 = vmatmul.mubr.f32.gmra.mxu0 %v3236
    %v3307 = vpop.f32.mrf.mxu0
    %v3308 = vadd.f32 0.0, %v3307
    %v3309 = vpop.f32.mrf.mxu0
    %3310 = vmatprep.mubr.f32.mxu0 0.0
    %3311 = vmatmul.mubr.f32.gmra.mxu0 %v3239
    %v3312 = vpop.f32.mrf.mxu0
    %v3313 = vadd.f32 0.0, %v3312
    %v3314 = vpop.f32.mrf.mxu0
    %3315 = vdwg.mxu0
    %3316 = vrot.lane.b32.xlu0 %v2710, 104
    %v3317 = vpop.permute.xlu0 %3316
    %3318 = vrot.lane.b32.xlu0 %v2715, 104
    %v3319 = vpop.permute.xlu0 %3318
    %3320 = vrot.lane.b32.xlu0 %v2710, 72
    %v3321 = vpop.permute.xlu0 %3320
    %3322 = vrot.lane.b32.xlu0 %v2715, 72
    %v3323 = vpop.permute.xlu0 %3322
    %v3324 = vsel %vm129, %v3317, 0
    %v3326 = vsel %vm129, %v3319, 0
    %v3328 = vsel %vm129, %v3321, 0
    %v3330 = vsel %vm129, %v3323, 0
    %3332 = vmatprep.subr.mxu0 0.0
    %3333 = vmatpush1.xpose.msra.mxu0 0.0
    %3334 = vmatprep.subr.mxu0 0.0
    %3335 = vmatpush1.xpose.msra.mxu0 0.0
    %3336 = vmatprep.subr.mxu0 0.0
    %3337 = vmatpush1.xpose.msra.mxu0 0.0
    %3338 = vmatprep.subr.mxu0 0.0
    %3339 = vmatpush1.xpose.msra.mxu0 0.0
    %3340 = vmatprep.subr.mxu0 0.0
    %3341 = vmatpush1.xpose.msra.mxu0 0.0
    %3342 = vmatprep.subr.mxu0 0.0
    %3343 = vmatpush1.xpose.msra.mxu0 0.0
    %3344 = vmatprep.subr.mxu0 0.0
    %3345 = vmatpush1.xpose.msra.mxu0 0.0
    %3346 = vmatprep.subr.mxu0 0.0
    %3347 = vmatpush1.xpose.msra.mxu0 0.0
    %3348 = vmatprep.subr.mxu0 0.0
    %3349 = vmatpush1.xpose.msra.mxu0 0.0
    %3350 = vmatprep.subr.mxu0 0.0
    %3351 = vmatpush1.xpose.msra.mxu0 0.0
    %3352 = vmatprep.subr.mxu0 0.0
    %3353 = vmatpush1.xpose.msra.mxu0 0.0
    %3354 = vmatprep.subr.mxu0 0.0
    %3355 = vmatpush1.xpose.msra.mxu0 0.0
    %3356 = vmatprep.subr.mxu0 0.0
    %3357 = vmatpush1.xpose.msra.mxu0 0.0
    %3358 = vmatprep.subr.mxu0 0.0
    %3359 = vmatpush1.xpose.msra.mxu0 0.0
    %3360 = vmatprep.subr.mxu0 0.0
    %3361 = vmatpush1.xpose.msra.mxu0 %v3330
    %3362 = vmatprep.subr.mxu0 0.0
    %3363 = vmatpush1.xpose.msra.mxu0 %v3328
    %3364 = vmatprep.subr.mxu0 0.0
    %3365 = vmatpush2.xpose.msra.mxu0 0.0
    %3366 = vmatprep.subr.mxu0 0.0
    %3367 = vmatpush2.xpose.msra.mxu0 0.0
    %3368 = vmatprep.subr.mxu0 0.0
    %3369 = vmatpush2.xpose.msra.mxu0 0.0
    %3370 = vmatprep.subr.mxu0 0.0
    %3371 = vmatpush2.xpose.msra.mxu0 0.0
    %3372 = vmatprep.subr.mxu0 0.0
    %3373 = vmatpush2.xpose.msra.mxu0 0.0
    %3374 = vmatprep.subr.mxu0 0.0
    %3375 = vmatpush2.xpose.msra.mxu0 0.0
    %3376 = vmatprep.subr.mxu0 0.0
    %3377 = vmatpush2.xpose.msra.mxu0 0.0
    %3378 = vmatprep.subr.mxu0 0.0
    %3379 = vmatpush2.xpose.msra.mxu0 0.0
    %3380 = vmatprep.subr.mxu0 0.0
    %3381 = vmatpush2.xpose.msra.mxu0 0.0
    %3382 = vmatprep.subr.mxu0 0.0
    %3383 = vmatpush2.xpose.msra.mxu0 0.0
    %3384 = vmatprep.subr.mxu0 0.0
    %3385 = vmatpush2.xpose.msra.mxu0 0.0
    %3386 = vmatprep.subr.mxu0 0.0
    %3387 = vmatpush2.xpose.msra.mxu0 0.0
    %3388 = vmatprep.subr.mxu0 0.0
    %3389 = vmatpush2.xpose.msra.mxu0 0.0
    %3390 = vmatprep.subr.mxu0 0.0
    %3391 = vmatpush2.xpose.msra.mxu0 0.0
    %3392 = vmatprep.subr.mxu0 0.0
    %3393 = vmatpush2.xpose.msra.mxu0 0.0
    %3394 = vmatprep.subr.mxu0 0.0
    %3395 = vmatpush2.xpose.msra.mxu0 0.0
    %3396 = vmatprep.mubr.f32.mxu0 0.0
    %3397 = vmatmul.mubr.f32.gmra.mxu0 %v3324
    %v3398 = vpop.f32.mrf.mxu0
    %v3399 = vadd.f32 %v26, %v3398
    %v3400 = vpop.f32.mrf.mxu0
    %3401 = vmatprep.mubr.f32.mxu0 0.0
    %3402 = vmatmul.mubr.f32.gmra.mxu0 %v3326
    %v3403 = vpop.f32.mrf.mxu0
    %v3404 = vadd.f32 %v27, %v3403
    %v3405 = vpop.f32.mrf.mxu0
    %3406 = vdwg.mxu0
    %v3407 = vsel %vm213, %v3399, -inf
    %3408 = vmax.xlane.f32.xlu0 %v3407
    %v3409 = vpop.xlane.xlu0 %3408
    %v3410 = vsel %vm213, %v3404, -inf
    %3411 = vmax.xlane.f32.xlu0 %v3410
    %v3412 = vpop.xlane.xlu0 %3411
    %v3413 = vsub.f32 %v3399, %v3409
    %v3414 = vsub.f32 %v3404, %v3412
    %v3415 = vmul.f32 %v3413, 1.442695
    %v3416 = vpow.pop %v3415
    %v3417 = vmul.f32 %v3414, 1.442695
    %v3418 = vpow.pop %v3417
    %v3419 = vsel %vm213, %v3416, 0.0
    %3420 = vadd.xlane.f32.xlu0 %v3419
    %v3421 = vpop.xlane.xlu0 %3420
    %v3422 = vsel %vm213, %v3418, 0.0
    %3423 = vadd.xlane.f32.xlu0 %v3422
    %v3424 = vpop.xlane.xlu0 %3423
    %v3425 = vrcp.pop %v3421
    %v3426 = vrcp.pop %v3424
    %v3427 = vmul.f32 %v3416, %v3425
    %v3428 = vmul.f32 %v3418, %v3426
    %3429 = vrot.lane.b32.xlu0 %v2710, 40
    %v3430 = vpop.permute.xlu0 %3429
    %3431 = vrot.lane.b32.xlu0 %v2715, 40
    %v3432 = vpop.permute.xlu0 %3431
    %v3436 = vsel %vm213, %v3427, 0
    %v3439 = vsel %vm213, %v3428, 0
    %3441 = vmatprep.subr.mxu0 0.0
    %3442 = vmatpush1.msra.mxu0 0.0
    %3443 = vmatprep.subr.mxu0 0.0
    %3444 = vmatpush1.msra.mxu0 0.0
    %3445 = vmatprep.subr.mxu0 0.0
    %3446 = vmatpush1.msra.mxu0 0.0
    %3447 = vmatprep.subr.mxu0 0.0
    %3448 = vmatpush1.msra.mxu0 0.0
    %3449 = vmatprep.subr.mxu0 0.0
    %3450 = vmatpush1.msra.mxu0 0.0
    %3451 = vmatprep.subr.mxu0 0.0
    %3452 = vmatpush1.msra.mxu0 0.0
    %3453 = vmatprep.subr.mxu0 0.0
    %3454 = vmatpush1.msra.mxu0 0.0
    %3455 = vmatprep.subr.mxu0 0.0
    %3456 = vmatpush1.msra.mxu0 0.0
    %3457 = vmatprep.subr.mxu0 0.0
    %3458 = vmatpush1.msra.mxu0 0.0
    %3459 = vmatprep.subr.mxu0 0.0
    %3460 = vmatpush1.msra.mxu0 0.0
    %3461 = vmatprep.subr.mxu0 0.0
    %3462 = vmatpush1.msra.mxu0 0.0
    %3463 = vmatprep.subr.mxu0 0.0
    %3464 = vmatpush1.msra.mxu0 0.0
    %3465 = vmatprep.subr.mxu0 0.0
    %3466 = vmatpush1.msra.mxu0 0.0
    %3467 = vmatprep.subr.mxu0 0.0
    %3468 = vmatpush1.msra.mxu0 0.0
    %3469 = vmatprep.subr.mxu0 0.0
    %3470 = vmatpush1.msra.mxu0 %v3432
    %3471 = vmatprep.subr.mxu0 0.0
    %3472 = vmatpush1.msra.mxu0 %v3430
    %3473 = vmatprep.subr.mxu0 0.0
    %3474 = vmatpush2.msra.mxu0 0.0
    %3475 = vmatprep.subr.mxu0 0.0
    %3476 = vmatpush2.msra.mxu0 0.0
    %3477 = vmatprep.subr.mxu0 0.0
    %3478 = vmatpush2.msra.mxu0 0.0
    %3479 = vmatprep.subr.mxu0 0.0
    %3480 = vmatpush2.msra.mxu0 0.0
    %3481 = vmatprep.subr.mxu0 0.0
    %3482 = vmatpush2.msra.mxu0 0.0
    %3483 = vmatprep.subr.mxu0 0.0
    %3484 = vmatpush2.msra.mxu0 0.0
    %3485 = vmatprep.subr.mxu0 0.0
    %3486 = vmatpush2.msra.mxu0 0.0
    %3487 = vmatprep.subr.mxu0 0.0
    %3488 = vmatpush2.msra.mxu0 0.0
    %3489 = vmatprep.subr.mxu0 0.0
    %3490 = vmatpush2.msra.mxu0 0.0
    %3491 = vmatprep.subr.mxu0 0.0
    %3492 = vmatpush2.msra.mxu0 0.0
    %3493 = vmatprep.subr.mxu0 0.0
    %3494 = vmatpush2.msra.mxu0 0.0
    %3495 = vmatprep.subr.mxu0 0.0
    %3496 = vmatpush2.msra.mxu0 0.0
    %3497 = vmatprep.subr.mxu0 0.0
    %3498 = vmatpush2.msra.mxu0 0.0
    %3499 = vmatprep.subr.mxu0 0.0
    %3500 = vmatpush2.msra.mxu0 0.0
    %3501 = vmatprep.subr.mxu0 0.0
    %3502 = vmatpush2.msra.mxu0 0.0
    %3503 = vmatprep.subr.mxu0 0.0
    %3504 = vmatpush2.msra.mxu0 0.0
    %3505 = vmatprep.mubr.f32.mxu0 0.0
    %3506 = vmatmul.mubr.f32.gmra.mxu0 %v3436
    %v3507 = vpop.f32.mrf.mxu0
    %v3508 = vadd.f32 0.0, %v3507
    %v3509 = vpop.f32.mrf.mxu0
    %3510 = vmatprep.mubr.f32.mxu0 0.0
    %3511 = vmatmul.mubr.f32.gmra.mxu0 %v3439
    %v3512 = vpop.f32.mrf.mxu0
    %v3513 = vadd.f32 0.0, %v3512
    %v3514 = vpop.f32.mrf.mxu0
    %3515 = vdwg.mxu0
    %3518 = vrot.lane.b32.xlu0 %v3108, 8
    %v3519 = vpop.permute.xlu0 %3518
    %3520 = vrot.lane.b32.xlu0 %v3113, 8
    %v3521 = vpop.permute.xlu0 %3520
    %3526 = vrot.lane.b32.xlu0 %v3308, 16
    %v3527 = vpop.permute.xlu0 %3526
    %3528 = vrot.lane.b32.xlu0 %v3313, 16
    %v3529 = vpop.permute.xlu0 %3528
    %3534 = vrot.lane.b32.xlu0 %v3508, 24
    %v3535 = vpop.permute.xlu0 %3534
    %3536 = vrot.lane.b32.xlu0 %v3513, 24
    %v3537 = vpop.permute.xlu0 %3536
    %v3540 = vsel %vm129, %v2908, %v3519
    %v3541 = vsel %vm129, %v2913, %v3521
    %v3542 = vsel %vm213, %v3540, %v3527
    %v3543 = vsel %vm213, %v3541, %v3529
    %v3544 = vsel %vm951, %v3542, %v3535
    %v3545 = vsel %vm951, %v3543, %v3537
    %v3546 = vlaneseq
    %v3547 = vshrl.u32 %v3546, 7
    %v3548 = vsub.s32 1, %v3547
    %v3549 = vrot.slane %v2632, %v3548
    %3554 = vrot.lane.b32.xlu0 %v2623, 32
    %v3555 = vpop.permute.xlu0 %3554
    %3556 = vrot.lane.b32.xlu0 %v2624, 32
    %v3557 = vpop.permute.xlu0 %3556
    %3558 = vrot.lane.b32.xlu0 %v2625, 32
    %v3559 = vpop.permute.xlu0 %3558
    %3560 = vrot.lane.b32.xlu0 %v2626, 32
    %v3561 = vpop.permute.xlu0 %3560
    %v3567 = vsel %vm41, %v3544, 0
    %v3570 = vsel %vm41, %v3545, 0
    %3572 = vmatprep.subr.mxu0 0.0
    %3573 = vmatpush1.msra.mxu0 0.0
    %3574 = vmatprep.subr.mxu0 0.0
    %3575 = vmatpush1.msra.mxu0 0.0
    %3576 = vmatprep.subr.mxu0 0.0
    %3577 = vmatpush1.msra.mxu0 0.0
    %3578 = vmatprep.subr.mxu0 0.0
    %3579 = vmatpush1.msra.mxu0 0.0
    %3580 = vmatprep.subr.mxu0 0.0
    %3581 = vmatpush1.msra.mxu0 0.0
    %3582 = vmatprep.subr.mxu0 0.0
    %3583 = vmatpush1.msra.mxu0 0.0
    %3584 = vmatprep.subr.mxu0 0.0
    %3585 = vmatpush1.msra.mxu0 0.0
    %3586 = vmatprep.subr.mxu0 0.0
    %3587 = vmatpush1.msra.mxu0 0.0
    %3588 = vmatprep.subr.mxu0 0.0
    %3589 = vmatpush1.msra.mxu0 0.0
    %3590 = vmatprep.subr.mxu0 0.0
    %3591 = vmatpush1.msra.mxu0 0.0
    %3592 = vmatprep.subr.mxu0 0.0
    %3593 = vmatpush1.msra.mxu0 0.0
    %3594 = vmatprep.subr.mxu0 0.0
    %3595 = vmatpush1.msra.mxu0 0.0
    %3596 = vmatprep.subr.mxu0 0.0
    %3597 = vmatpush1.msra.mxu0 %v3561
    %3598 = vmatprep.subr.mxu0 0.0
    %3599 = vmatpush1.msra.mxu0 %v3559
    %3600 = vmatprep.subr.mxu0 0.0
    %3601 = vmatpush1.msra.mxu0 %v3557
    %3602 = vmatprep.subr.mxu0 0.0
    %3603 = vmatpush1.msra.mxu0 %v3555
    %3604 = vmatprep.subr.mxu0 0.0
    %3605 = vmatpush2.msra.mxu0 0.0
    %3606 = vmatprep.subr.mxu0 0.0
    %3607 = vmatpush2.msra.mxu0 0.0
    %3608 = vmatprep.subr.mxu0 0.0
    %3609 = vmatpush2.msra.mxu0 0.0
    %3610 = vmatprep.subr.mxu0 0.0
    %3611 = vmatpush2.msra.mxu0 0.0
    %3612 = vmatprep.subr.mxu0 0.0
    %3613 = vmatpush2.msra.mxu0 0.0
    %3614 = vmatprep.subr.mxu0 0.0
    %3615 = vmatpush2.msra.mxu0 0.0
    %3616 = vmatprep.subr.mxu0 0.0
    %3617 = vmatpush2.msra.mxu0 0.0
    %3618 = vmatprep.subr.mxu0 0.0
    %3619 = vmatpush2.msra.mxu0 0.0
    %3620 = vmatprep.subr.mxu0 0.0
    %3621 = vmatpush2.msra.mxu0 0.0
    %3622 = vmatprep.subr.mxu0 0.0
    %3623 = vmatpush2.msra.mxu0 0.0
    %3624 = vmatprep.subr.mxu0 0.0
    %3625 = vmatpush2.msra.mxu0 0.0
    %3626 = vmatprep.subr.mxu0 0.0
    %3627 = vmatpush2.msra.mxu0 0.0
    %3628 = vmatprep.subr.mxu0 0.0
    %3629 = vmatpush2.msra.mxu0 0.0
    %3630 = vmatprep.subr.mxu0 0.0
    %3631 = vmatpush2.msra.mxu0 0.0
    %3632 = vmatprep.subr.mxu0 0.0
    %3633 = vmatpush2.msra.mxu0 0.0
    %3634 = vmatprep.subr.mxu0 0.0
    %3635 = vmatpush2.msra.mxu0 0.0
    %3636 = vmatprep.mubr.f32.mxu0 0.0
    %3637 = vmatmul.mubr.f32.gmra.mxu0 %v3567
    %v3638 = vpop.f32.mrf.mxu0
    %v3639 = vadd.f32 %v3549, %v3638
    %v3640 = vpop.f32.mrf.mxu0
    %3641 = vmatprep.mubr.f32.mxu0 0.0
    %3642 = vmatmul.mubr.f32.gmra.mxu0 %v3570
    %v3643 = vpop.f32.mrf.mxu0
    %v3644 = vadd.f32 %v3549, %v3643
    %v3645 = vpop.f32.mrf.mxu0
    %3646 = vdwg.mxu0
    %v3647 = vadd.f32 %v2620, %v3639
    %v3648 = vadd.f32 %v2621, %v3644
    %v3649 = vsel %vm41, %v3647, 0.0
    %3650 = vadd.xlane.f32.xlu0 %v3649
    %v3651 = vpop.xlane.xlu0 %3650
    %v3652 = vsel %vm41, %v3648, 0.0
    %3653 = vadd.xlane.f32.xlu0 %v3652
    %v3654 = vpop.xlane.xlu0 %3653
    %v3655 = vmul.f32 %v3651, %v1063
    %v3656 = vmul.f32 %v3654, %v1063
    %v3657 = vsub.f32 %v3647, %v3655
    %v3658 = vsub.f32 %v3648, %v3656
    %v3659 = vmul.f32 %v3657, %v3657
    %v3660 = vmul.f32 %v3658, %v3658
    %v3661 = vsel %vm41, %v3659, 0.0
    %3662 = vadd.xlane.f32.xlu0 %v3661
    %v3663 = vpop.xlane.xlu0 %3662
    %v3664 = vsel %vm41, %v3660, 0.0
    %3665 = vadd.xlane.f32.xlu0 %v3664
    %v3666 = vpop.xlane.xlu0 %3665
    %v3667 = vmul.f32 %v3663, %v1063
    %v3668 = vmul.f32 %v3666, %v1063
    %v3669 = vadd.f32 %v3667, 1e-12
    %v3670 = vadd.f32 %v3668, 1e-12
    %v3671 = vrsqrt.pop %v3669
    %v3672 = vrsqrt.pop %v3670
    %v3673 = vmul.f32 %v3657, %v3671
    %v3674 = vmul.f32 %v3658, %v3672
    %v3675 = vlaneseq
    %v3676 = vshrl.u32 %v3675, 7
    %v3677 = vsub.s32 2, %v3676
    %v3678 = vrot.slane %v2632, %v3677
    %v3679 = vmul.f32 %v3673, %v3678
    %v3680 = vmul.f32 %v3674, %v3678
    %v3681 = vlaneseq
    %v3682 = vshrl.u32 %v3681, 7
    %v3683 = vsub.s32 3, %v3682
    %v3684 = vrot.slane %v2632, %v3683
    %v3685 = vadd.f32 %v3679, %v3684
    %v3686 = vadd.f32 %v3680, %v3684
    %v3687 = vlaneseq
    %v3688 = vshrl.u32 %v3687, 7
    %v3689 = vsub.s32 4, %v3688
    %v3690 = vrot.slane %v2632, %v3689
    %v3692 = vsel %vm41, %v3685, 0
    %v3695 = vsel %vm41, %v3686, 0
    %3697 = vmatprep.subr.mxu0 0.0
    %3698 = vmatpush1.msra.mxu0 0.0
    %3699 = vmatprep.subr.mxu0 0.0
    %3700 = vmatpush1.msra.mxu0 0.0
    %3701 = vmatprep.subr.mxu0 0.0
    %3702 = vmatpush1.msra.mxu0 0.0
    %3703 = vmatprep.subr.mxu0 0.0
    %3704 = vmatpush1.msra.mxu0 0.0
    %3705 = vmatprep.subr.mxu0 0.0
    %3706 = vmatpush1.msra.mxu0 0.0
    %3707 = vmatprep.subr.mxu0 0.0
    %3708 = vmatpush1.msra.mxu0 0.0
    %3709 = vmatprep.subr.mxu0 0.0
    %3710 = vmatpush1.msra.mxu0 0.0
    %3711 = vmatprep.subr.mxu0 0.0
    %3712 = vmatpush1.msra.mxu0 0.0
    %3713 = vmatprep.subr.mxu0 0.0
    %3714 = vmatpush1.msra.mxu0 0.0
    %3715 = vmatprep.subr.mxu0 0.0
    %3716 = vmatpush1.msra.mxu0 0.0
    %3717 = vmatprep.subr.mxu0 0.0
    %3718 = vmatpush1.msra.mxu0 0.0
    %3719 = vmatprep.subr.mxu0 0.0
    %3720 = vmatpush1.msra.mxu0 0.0
    %3721 = vmatprep.subr.mxu0 0.0
    %3722 = vmatpush1.msra.mxu0 %v2630
    %3723 = vmatprep.subr.mxu0 0.0
    %3724 = vmatpush1.msra.mxu0 %v2629
    %3725 = vmatprep.subr.mxu0 0.0
    %3726 = vmatpush1.msra.mxu0 %v2628
    %3727 = vmatprep.subr.mxu0 0.0
    %3728 = vmatpush1.msra.mxu0 %v2627
    %3729 = vmatprep.subr.mxu0 0.0
    %3730 = vmatpush2.msra.mxu0 0.0
    %3731 = vmatprep.subr.mxu0 0.0
    %3732 = vmatpush2.msra.mxu0 0.0
    %3733 = vmatprep.subr.mxu0 0.0
    %3734 = vmatpush2.msra.mxu0 0.0
    %3735 = vmatprep.subr.mxu0 0.0
    %3736 = vmatpush2.msra.mxu0 0.0
    %3737 = vmatprep.subr.mxu0 0.0
    %3738 = vmatpush2.msra.mxu0 0.0
    %3739 = vmatprep.subr.mxu0 0.0
    %3740 = vmatpush2.msra.mxu0 0.0
    %3741 = vmatprep.subr.mxu0 0.0
    %3742 = vmatpush2.msra.mxu0 0.0
    %3743 = vmatprep.subr.mxu0 0.0
    %3744 = vmatpush2.msra.mxu0 0.0
    %3745 = vmatprep.subr.mxu0 0.0
    %3746 = vmatpush2.msra.mxu0 0.0
    %3747 = vmatprep.subr.mxu0 0.0
    %3748 = vmatpush2.msra.mxu0 0.0
    %3749 = vmatprep.subr.mxu0 0.0
    %3750 = vmatpush2.msra.mxu0 0.0
    %3751 = vmatprep.subr.mxu0 0.0
    %3752 = vmatpush2.msra.mxu0 0.0
    %3753 = vmatprep.subr.mxu0 0.0
    %3754 = vmatpush2.msra.mxu0 0.0
    %3755 = vmatprep.subr.mxu0 0.0
    %3756 = vmatpush2.msra.mxu0 0.0
    %3757 = vmatprep.subr.mxu0 0.0
    %3758 = vmatpush2.msra.mxu0 0.0
    %3759 = vmatprep.subr.mxu0 0.0
    %3760 = vmatpush2.msra.mxu0 0.0
    %3761 = vmatprep.mubr.f32.mxu0 0.0
    %3762 = vmatmul.mubr.f32.gmra.mxu0 %v3692
    %v3763 = vpop.f32.mrf.mxu0
    %v3764 = vadd.f32 %v3690, %v3763
    %v3765 = vpop.f32.mrf.mxu0
    %3766 = vmatprep.mubr.f32.mxu0 0.0
    %3767 = vmatmul.mubr.f32.gmra.mxu0 %v3695
    %v3768 = vpop.f32.mrf.mxu0
    %v3769 = vadd.f32 %v3690, %v3768
    %v3770 = vpop.f32.mrf.mxu0
    %3771 = vdwg.mxu0
    %v3772 = vmul.f32 %v3764, 0.5
    %v3773 = vmul.f32 %v3769, 0.5
    %v3774 = vmul.f32 %v3764, 0.70710677
    %v3775 = vmul.f32 %v3769, 0.70710677
    %v3776 = verf.f32.pop %v3774
    %v3777 = verf.f32.pop %v3775
    %v3778 = vadd.f32 %v3776, 1.0
    %v3779 = vadd.f32 %v3777, 1.0
    %v3780 = vmul.f32 %v3772, %v3778
    %v3781 = vmul.f32 %v3773, %v3779
    %s3782 = scalar_lea.vmem %s3, 256
    %v3783 = vld [vmem:[%s3782] sm:$0xff]
    %v3784 = vld [vmem:[%s3782 + $0x8] sm:$0xff]
    %v3785 = vld [vmem:[%s3782 + $0x10] sm:$0xff]
    %v3786 = vld [vmem:[%s3782 + $0x18] sm:$0xff]
    %v3787 = vld [vmem:[%s3782 + $0x20] sm:$0xff]
    %v3788 = vld [vmem:[%s3782 + $0x28] sm:$0xff]
    %v3789 = vld [vmem:[%s3782 + $0x30] sm:$0xff]
    %v3790 = vld [vmem:[%s3782 + $0x38] sm:$0xff]
    %v3791 = vld [vmem:[%s3782 + $0x40] sm:$0xff]
    %v3792 = vld [vmem:[%s3782 + $0x48] sm:$0xff]
    %v3793 = vld [vmem:[%s3782 + $0x50] sm:$0xff]
    %v3794 = vld [vmem:[%s3782 + $0x58] sm:$0xff]
    %v3795 = vld [vmem:[%s3782 + $0x60] sm:$0xff]
    %v3796 = vld [vmem:[%s3782 + $0x68] sm:$0xff]
    %v3797 = vld [vmem:[%s3782 + $0x70] sm:$0xff]
    %v3798 = vld [vmem:[%s3782 + $0x78] sm:$0xff]
    %v3799 = vlaneseq
    %v3800 = vshrl.u32 %v3799, 7
    %v3801 = vsub.s32 5, %v3800
    %v3802 = vrot.slane %v2632, %v3801
    %3803 = vmatprep.subr.mxu0 0.0
    %3804 = vmatpush1.msra.mxu0 %v3798
    %3805 = vmatprep.subr.mxu0 0.0
    %3806 = vmatpush1.msra.mxu0 %v3797
    %3807 = vmatprep.subr.mxu0 0.0
    %3808 = vmatpush1.msra.mxu0 %v3796
    %3809 = vmatprep.subr.mxu0 0.0
    %3810 = vmatpush1.msra.mxu0 %v3795
    %3811 = vmatprep.subr.mxu0 0.0
    %3812 = vmatpush1.msra.mxu0 %v3794
    %3813 = vmatprep.subr.mxu0 0.0
    %3814 = vmatpush1.msra.mxu0 %v3793
    %3815 = vmatprep.subr.mxu0 0.0
    %3816 = vmatpush1.msra.mxu0 %v3792
    %3817 = vmatprep.subr.mxu0 0.0
    %3818 = vmatpush1.msra.mxu0 %v3791
    %3819 = vmatprep.subr.mxu0 0.0
    %3820 = vmatpush1.msra.mxu0 %v3790
    %3821 = vmatprep.subr.mxu0 0.0
    %3822 = vmatpush1.msra.mxu0 %v3789
    %3823 = vmatprep.subr.mxu0 0.0
    %3824 = vmatpush1.msra.mxu0 %v3788
    %3825 = vmatprep.subr.mxu0 0.0
    %3826 = vmatpush1.msra.mxu0 %v3787
    %3827 = vmatprep.subr.mxu0 0.0
    %3828 = vmatpush1.msra.mxu0 %v3786
    %3829 = vmatprep.subr.mxu0 0.0
    %3830 = vmatpush1.msra.mxu0 %v3785
    %3831 = vmatprep.subr.mxu0 0.0
    %3832 = vmatpush1.msra.mxu0 %v3784
    %3833 = vmatprep.subr.mxu0 0.0
    %3834 = vmatpush1.msra.mxu0 %v3783
    %3835 = vmatprep.subr.mxu0 0.0
    %3836 = vmatpush2.msra.mxu0 0.0
    %3837 = vmatprep.subr.mxu0 0.0
    %3838 = vmatpush2.msra.mxu0 0.0
    %3839 = vmatprep.subr.mxu0 0.0
    %3840 = vmatpush2.msra.mxu0 0.0
    %3841 = vmatprep.subr.mxu0 0.0
    %3842 = vmatpush2.msra.mxu0 0.0
    %3843 = vmatprep.subr.mxu0 0.0
    %3844 = vmatpush2.msra.mxu0 0.0
    %3845 = vmatprep.subr.mxu0 0.0
    %3846 = vmatpush2.msra.mxu0 0.0
    %3847 = vmatprep.subr.mxu0 0.0
    %3848 = vmatpush2.msra.mxu0 0.0
    %3849 = vmatprep.subr.mxu0 0.0
    %3850 = vmatpush2.msra.mxu0 0.0
    %3851 = vmatprep.subr.mxu0 0.0
    %3852 = vmatpush2.msra.mxu0 0.0
    %3853 = vmatprep.subr.mxu0 0.0
    %3854 = vmatpush2.msra.mxu0 0.0
    %3855 = vmatprep.subr.mxu0 0.0
    %3856 = vmatpush2.msra.mxu0 0.0
    %3857 = vmatprep.subr.mxu0 0.0
    %3858 = vmatpush2.msra.mxu0 0.0
    %3859 = vmatprep.subr.mxu0 0.0
    %3860 = vmatpush2.msra.mxu0 0.0
    %3861 = vmatprep.subr.mxu0 0.0
    %3862 = vmatpush2.msra.mxu0 0.0
    %3863 = vmatprep.subr.mxu0 0.0
    %3864 = vmatpush2.msra.mxu0 0.0
    %3865 = vmatprep.subr.mxu0 0.0
    %3866 = vmatpush2.msra.mxu0 0.0
    %3867 = vmatprep.mubr.f32.mxu0 0.0
    %3868 = vmatmul.mubr.f32.gmra.mxu0 %v3780
    %v3869 = vpop.f32.mrf.mxu0
    %v3870 = vadd.f32 %v3802, %v3869
    %v3871 = vpop.f32.mrf.mxu0
    %3872 = vmatprep.mubr.f32.mxu0 0.0
    %3873 = vmatmul.mubr.f32.gmra.mxu0 %v3781
    %v3874 = vpop.f32.mrf.mxu0
    %v3875 = vadd.f32 %v3802, %v3874
    %v3876 = vpop.f32.mrf.mxu0
    %3877 = vdwg.mxu0
    %v3878 = vadd.f32 %v3685, %v3870
    %v3879 = vadd.f32 %v3686, %v3875
    %v3880 = vsel %vm41, %v3878, 0.0
    %3881 = vadd.xlane.f32.xlu0 %v3880
    %v3882 = vpop.xlane.xlu0 %3881
    %v3883 = vsel %vm41, %v3879, 0.0
    %3884 = vadd.xlane.f32.xlu0 %v3883
    %v3885 = vpop.xlane.xlu0 %3884
    %v3886 = vmul.f32 %v3882, %v1063
    %v3887 = vmul.f32 %v3885, %v1063
    %v3888 = vsub.f32 %v3878, %v3886
    %v3889 = vsub.f32 %v3879, %v3887
    %v3890 = vmul.f32 %v3888, %v3888
    %v3891 = vmul.f32 %v3889, %v3889
    %v3892 = vsel %vm41, %v3890, 0.0
    %3893 = vadd.xlane.f32.xlu0 %v3892
    %v3894 = vpop.xlane.xlu0 %3893
    %v3895 = vsel %vm41, %v3891, 0.0
    %3896 = vadd.xlane.f32.xlu0 %v3895
    %v3897 = vpop.xlane.xlu0 %3896
    %v3898 = vmul.f32 %v3894, %v1063
    %v3899 = vmul.f32 %v3897, %v1063
    %v3900 = vadd.f32 %v3898, 1e-12
    %v3901 = vadd.f32 %v3899, 1e-12
    %v3902 = vrsqrt.pop %v3900
    %v3903 = vrsqrt.pop %v3901
    %v3904 = vmul.f32 %v3888, %v3902
    %v3905 = vmul.f32 %v3889, %v3903
    %v3906 = vlaneseq
    %v3907 = vshrl.u32 %v3906, 7
    %v3908 = vsub.s32 6, %v3907
    %v3909 = vrot.slane %v2632, %v3908
    %v3910 = vmul.f32 %v3904, %v3909
    %v3911 = vmul.f32 %v3905, %v3909
    %v3912 = vlaneseq
    %v3913 = vshrl.u32 %v3912, 7
    %v3914 = vsub.s32 7, %v3913
    %v3915 = vrot.slane %v2632, %v3914
    %v3916 = vadd.f32 %v3910, %v3915
    %v3917 = vadd.f32 %v3911, %v3915
    %v3918 = vld [vmem:[%s5] sm:$0xff]
    %v3919 = vld [vmem:[%s5 + $0x8] sm:$0xff]
    %v3920 = vld [vmem:[%s5 + $0x10] sm:$0xff]
    %v3921 = vld [vmem:[%s5 + $0x18] sm:$0xff]
    %v3922 = vld [vmem:[%s5 + $0x20] sm:$0x1]
    %v3923 = vlaneseq
    %v3924 = vshrl.u32 %v3923, 7
    %v3925 = vsub.s32 0, %v3924
    %v3926 = vrot.slane %v3922, %v3925
    %v3929 = vrot.slane %v3917, 7
    %vm3930 = vcmask 1041409
    %v3931 = vsel %vm3930, %v3929, %v3916
    %v3932 = vsel %vm41, %v3931, 0
    %3934 = vmatprep.subr.mxu0 0.0
    %3935 = vmatpush1.msra.mxu0 0.0
    %3936 = vmatprep.subr.mxu0 0.0
    %3937 = vmatpush1.msra.mxu0 0.0
    %3938 = vmatprep.subr.mxu0 0.0
    %3939 = vmatpush1.msra.mxu0 0.0
    %3940 = vmatprep.subr.mxu0 0.0
    %3941 = vmatpush1.msra.mxu0 0.0
    %3942 = vmatprep.subr.mxu0 0.0
    %3943 = vmatpush1.msra.mxu0 0.0
    %3944 = vmatprep.subr.mxu0 0.0
    %3945 = vmatpush1.msra.mxu0 0.0
    %3946 = vmatprep.subr.mxu0 0.0
    %3947 = vmatpush1.msra.mxu0 0.0
    %3948 = vmatprep.subr.mxu0 0.0
    %3949 = vmatpush1.msra.mxu0 0.0
    %3950 = vmatprep.subr.mxu0 0.0
    %3951 = vmatpush1.msra.mxu0 0.0
    %3952 = vmatprep.subr.mxu0 0.0
    %3953 = vmatpush1.msra.mxu0 0.0
    %3954 = vmatprep.subr.mxu0 0.0
    %3955 = vmatpush1.msra.mxu0 0.0
    %3956 = vmatprep.subr.mxu0 0.0
    %3957 = vmatpush1.msra.mxu0 0.0
    %3958 = vmatprep.subr.mxu0 0.0
    %3959 = vmatpush1.msra.mxu0 %v3921
    %3960 = vmatprep.subr.mxu0 0.0
    %3961 = vmatpush1.msra.mxu0 %v3920
    %3962 = vmatprep.subr.mxu0 0.0
    %3963 = vmatpush1.msra.mxu0 %v3919
    %3964 = vmatprep.subr.mxu0 0.0
    %3965 = vmatpush1.msra.mxu0 %v3918
    %3966 = vmatprep.subr.mxu0 0.0
    %3967 = vmatpush2.msra.mxu0 0.0
    %3968 = vmatprep.subr.mxu0 0.0
    %3969 = vmatpush2.msra.mxu0 0.0
    %3970 = vmatprep.subr.mxu0 0.0
    %3971 = vmatpush2.msra.mxu0 0.0
    %3972 = vmatprep.subr.mxu0 0.0
    %3973 = vmatpush2.msra.mxu0 0.0
    %3974 = vmatprep.subr.mxu0 0.0
    %3975 = vmatpush2.msra.mxu0 0.0
    %3976 = vmatprep.subr.mxu0 0.0
    %3977 = vmatpush2.msra.mxu0 0.0
    %3978 = vmatprep.subr.mxu0 0.0
    %3979 = vmatpush2.msra.mxu0 0.0
    %3980 = vmatprep.subr.mxu0 0.0
    %3981 = vmatpush2.msra.mxu0 0.0
    %3982 = vmatprep.subr.mxu0 0.0
    %3983 = vmatpush2.msra.mxu0 0.0
    %3984 = vmatprep.subr.mxu0 0.0
    %3985 = vmatpush2.msra.mxu0 0.0
    %3986 = vmatprep.subr.mxu0 0.0
    %3987 = vmatpush2.msra.mxu0 0.0
    %3988 = vmatprep.subr.mxu0 0.0
    %3989 = vmatpush2.msra.mxu0 0.0
    %3990 = vmatprep.subr.mxu0 0.0
    %3991 = vmatpush2.msra.mxu0 0.0
    %3992 = vmatprep.subr.mxu0 0.0
    %3993 = vmatpush2.msra.mxu0 0.0
    %3994 = vmatprep.subr.mxu0 0.0
    %3995 = vmatpush2.msra.mxu0 0.0
    %3996 = vmatprep.subr.mxu0 0.0
    %3997 = vmatpush2.msra.mxu0 0.0
    %3998 = vmatprep.mubr.f32.mxu0 0.0
    %3999 = vmatmul.mubr.f32.gmra.mxu0 %v3932
    %v4000 = vpop.f32.mrf.mxu0
    %v4001 = vadd.f32 %v3926, %v4000
    %v4002 = vpop.f32.mrf.mxu0
    %4003 = vdwg.mxu0
    %v4004 = vtanh.pop %v4001
    %4009 = vrot.lane.b32.xlu0 %v3918, 96
    %v4010 = vpop.permute.xlu0 %4009
    %4011 = vrot.lane.b32.xlu0 %v3919, 96
    %v4012 = vpop.permute.xlu0 %4011
    %4013 = vrot.lane.b32.xlu0 %v3920, 96
    %v4014 = vpop.permute.xlu0 %4013
    %4015 = vrot.lane.b32.xlu0 %v3921, 96
    %v4016 = vpop.permute.xlu0 %4015
    %4022 = vrot.lane.b32.xlu0 %v3926, 96
    %v4023 = vpop.permute.xlu0 %4022
    %v4026 = vsel %vm41, %v4004, 0
    %4028 = vmatprep.subr.mxu0 0.0
    %4029 = vmatpush1.msra.mxu0 0.0
    %4030 = vmatprep.subr.mxu0 0.0
    %4031 = vmatpush1.msra.mxu0 0.0
    %4032 = vmatprep.subr.mxu0 0.0
    %4033 = vmatpush1.msra.mxu0 0.0
    %4034 = vmatprep.subr.mxu0 0.0
    %4035 = vmatpush1.msra.mxu0 0.0
    %4036 = vmatprep.subr.mxu0 0.0
    %4037 = vmatpush1.msra.mxu0 0.0
    %4038 = vmatprep.subr.mxu0 0.0
    %4039 = vmatpush1.msra.mxu0 0.0
    %4040 = vmatprep.subr.mxu0 0.0
    %4041 = vmatpush1.msra.mxu0 0.0
    %4042 = vmatprep.subr.mxu0 0.0
    %4043 = vmatpush1.msra.mxu0 0.0
    %4044 = vmatprep.subr.mxu0 0.0
    %4045 = vmatpush1.msra.mxu0 0.0
    %4046 = vmatprep.subr.mxu0 0.0
    %4047 = vmatpush1.msra.mxu0 0.0
    %4048 = vmatprep.subr.mxu0 0.0
    %4049 = vmatpush1.msra.mxu0 0.0
    %4050 = vmatprep.subr.mxu0 0.0
    %4051 = vmatpush1.msra.mxu0 0.0
    %4052 = vmatprep.subr.mxu0 0.0
    %4053 = vmatpush1.msra.mxu0 %v4016
    %4054 = vmatprep.subr.mxu0 0.0
    %4055 = vmatpush1.msra.mxu0 %v4014
    %4056 = vmatprep.subr.mxu0 0.0
    %4057 = vmatpush1.msra.mxu0 %v4012
    %4058 = vmatprep.subr.mxu0 0.0
    %4059 = vmatpush1.msra.mxu0 %v4010
    %4060 = vmatprep.subr.mxu0 0.0
    %4061 = vmatpush2.msra.mxu0 0.0
    %4062 = vmatprep.subr.mxu0 0.0
    %4063 = vmatpush2.msra.mxu0 0.0
    %4064 = vmatprep.subr.mxu0 0.0
    %4065 = vmatpush2.msra.mxu0 0.0
    %4066 = vmatprep.subr.mxu0 0.0
    %4067 = vmatpush2.msra.mxu0 0.0
    %4068 = vmatprep.subr.mxu0 0.0
    %4069 = vmatpush2.msra.mxu0 0.0
    %4070 = vmatprep.subr.mxu0 0.0
    %4071 = vmatpush2.msra.mxu0 0.0
    %4072 = vmatprep.subr.mxu0 0.0
    %4073 = vmatpush2.msra.mxu0 0.0
    %4074 = vmatprep.subr.mxu0 0.0
    %4075 = vmatpush2.msra.mxu0 0.0
    %4076 = vmatprep.subr.mxu0 0.0
    %4077 = vmatpush2.msra.mxu0 0.0
    %4078 = vmatprep.subr.mxu0 0.0
    %4079 = vmatpush2.msra.mxu0 0.0
    %4080 = vmatprep.subr.mxu0 0.0
    %4081 = vmatpush2.msra.mxu0 0.0
    %4082 = vmatprep.subr.mxu0 0.0
    %4083 = vmatpush2.msra.mxu0 0.0
    %4084 = vmatprep.subr.mxu0 0.0
    %4085 = vmatpush2.msra.mxu0 0.0
    %4086 = vmatprep.subr.mxu0 0.0
    %4087 = vmatpush2.msra.mxu0 0.0
    %4088 = vmatprep.subr.mxu0 0.0
    %4089 = vmatpush2.msra.mxu0 0.0
    %4090 = vmatprep.subr.mxu0 0.0
    %4091 = vmatpush2.msra.mxu0 0.0
    %4092 = vmatprep.mubr.f32.mxu0 0.0
    %4093 = vmatmul.mubr.f32.gmra.mxu0 %v4026
    %v4094 = vpop.f32.mrf.mxu0
    %v4095 = vadd.f32 %v4023, %v4094
    %v4096 = vpop.f32.mrf.mxu0
    %4097 = vdwg.mxu0
    %vm4098 = vcmask 9216
    %4099 = vst.msk [vmem:[#allocation2] sm:$0x3] %vm4098, %v4095
    // Predicated region
    $region26: #{bert_server_forward.1} parent=1 // pred_check
      _
    $region27: #{bert_server_forward.1} parent=1 // pred_check_branch
      %4101 = sbr.rel (0) target = $region29
    $region28: #{bert_server_forward.1} parent=1 // pred_region
      %s4103 = ssub.s32 32, 32
      %4104 = vsyncadd [#allocation3], %s4103
      %s4106 = sshll.u32 [#allocation2], 4
      %s4107 = int_to_ptr.vmem [resolvable:$true] %s4106
      %4109 = dma.vmem_to_hbm [thread:$0]  %s4107, 32, %s6, [#allocation3]
    $region29: #{bert_server_forward.1} parent=1 // pred_fallthru
      _
    // Predicated region
    $region30: #{bert_server_forward.1} parent=1 // pred_check
      _
    $region31: #{bert_server_forward.1} parent=1 // pred_check_branch
      %4111 = sbr.rel (0) target = $region33
    $region32: #{bert_server_forward.1} parent=1 // pred_region
      %4112 = dma.done [#allocation3], 32
    $region33: #{bert_server_forward.1} parent=1 // pred_fallthru
      _
    %4113 = vsyncpa [#allocation3], 1

</llo_original>
